<compile_context>
chip_gen: v7x
topology: tpu7x:2x2x1
jax: 0.10.0
libtpu: 0.0.40
codegen_flags: <defaults>
</compile_context>

<pallas_src>
import math
from functools import partial

import jax
import jax.numpy as jnp
import numpy as np
from jax.experimental import pallas as pl
from jax.experimental.pallas import tpu as pltpu


# ----------------------------- fused kernel -----------------------------

def _fused_forward_kernel(
    x_ref, m_ref,
    n1a_ref, n1b_ref,
    wq_ref, bq_ref, wk_ref, bk_ref, wv_ref, bv_ref, wo_ref, bo_ref,
    n2a_ref, n2b_ref, w1_ref, b1_ref, w2_ref, b2_ref,
    nfa_ref, nfb_ref, wout_ref, bout_ref,
    o_ref,
    *, n_layers, heads, eps):
    f32 = jnp.float32
    bf16 = jnp.bfloat16

    x3 = x_ref[...]                      # (Bt, S, D)  f32
    m3 = m_ref[...]                      # (Bt, S, 1)  f32 {0,1}
    Bt, S, D = x3.shape
    dk = D // heads
    scale = 1.0 / math.sqrt(dk)
    M = Bt * S

    xf = x3.reshape(M, D)                # f32 residual stream, all folded rows

    # Hoisted once per grid step: mask compare + broadcast to the score tile.
    # (JAX does not CSE this; previously it was re-emitted N*H times.)
    row_invalid = jnp.broadcast_to(m3 == 0.0, (Bt, S, S))

    def norm(v, a, b):
        # torch Norm: unbiased std (ddof = 1), eps added to std; divide -> EUP.
        mu = jnp.mean(v, axis=-1, keepdims=True)
        vc = v - mu
        std = jnp.sqrt(jnp.sum(vc * vc, axis=-1, keepdims=True)
                       * (1.0 / (v.shape[-1] - 1)))
        return a * vc * pl.reciprocal(std + eps, approx=True) + b

    for l in range(n_layers):                         # static unroll (N small)
        # ---------- multi-head self-attention sublayer ----------
        x2 = norm(xf, n1a_ref[l], n1b_ref[l])         # (M, D) f32
        x2b = x2.astype(bf16)                         # MXU operand
        attn = jnp.zeros((M, D), f32)                 # per-head out-proj accum
        for h in range(heads):                        # static unroll (H small)
            # Head-local projections: weights pre-split wrapper-side, so no
            # 8-lane activation slices are needed here.
            qh = jnp.dot(x2b, wq_ref[l, h], preferred_element_type=f32) + bq_ref[l, h]
            kh = jnp.dot(x2b, wk_ref[l, h], preferred_element_type=f32) + bk_ref[l, h]
            vh = jnp.dot(x2b, wv_ref[l, h], preferred_element_type=f32) + bv_ref[l, h]
            q3 = qh.reshape(Bt, S, dk).astype(bf16)   # element-batched layout
            k3 = kh.reshape(Bt, S, dk).astype(bf16)
            v3 = vh.reshape(Bt, S, dk).astype(bf16)
            s = jnp.einsum('bqd,bkd->bqk', q3, k3,
                           preferred_element_type=f32) * scale     # (Bt, S, S)
            s = jnp.where(row_invalid, -1000000000.0, s)  # gate QUERY rows (torch)
            s = s - jnp.max(s, axis=-1, keepdims=True)
            e = jnp.exp(s)
            p = e * pl.reciprocal(jnp.sum(e, axis=-1, keepdims=True), approx=True)
            oh = jnp.einsum('bqk,bkd->bqd', p.astype(bf16), v3,
                            preferred_element_type=f32)            # (Bt, S, dk)
            # out-projection accumulated per head -> no lane concatenate
            attn = attn + jnp.dot(oh.reshape(M, dk).astype(bf16), wo_ref[l, h],
                                  preferred_element_type=f32)
        xf = xf + attn + bo_ref[l]                    # residual (dropout = id)

        # ---------- feed-forward sublayer ----------
        x2 = norm(xf, n2a_ref[l], n2b_ref[l])
        h1 = jnp.maximum(jnp.dot(x2.astype(bf16), w1_ref[l],
                                 preferred_element_type=f32) + b1_ref[l], 0.0)
        xf = xf + jnp.dot(h1.astype(bf16), w2_ref[l],
                          preferred_element_type=f32) + b2_ref[l]

    # ---------- final norm + masked-count mean pool + output projection ----------
    xf = norm(xf, nfa_ref[...], nfb_ref[...])
    cnt = jnp.sum(m3, axis=1) + 1e-9                                # (Bt, 1)
    pooled = (jnp.sum(xf.reshape(Bt, S, D), axis=1)
              * pl.reciprocal(cnt, approx=True))                    # (Bt, D)
    out = (jnp.dot(pooled.astype(bf16), wout_ref[...],
                   preferred_element_type=f32) + bout_ref[...])     # (Bt, TRG_PAD)
    o_ref[...] = out.reshape(Bt, 1, out.shape[-1])                  # lane-dense


# ------------------------------- wrapper --------------------------------

def _pick_batch_tile(B, S, max_rows=512):
    # Fold batch elements per grid step (amortize fixed per-step overhead) but
    # keep the step count even so v7x's two TensorCores stay load-balanced.
    candidates = [bt for bt in range(1, B + 1) if B % bt == 0 and bt * S <= max_rows]
    even = [bt for bt in candidates if (B // bt) % 2 == 0]
    pool = even if even else candidates
    return max(pool) if pool else 1


def self_attention_forward(x, mask, params, heads, *, batch_tile=None):
    B, S, D = x.shape
    assert D % heads == 0, "d_model must be divisible by heads"
    dk = D // heads
    layers = params['layers']
    N = len(layers)
    DFF = layers[0]['w1'].shape[1]
    TRG = params['w_out'].shape[1]
    TRG_PAD = max(128, ((TRG + 127) // 128) * 128)

    Bt = _pick_batch_tile(B, S) if batch_tile is None else batch_tile
    assert B % Bt == 0
    steps = B // Bt

    f32, bf16 = jnp.float32, jnp.bfloat16
    stack = lambda key: jnp.stack([p[key] for p in layers], axis=0)

    # Norm params (f32, elementwise path).
    n1a = stack('n1_a').reshape(N, 1, D).astype(f32)
    n1b = stack('n1_b').reshape(N, 1, D).astype(f32)
    n2a = stack('n2_a').reshape(N, 1, D).astype(f32)
    n2b = stack('n2_b').reshape(N, 1, D).astype(f32)

    # Per-head split of the attention projections (wrapper-side = free):
    #   Q/K/V columns -> (N, H, D, dk);  out-proj rows -> (N, H, dk, D).
    wq = stack('wq').reshape(N, D, heads, dk).transpose(0, 2, 1, 3).astype(bf16)
    wk = stack('wk').reshape(N, D, heads, dk).transpose(0, 2, 1, 3).astype(bf16)
    wv = stack('wv').reshape(N, D, heads, dk).transpose(0, 2, 1, 3).astype(bf16)
    bq = stack('bq').reshape(N, heads, 1, dk).astype(f32)
    bk = stack('bk').reshape(N, heads, 1, dk).astype(f32)
    bv = stack('bv').reshape(N, heads, 1, dk).astype(f32)
    wo = stack('wo').reshape(N, heads, dk, D).astype(bf16)
    bo = stack('bo').reshape(N, 1, D).astype(f32)

    w1 = stack('w1').astype(bf16)                         # (N, D, DFF)
    b1 = stack('b1').reshape(N, 1, DFF).astype(f32)
    w2 = stack('w2').astype(bf16)                         # (N, DFF, D)
    b2 = stack('b2').reshape(N, 1, D).astype(f32)

    nfa = params['nf_a'].reshape(1, D).astype(f32)
    nfb = params['nf_b'].reshape(1, D).astype(f32)
    # Output projection padded to a 128-lane slab -> unmasked vector stores.
    wout = jnp.zeros((D, TRG_PAD), f32).at[:, :TRG].set(params['w_out']).astype(bf16)
    bout = jnp.zeros((1, TRG_PAD), f32).at[:, :TRG].set(params['b_out'].reshape(1, TRG))

    weights = (n1a, n1b, wq, bq, wk, bk, wv, bv, wo, bo,
               n2a, n2b, w1, b1, w2, b2, nfa, nfb, wout, bout)

    def full(shape):                 # weight block: whole array, VMEM-resident
        return pl.BlockSpec(shape, lambda b, _z=(0,) * len(shape): _z)

    grid_spec = pltpu.PrefetchScalarGridSpec(
        num_scalar_prefetch=0,
        grid=(steps,),
        in_specs=[
            pl.BlockSpec((Bt, S, D), lambda b: (b, 0, 0)),   # x
            pl.BlockSpec((Bt, S, 1), lambda b: (b, 0, 0)),   # mask
            full((N, 1, D)), full((N, 1, D)),                # norm1 alpha/bias
            full((N, heads, D, dk)), full((N, heads, 1, dk)),  # Wq/bq per head
            full((N, heads, D, dk)), full((N, heads, 1, dk)),  # Wk/bk per head
            full((N, heads, D, dk)), full((N, heads, 1, dk)),  # Wv/bv per head
            full((N, heads, dk, D)), full((N, 1, D)),          # Wo per head / bo
            full((N, 1, D)), full((N, 1, D)),                # norm2 alpha/bias
            full((N, D, DFF)), full((N, 1, DFF)),            # FFN linear1
            full((N, DFF, D)), full((N, 1, D)),              # FFN linear2
            full((1, D)), full((1, D)),                      # final norm alpha/bias
            full((D, TRG_PAD)), full((1, TRG_PAD)),          # output proj (padded)
        ],
        out_specs=pl.BlockSpec((Bt, 1, TRG_PAD), lambda b: (b, 0, 0)),
    )

    # Explicit VMEM budget (v7x has only 64 MiB physical) + advisory cost hint.
    weight_bytes = sum(int(np.prod(w.shape)) * w.dtype.itemsize for w in weights)
    act_bytes = 4 * Bt * S * (6 * D + DFF + heads * S)          # rough live f32
    io_bytes = 4 * Bt * (S * (D + 1) + TRG_PAD)
    vmem_limit = int(min(64 * 1024 * 1024,
                         max(32 * 1024 * 1024,
                             4 * (weight_bytes + act_bytes + io_bytes))))
    flops = int(2 * B * S * N * D * (4 * D + 2 * DFF)
                + 4 * B * N * S * S * D + 2 * B * D * TRG)
    transcendentals = int(B * N * heads * S * S + B * S * (2 * N + 1)
                          + B * N * heads * S + B)
    bytes_accessed = int(weight_bytes + 4 * B * S * (D + 1) + 4 * B * TRG_PAD)

    out = pl.pallas_call(
        partial(_fused_forward_kernel, n_layers=N, heads=heads, eps=1e-6),
        out_shape=jax.ShapeDtypeStruct((B, 1, TRG_PAD), f32),
        grid_spec=grid_spec,
        compiler_params=pltpu.CompilerParams(
            dimension_semantics=("parallel",),
            vmem_limit_bytes=vmem_limit),
        cost_estimate=pl.CostEstimate(flops=flops,
                                      transcendentals=transcendentals,
                                      bytes_accessed=bytes_accessed),
    )(x.astype(f32), mask.astype(f32),
      n1a, n1b, wq, bq, wk, bk, wv, bv, wo, bo,
      n2a, n2b, w1, b1, w2, b2, nfa, nfb, wout, bout)
    return out[:, 0, :TRG]


# ------------------------- pure-JAX reference ---------------------------

def reference_forward(x, mask, params, heads):
    def norm(x, a, b, eps=1e-6):
        mu = x.mean(-1, keepdims=True)
        sd = jnp.sqrt(((x - mu) ** 2).sum(-1, keepdims=True) / (x.shape[-1] - 1))
        return a * (x - mu) / (sd + eps) + b

    def lin(x, w, b):
        return x @ w + b

    B, S, D = x.shape
    dk = D // heads
    for p in params['layers']:
        x2 = norm(x, p['n1_a'], p['n1_b'])
        q = lin(x2, p['wq'], p['bq']).reshape(B, S, heads, dk).transpose(0, 2, 1, 3)
        k = lin(x2, p['wk'], p['bk']).reshape(B, S, heads, dk).transpose(0, 2, 1, 3)
        v = lin(x2, p['wv'], p['bv']).reshape(B, S, heads, dk).transpose(0, 2, 1, 3)
        s = jnp.einsum('bhqd,bhkd->bhqk', q, k) / math.sqrt(dk)
        rowm = mask[:, None, :, 0]                     # (B, 1, S)  gates QUERY rows
        s = jnp.where((rowm == 0.0)[..., None], -1000000000.0, s)
        pm = jax.nn.softmax(s, axis=-1)
        o = jnp.einsum('bhqk,bhkd->bhqd', pm, v).transpose(0, 2, 1, 3).reshape(B, S, D)
        x = x + lin(o, p['wo'], p['bo'])
        x2 = norm(x, p['n2_a'], p['n2_b'])
        x = x + lin(jnp.maximum(lin(x2, p['w1'], p['b1']), 0.0), p['w2'], p['b2'])
    x = norm(x, params['nf_a'], params['nf_b'])
    pooled = x.sum(axis=1) / (mask.sum(axis=1) + 1e-09)
    return pooled @ params['w_out'] + params['b_out']


# --------------------------------- main ---------------------------------

if __name__ == "__main__":
    B, S, D, H, N, DFF, TRG = 2, 8, 32, 4, 2, 64, 16   # src_vocab unused (no embedding in forward)

    key = jax.random.PRNGKey(0)
    keys = iter(jax.random.split(key, 64))

    def w(shape, scale=0.05):
        return scale * jax.random.normal(next(keys), shape, dtype=jnp.float32)

    layers = []
    for _ in range(N):
        layers.append(dict(
            n1_a=jnp.ones((D,), jnp.float32), n1_b=jnp.zeros((D,), jnp.float32),
            n2_a=jnp.ones((D,), jnp.float32), n2_b=jnp.zeros((D,), jnp.float32),
            wq=w((D, D)), bq=w((D,)), wk=w((D, D)), bk=w((D,)),
            wv=w((D, D)), bv=w((D,)), wo=w((D, D)), bo=w((D,)),
            w1=w((D, DFF)), b1=w((DFF,)), w2=w((DFF, D)), b2=w((D,)),
        ))
    params = dict(
        layers=layers,
        nf_a=jnp.ones((D,), jnp.float32), nf_b=jnp.zeros((D,), jnp.float32),
        w_out=w((D, TRG)), b_out=w((TRG,)),
    )

    x = jax.random.normal(next(keys), (B, S, D), dtype=jnp.float32)
    mask = (jax.random.uniform(next(keys), (B, S, 1)) < 0.75).astype(jnp.float32)
    mask = mask.at[:, 0, :].set(1.0)   # ensure at least one valid token per batch

    out = self_attention_forward(x, mask, params, H)
    out = jax.block_until_ready(out)

    ref = reference_forward(x, mask, params, H)
    np.testing.assert_allclose(np.asarray(out), np.asarray(ref), rtol=5e-2, atol=5e-2)

    print("KERNEL_OK")
</pallas_src>

<mosaic_0001>
module attributes {stable_mosaic.version = 11 : i64} {
  func.func @_fused_forward_kernel(%arg0: i32, %arg1: memref<1x8x32xf32, #tpu.memory_space<vmem>>, %arg2: memref<1x8x1xf32, #tpu.memory_space<vmem>>, %arg3: memref<2x1x32xf32, #tpu.memory_space<vmem>>, %arg4: memref<2x1x32xf32, #tpu.memory_space<vmem>>, %arg5: memref<2x4x32x8xbf16, #tpu.memory_space<vmem>>, %arg6: memref<2x4x1x8xf32, #tpu.memory_space<vmem>>, %arg7: memref<2x4x32x8xbf16, #tpu.memory_space<vmem>>, %arg8: memref<2x4x1x8xf32, #tpu.memory_space<vmem>>, %arg9: memref<2x4x32x8xbf16, #tpu.memory_space<vmem>>, %arg10: memref<2x4x1x8xf32, #tpu.memory_space<vmem>>, %arg11: memref<2x4x8x32xbf16, #tpu.memory_space<vmem>>, %arg12: memref<2x1x32xf32, #tpu.memory_space<vmem>>, %arg13: memref<2x1x32xf32, #tpu.memory_space<vmem>>, %arg14: memref<2x1x32xf32, #tpu.memory_space<vmem>>, %arg15: memref<2x32x64xbf16, #tpu.memory_space<vmem>>, %arg16: memref<2x1x64xf32, #tpu.memory_space<vmem>>, %arg17: memref<2x64x32xbf16, #tpu.memory_space<vmem>>, %arg18: memref<2x1x32xf32, #tpu.memory_space<vmem>>, %arg19: memref<1x32xf32, #tpu.memory_space<vmem>>, %arg20: memref<1x32xf32, #tpu.memory_space<vmem>>, %arg21: memref<32x128xbf16, #tpu.memory_space<vmem>>, %arg22: memref<1x128xf32, #tpu.memory_space<vmem>>, %arg23: memref<1x1x128xf32, #tpu.memory_space<vmem>>) attributes {dimension_semantics = [#tpu.dimension_semantics<parallel>], iteration_bounds = array<i64: 2>, scalar_prefetch = 0 : i64, scratch_operands = 0 : i64, tpu.core_type = #tpu.core_type<tc>, window_params = [{transform_indices = @transform_0, window_bounds = array<i64: 1, 8, 32>}, {transform_indices = @transform_1, window_bounds = array<i64: 1, 8, 1>}, {pipeline_mode = #tpu.pipeline_mode<synchronous>, transform_indices = @transform_2, window_bounds = array<i64: 2, 1, 32>}, {pipeline_mode = #tpu.pipeline_mode<synchronous>, transform_indices = @transform_3, window_bounds = array<i64: 2, 1, 32>}, {pipeline_mode = #tpu.pipeline_mode<synchronous>, transform_indices = @transform_4, window_bounds = array<i64: 2, 4, 32, 8>}, {pipeline_mode = #tpu.pipeline_mode<synchronous>, transform_indices = @transform_5, window_bounds = array<i64: 2, 4, 1, 8>}, {pipeline_mode = #tpu.pipeline_mode<synchronous>, transform_indices = @transform_6, window_bounds = array<i64: 2, 4, 32, 8>}, {pipeline_mode = #tpu.pipeline_mode<synchronous>, transform_indices = @transform_7, window_bounds = array<i64: 2, 4, 1, 8>}, {pipeline_mode = #tpu.pipeline_mode<synchronous>, transform_indices = @transform_8, window_bounds = array<i64: 2, 4, 32, 8>}, {pipeline_mode = #tpu.pipeline_mode<synchronous>, transform_indices = @transform_9, window_bounds = array<i64: 2, 4, 1, 8>}, {pipeline_mode = #tpu.pipeline_mode<synchronous>, transform_indices = @transform_10, window_bounds = array<i64: 2, 4, 8, 32>}, {pipeline_mode = #tpu.pipeline_mode<synchronous>, transform_indices = @transform_11, window_bounds = array<i64: 2, 1, 32>}, {pipeline_mode = #tpu.pipeline_mode<synchronous>, transform_indices = @transform_12, window_bounds = array<i64: 2, 1, 32>}, {pipeline_mode = #tpu.pipeline_mode<synchronous>, transform_indices = @transform_13, window_bounds = array<i64: 2, 1, 32>}, {pipeline_mode = #tpu.pipeline_mode<synchronous>, transform_indices = @transform_14, window_bounds = array<i64: 2, 32, 64>}, {pipeline_mode = #tpu.pipeline_mode<synchronous>, transform_indices = @transform_15, window_bounds = array<i64: 2, 1, 64>}, {pipeline_mode = #tpu.pipeline_mode<synchronous>, transform_indices = @transform_16, window_bounds = array<i64: 2, 64, 32>}, {pipeline_mode = #tpu.pipeline_mode<synchronous>, transform_indices = @transform_17, window_bounds = array<i64: 2, 1, 32>}, {pipeline_mode = #tpu.pipeline_mode<synchronous>, transform_indices = @transform_18, window_bounds = array<i64: 1, 32>}, {pipeline_mode = #tpu.pipeline_mode<synchronous>, transform_indices = @transform_19, window_bounds = array<i64: 1, 32>}, {pipeline_mode = #tpu.pipeline_mode<synchronous>, transform_indices = @transform_20, window_bounds = array<i64: 32, 128>}, {pipeline_mode = #tpu.pipeline_mode<synchronous>, transform_indices = @transform_21, window_bounds = array<i64: 1, 128>}, {transform_indices = @transform_22, window_bounds = array<i64: 1, 1, 128>}]} {
    %c0 = arith.constant 0 : index
    %c0_0 = arith.constant 0 : index
    %c0_1 = arith.constant 0 : index
    %0 = vector.load %arg1[%c0, %c0_0, %c0_1] : memref<1x8x32xf32, #tpu.memory_space<vmem>>, vector<1x8x32xf32>
    %c0_2 = arith.constant 0 : index
    %c0_3 = arith.constant 0 : index
    %c0_4 = arith.constant 0 : index
    %1 = vector.load %arg2[%c0_2, %c0_3, %c0_4] : memref<1x8x1xf32, #tpu.memory_space<vmem>>, vector<1x8x1xf32>
    %2 = vector.shape_cast %0 : vector<1x8x32xf32> to vector<8x32xf32>
    %cst = arith.constant 0.000000e+00 : f32
    %3 = vector.broadcast %cst : f32 to vector<1x8x1xf32>
    %4 = arith.cmpf oeq, %1, %3 : vector<1x8x1xf32>
    %5 = vector.shape_cast %4 : vector<1x8x1xi1> to vector<1x8x1xi1>
    %6 = vector.broadcast %5 : vector<1x8x1xi1> to vector<1x8x8xi1>
    %c0_5 = arith.constant 0 : index
    %c0_6 = arith.constant 0 : index
    %c0_7 = arith.constant 0 : index
    %7 = vector.load %arg3[%c0_5, %c0_6, %c0_7] : memref<2x1x32xf32, #tpu.memory_space<vmem>>, vector<1x1x32xf32>
    %8 = vector.shape_cast %7 : vector<1x1x32xf32> to vector<1x32xf32>
    %c0_8 = arith.constant 0 : index
    %c0_9 = arith.constant 0 : index
    %c0_10 = arith.constant 0 : index
    %9 = vector.load %arg4[%c0_8, %c0_9, %c0_10] : memref<2x1x32xf32, #tpu.memory_space<vmem>>, vector<1x1x32xf32>
    %10 = vector.shape_cast %9 : vector<1x1x32xf32> to vector<1x32xf32>
    %cst_11 = arith.constant dense<0.000000e+00> : vector<8xf32>
    %11 = vector.multi_reduction <add>, %2, %cst_11 [1] : vector<8x32xf32> to vector<8xf32>
    %12 = vector.shape_cast %11 : vector<8xf32> to vector<8x1xf32>
    %cst_12 = arith.constant 3.200000e+01 : f32
    %13 = vector.broadcast %cst_12 : f32 to vector<8x1xf32>
    %14 = arith.divf %12, %13 : vector<8x1xf32>
    %15 = vector.broadcast %14 : vector<8x1xf32> to vector<8x32xf32>
    %16 = arith.subf %2, %15 : vector<8x32xf32>
    %17 = arith.mulf %16, %16 : vector<8x32xf32>
    %cst_13 = arith.constant dense<0.000000e+00> : vector<8xf32>
    %18 = vector.multi_reduction <add>, %17, %cst_13 [1] : vector<8x32xf32> to vector<8xf32>
    %19 = vector.shape_cast %18 : vector<8xf32> to vector<8x1xf32>
    %cst_14 = arith.constant 0.0322580636 : f32
    %20 = vector.broadcast %cst_14 : f32 to vector<8x1xf32>
    %21 = arith.mulf %19, %20 : vector<8x1xf32>
    %22 = math.sqrt %21 : vector<8x1xf32>
    %23 = vector.broadcast %8 : vector<1x32xf32> to vector<8x32xf32>
    %24 = arith.mulf %23, %16 : vector<8x32xf32>
    %cst_15 = arith.constant 9.99999997E-7 : f32
    %25 = vector.broadcast %cst_15 : f32 to vector<8x1xf32>
    %26 = arith.addf %22, %25 : vector<8x1xf32>
    %27 = tpu.reciprocal %26 {approx = true} : vector<8x1xf32> -> vector<8x1xf32>
    %28 = vector.broadcast %27 : vector<8x1xf32> to vector<8x32xf32>
    %29 = arith.mulf %24, %28 : vector<8x32xf32>
    %30 = vector.broadcast %10 : vector<1x32xf32> to vector<8x32xf32>
    %31 = arith.addf %29, %30 : vector<8x32xf32>
    %32 = arith.truncf %31 : vector<8x32xf32> to vector<8x32xbf16>
    %cst_16 = arith.constant 0.000000e+00 : f32
    %33 = vector.broadcast %cst_16 : f32 to vector<8x32xf32>
    %c0_17 = arith.constant 0 : index
    %c0_18 = arith.constant 0 : index
    %c0_19 = arith.constant 0 : index
    %c0_20 = arith.constant 0 : index
    %34 = vector.load %arg5[%c0_17, %c0_18, %c0_19, %c0_20] : memref<2x4x32x8xbf16, #tpu.memory_space<vmem>>, vector<1x1x32x8xbf16>
    %35 = vector.shape_cast %34 : vector<1x1x32x8xbf16> to vector<32x8xbf16>
    %cst_21 = arith.constant dense<0.000000e+00> : vector<8x8xf32>
    %36 = tpu.matmul %32, %35, %cst_21 {dimension_numbers = #tpu.dot_dimension_numbers<[1], [0], [0], [1], [0, 0, 1, 1], [], []>} : vector<8x32xbf16>, vector<32x8xbf16>, vector<8x8xf32> -> vector<8x8xf32>
    %c0_22 = arith.constant 0 : index
    %c0_23 = arith.constant 0 : index
    %c0_24 = arith.constant 0 : index
    %c0_25 = arith.constant 0 : index
    %37 = vector.load %arg6[%c0_22, %c0_23, %c0_24, %c0_25] : memref<2x4x1x8xf32, #tpu.memory_space<vmem>>, vector<1x1x1x8xf32>
    %38 = vector.shape_cast %37 : vector<1x1x1x8xf32> to vector<1x8xf32>
    %39 = vector.broadcast %38 : vector<1x8xf32> to vector<8x8xf32>
    %40 = arith.addf %36, %39 : vector<8x8xf32>
    %c0_26 = arith.constant 0 : index
    %c0_27 = arith.constant 0 : index
    %c0_28 = arith.constant 0 : index
    %c0_29 = arith.constant 0 : index
    %41 = vector.load %arg7[%c0_26, %c0_27, %c0_28, %c0_29] : memref<2x4x32x8xbf16, #tpu.memory_space<vmem>>, vector<1x1x32x8xbf16>
    %42 = vector.shape_cast %41 : vector<1x1x32x8xbf16> to vector<32x8xbf16>
    %cst_30 = arith.constant dense<0.000000e+00> : vector<8x8xf32>
    %43 = tpu.matmul %32, %42, %cst_30 {dimension_numbers = #tpu.dot_dimension_numbers<[1], [0], [0], [1], [0, 0, 1, 1], [], []>} : vector<8x32xbf16>, vector<32x8xbf16>, vector<8x8xf32> -> vector<8x8xf32>
    %c0_31 = arith.constant 0 : index
    %c0_32 = arith.constant 0 : index
    %c0_33 = arith.constant 0 : index
    %c0_34 = arith.constant 0 : index
    %44 = vector.load %arg8[%c0_31, %c0_32, %c0_33, %c0_34] : memref<2x4x1x8xf32, #tpu.memory_space<vmem>>, vector<1x1x1x8xf32>
    %45 = vector.shape_cast %44 : vector<1x1x1x8xf32> to vector<1x8xf32>
    %46 = vector.broadcast %45 : vector<1x8xf32> to vector<8x8xf32>
    %47 = arith.addf %43, %46 : vector<8x8xf32>
    %c0_35 = arith.constant 0 : index
    %c0_36 = arith.constant 0 : index
    %c0_37 = arith.constant 0 : index
    %c0_38 = arith.constant 0 : index
    %48 = vector.load %arg9[%c0_35, %c0_36, %c0_37, %c0_38] : memref<2x4x32x8xbf16, #tpu.memory_space<vmem>>, vector<1x1x32x8xbf16>
    %49 = vector.shape_cast %48 : vector<1x1x32x8xbf16> to vector<32x8xbf16>
    %cst_39 = arith.constant dense<0.000000e+00> : vector<8x8xf32>
    %50 = tpu.matmul %32, %49, %cst_39 {dimension_numbers = #tpu.dot_dimension_numbers<[1], [0], [0], [1], [0, 0, 1, 1], [], []>} : vector<8x32xbf16>, vector<32x8xbf16>, vector<8x8xf32> -> vector<8x8xf32>
    %c0_40 = arith.constant 0 : index
    %c0_41 = arith.constant 0 : index
    %c0_42 = arith.constant 0 : index
    %c0_43 = arith.constant 0 : index
    %51 = vector.load %arg10[%c0_40, %c0_41, %c0_42, %c0_43] : memref<2x4x1x8xf32, #tpu.memory_space<vmem>>, vector<1x1x1x8xf32>
    %52 = vector.shape_cast %51 : vector<1x1x1x8xf32> to vector<1x8xf32>
    %53 = vector.broadcast %52 : vector<1x8xf32> to vector<8x8xf32>
    %54 = arith.addf %50, %53 : vector<8x8xf32>
    %55 = vector.shape_cast %40 : vector<8x8xf32> to vector<1x8x8xf32>
    %56 = arith.truncf %55 : vector<1x8x8xf32> to vector<1x8x8xbf16>
    %57 = vector.shape_cast %47 : vector<8x8xf32> to vector<1x8x8xf32>
    %58 = arith.truncf %57 : vector<1x8x8xf32> to vector<1x8x8xbf16>
    %59 = vector.shape_cast %54 : vector<8x8xf32> to vector<1x8x8xf32>
    %60 = arith.truncf %59 : vector<1x8x8xf32> to vector<1x8x8xbf16>
    "tpu.trace_start"() <{level = 10 : i32, message = "bqd,bkd->bqk"}> : () -> ()
    %cst_44 = arith.constant dense<0.000000e+00> : vector<1x8x8xf32>
    %61 = tpu.matmul %56, %58, %cst_44 {dimension_numbers = #tpu.dot_dimension_numbers<[2], [2], [1], [1], [0, 0, 0, 1, 1, 1], [0], [0]>} : vector<1x8x8xbf16>, vector<1x8x8xbf16>, vector<1x8x8xf32> -> vector<1x8x8xf32>
    "tpu.trace_stop"() : () -> ()
    %cst_45 = arith.constant 0.353553385 : f32
    %62 = vector.broadcast %cst_45 : f32 to vector<1x8x8xf32>
    %63 = arith.mulf %61, %62 : vector<1x8x8xf32>
    %cst_46 = arith.constant -1.000000e+09 : f32
    %64 = vector.broadcast %cst_46 : f32 to vector<1x8x8xf32>
    %65 = arith.select %6, %64, %63 : vector<1x8x8xi1>, vector<1x8x8xf32>
    %cst_47 = arith.constant dense<0xFF800000> : vector<1x8xf32>
    %66 = vector.multi_reduction <maximumf>, %65, %cst_47 [2] : vector<1x8x8xf32> to vector<1x8xf32>
    %67 = vector.shape_cast %66 : vector<1x8xf32> to vector<1x8x1xf32>
    %68 = vector.broadcast %67 : vector<1x8x1xf32> to vector<1x8x8xf32>
    %69 = arith.subf %65, %68 : vector<1x8x8xf32>
    %70 = math.exp %69 : vector<1x8x8xf32>
    %cst_48 = arith.constant dense<0.000000e+00> : vector<1x8xf32>
    %71 = vector.multi_reduction <add>, %70, %cst_48 [2] : vector<1x8x8xf32> to vector<1x8xf32>
    %72 = vector.shape_cast %71 : vector<1x8xf32> to vector<1x8x1xf32>
    %73 = tpu.reciprocal %72 {approx = true} : vector<1x8x1xf32> -> vector<1x8x1xf32>
    %74 = vector.broadcast %73 : vector<1x8x1xf32> to vector<1x8x8xf32>
    %75 = arith.mulf %70, %74 : vector<1x8x8xf32>
    %76 = arith.truncf %75 : vector<1x8x8xf32> to vector<1x8x8xbf16>
    "tpu.trace_start"() <{level = 10 : i32, message = "bqk,bkd->bqd"}> : () -> ()
    %cst_49 = arith.constant dense<0.000000e+00> : vector<1x8x8xf32>
    %77 = tpu.matmul %76, %60, %cst_49 {dimension_numbers = #tpu.dot_dimension_numbers<[2], [1], [1], [2], [0, 0, 0, 1, 1, 2], [0], [0]>} : vector<1x8x8xbf16>, vector<1x8x8xbf16>, vector<1x8x8xf32> -> vector<1x8x8xf32>
    "tpu.trace_stop"() : () -> ()
    %78 = vector.shape_cast %77 : vector<1x8x8xf32> to vector<8x8xf32>
    %79 = arith.truncf %78 : vector<8x8xf32> to vector<8x8xbf16>
    %c0_50 = arith.constant 0 : index
    %c0_51 = arith.constant 0 : index
    %c0_52 = arith.constant 0 : index
    %c0_53 = arith.constant 0 : index
    %80 = vector.load %arg11[%c0_50, %c0_51, %c0_52, %c0_53] : memref<2x4x8x32xbf16, #tpu.memory_space<vmem>>, vector<1x1x8x32xbf16>
    %81 = vector.shape_cast %80 : vector<1x1x8x32xbf16> to vector<8x32xbf16>
    %cst_54 = arith.constant dense<0.000000e+00> : vector<8x32xf32>
    %82 = tpu.matmul %79, %81, %cst_54 {dimension_numbers = #tpu.dot_dimension_numbers<[1], [0], [0], [1], [0, 0, 1, 1], [], []>} : vector<8x8xbf16>, vector<8x32xbf16>, vector<8x32xf32> -> vector<8x32xf32>
    %83 = arith.addf %33, %82 : vector<8x32xf32>
    %c0_55 = arith.constant 0 : index
    %c1 = arith.constant 1 : index
    %c0_56 = arith.constant 0 : index
    %c0_57 = arith.constant 0 : index
    %84 = vector.load %arg5[%c0_55, %c1, %c0_56, %c0_57] : memref<2x4x32x8xbf16, #tpu.memory_space<vmem>>, vector<1x1x32x8xbf16>
    %85 = vector.shape_cast %84 : vector<1x1x32x8xbf16> to vector<32x8xbf16>
    %cst_58 = arith.constant dense<0.000000e+00> : vector<8x8xf32>
    %86 = tpu.matmul %32, %85, %cst_58 {dimension_numbers = #tpu.dot_dimension_numbers<[1], [0], [0], [1], [0, 0, 1, 1], [], []>} : vector<8x32xbf16>, vector<32x8xbf16>, vector<8x8xf32> -> vector<8x8xf32>
    %c0_59 = arith.constant 0 : index
    %c1_60 = arith.constant 1 : index
    %c0_61 = arith.constant 0 : index
    %c0_62 = arith.constant 0 : index
    %87 = vector.load %arg6[%c0_59, %c1_60, %c0_61, %c0_62] : memref<2x4x1x8xf32, #tpu.memory_space<vmem>>, vector<1x1x1x8xf32>
    %88 = vector.shape_cast %87 : vector<1x1x1x8xf32> to vector<1x8xf32>
    %89 = vector.broadcast %88 : vector<1x8xf32> to vector<8x8xf32>
    %90 = arith.addf %86, %89 : vector<8x8xf32>
    %c0_63 = arith.constant 0 : index
    %c1_64 = arith.constant 1 : index
    %c0_65 = arith.constant 0 : index
    %c0_66 = arith.constant 0 : index
    %91 = vector.load %arg7[%c0_63, %c1_64, %c0_65, %c0_66] : memref<2x4x32x8xbf16, #tpu.memory_space<vmem>>, vector<1x1x32x8xbf16>
    %92 = vector.shape_cast %91 : vector<1x1x32x8xbf16> to vector<32x8xbf16>
    %cst_67 = arith.constant dense<0.000000e+00> : vector<8x8xf32>
    %93 = tpu.matmul %32, %92, %cst_67 {dimension_numbers = #tpu.dot_dimension_numbers<[1], [0], [0], [1], [0, 0, 1, 1], [], []>} : vector<8x32xbf16>, vector<32x8xbf16>, vector<8x8xf32> -> vector<8x8xf32>
    %c0_68 = arith.constant 0 : index
    %c1_69 = arith.constant 1 : index
    %c0_70 = arith.constant 0 : index
    %c0_71 = arith.constant 0 : index
    %94 = vector.load %arg8[%c0_68, %c1_69, %c0_70, %c0_71] : memref<2x4x1x8xf32, #tpu.memory_space<vmem>>, vector<1x1x1x8xf32>
    %95 = vector.shape_cast %94 : vector<1x1x1x8xf32> to vector<1x8xf32>
    %96 = vector.broadcast %95 : vector<1x8xf32> to vector<8x8xf32>
    %97 = arith.addf %93, %96 : vector<8x8xf32>
    %c0_72 = arith.constant 0 : index
    %c1_73 = arith.constant 1 : index
    %c0_74 = arith.constant 0 : index
    %c0_75 = arith.constant 0 : index
    %98 = vector.load %arg9[%c0_72, %c1_73, %c0_74, %c0_75] : memref<2x4x32x8xbf16, #tpu.memory_space<vmem>>, vector<1x1x32x8xbf16>
    %99 = vector.shape_cast %98 : vector<1x1x32x8xbf16> to vector<32x8xbf16>
    %cst_76 = arith.constant dense<0.000000e+00> : vector<8x8xf32>
    %100 = tpu.matmul %32, %99, %cst_76 {dimension_numbers = #tpu.dot_dimension_numbers<[1], [0], [0], [1], [0, 0, 1, 1], [], []>} : vector<8x32xbf16>, vector<32x8xbf16>, vector<8x8xf32> -> vector<8x8xf32>
    %c0_77 = arith.constant 0 : index
    %c1_78 = arith.constant 1 : index
    %c0_79 = arith.constant 0 : index
    %c0_80 = arith.constant 0 : index
    %101 = vector.load %arg10[%c0_77, %c1_78, %c0_79, %c0_80] : memref<2x4x1x8xf32, #tpu.memory_space<vmem>>, vector<1x1x1x8xf32>
    %102 = vector.shape_cast %101 : vector<1x1x1x8xf32> to vector<1x8xf32>
    %103 = vector.broadcast %102 : vector<1x8xf32> to vector<8x8xf32>
    %104 = arith.addf %100, %103 : vector<8x8xf32>
    %105 = vector.shape_cast %90 : vector<8x8xf32> to vector<1x8x8xf32>
    %106 = arith.truncf %105 : vector<1x8x8xf32> to vector<1x8x8xbf16>
    %107 = vector.shape_cast %97 : vector<8x8xf32> to vector<1x8x8xf32>
    %108 = arith.truncf %107 : vector<1x8x8xf32> to vector<1x8x8xbf16>
    %109 = vector.shape_cast %104 : vector<8x8xf32> to vector<1x8x8xf32>
    %110 = arith.truncf %109 : vector<1x8x8xf32> to vector<1x8x8xbf16>
    "tpu.trace_start"() <{level = 10 : i32, message = "bqd,bkd->bqk"}> : () -> ()
    %cst_81 = arith.constant dense<0.000000e+00> : vector<1x8x8xf32>
    %111 = tpu.matmul %106, %108, %cst_81 {dimension_numbers = #tpu.dot_dimension_numbers<[2], [2], [1], [1], [0, 0, 0, 1, 1, 1], [0], [0]>} : vector<1x8x8xbf16>, vector<1x8x8xbf16>, vector<1x8x8xf32> -> vector<1x8x8xf32>
    "tpu.trace_stop"() : () -> ()
    %cst_82 = arith.constant 0.353553385 : f32
    %112 = vector.broadcast %cst_82 : f32 to vector<1x8x8xf32>
    %113 = arith.mulf %111, %112 : vector<1x8x8xf32>
    %cst_83 = arith.constant -1.000000e+09 : f32
    %114 = vector.broadcast %cst_83 : f32 to vector<1x8x8xf32>
    %115 = arith.select %6, %114, %113 : vector<1x8x8xi1>, vector<1x8x8xf32>
    %cst_84 = arith.constant dense<0xFF800000> : vector<1x8xf32>
    %116 = vector.multi_reduction <maximumf>, %115, %cst_84 [2] : vector<1x8x8xf32> to vector<1x8xf32>
    %117 = vector.shape_cast %116 : vector<1x8xf32> to vector<1x8x1xf32>
    %118 = vector.broadcast %117 : vector<1x8x1xf32> to vector<1x8x8xf32>
    %119 = arith.subf %115, %118 : vector<1x8x8xf32>
    %120 = math.exp %119 : vector<1x8x8xf32>
    %cst_85 = arith.constant dense<0.000000e+00> : vector<1x8xf32>
    %121 = vector.multi_reduction <add>, %120, %cst_85 [2] : vector<1x8x8xf32> to vector<1x8xf32>
    %122 = vector.shape_cast %121 : vector<1x8xf32> to vector<1x8x1xf32>
    %123 = tpu.reciprocal %122 {approx = true} : vector<1x8x1xf32> -> vector<1x8x1xf32>
    %124 = vector.broadcast %123 : vector<1x8x1xf32> to vector<1x8x8xf32>
    %125 = arith.mulf %120, %124 : vector<1x8x8xf32>
    %126 = arith.truncf %125 : vector<1x8x8xf32> to vector<1x8x8xbf16>
    "tpu.trace_start"() <{level = 10 : i32, message = "bqk,bkd->bqd"}> : () -> ()
    %cst_86 = arith.constant dense<0.000000e+00> : vector<1x8x8xf32>
    %127 = tpu.matmul %126, %110, %cst_86 {dimension_numbers = #tpu.dot_dimension_numbers<[2], [1], [1], [2], [0, 0, 0, 1, 1, 2], [0], [0]>} : vector<1x8x8xbf16>, vector<1x8x8xbf16>, vector<1x8x8xf32> -> vector<1x8x8xf32>
    "tpu.trace_stop"() : () -> ()
    %128 = vector.shape_cast %127 : vector<1x8x8xf32> to vector<8x8xf32>
    %129 = arith.truncf %128 : vector<8x8xf32> to vector<8x8xbf16>
    %c0_87 = arith.constant 0 : index
    %c1_88 = arith.constant 1 : index
    %c0_89 = arith.constant 0 : index
    %c0_90 = arith.constant 0 : index
    %130 = vector.load %arg11[%c0_87, %c1_88, %c0_89, %c0_90] : memref<2x4x8x32xbf16, #tpu.memory_space<vmem>>, vector<1x1x8x32xbf16>
    %131 = vector.shape_cast %130 : vector<1x1x8x32xbf16> to vector<8x32xbf16>
    %cst_91 = arith.constant dense<0.000000e+00> : vector<8x32xf32>
    %132 = tpu.matmul %129, %131, %cst_91 {dimension_numbers = #tpu.dot_dimension_numbers<[1], [0], [0], [1], [0, 0, 1, 1], [], []>} : vector<8x8xbf16>, vector<8x32xbf16>, vector<8x32xf32> -> vector<8x32xf32>
    %133 = arith.addf %83, %132 : vector<8x32xf32>
    %c0_92 = arith.constant 0 : index
    %c2 = arith.constant 2 : index
    %c0_93 = arith.constant 0 : index
    %c0_94 = arith.constant 0 : index
    %134 = vector.load %arg5[%c0_92, %c2, %c0_93, %c0_94] : memref<2x4x32x8xbf16, #tpu.memory_space<vmem>>, vector<1x1x32x8xbf16>
    %135 = vector.shape_cast %134 : vector<1x1x32x8xbf16> to vector<32x8xbf16>
    %cst_95 = arith.constant dense<0.000000e+00> : vector<8x8xf32>
    %136 = tpu.matmul %32, %135, %cst_95 {dimension_numbers = #tpu.dot_dimension_numbers<[1], [0], [0], [1], [0, 0, 1, 1], [], []>} : vector<8x32xbf16>, vector<32x8xbf16>, vector<8x8xf32> -> vector<8x8xf32>
    %c0_96 = arith.constant 0 : index
    %c2_97 = arith.constant 2 : index
    %c0_98 = arith.constant 0 : index
    %c0_99 = arith.constant 0 : index
    %137 = vector.load %arg6[%c0_96, %c2_97, %c0_98, %c0_99] : memref<2x4x1x8xf32, #tpu.memory_space<vmem>>, vector<1x1x1x8xf32>
    %138 = vector.shape_cast %137 : vector<1x1x1x8xf32> to vector<1x8xf32>
    %139 = vector.broadcast %138 : vector<1x8xf32> to vector<8x8xf32>
    %140 = arith.addf %136, %139 : vector<8x8xf32>
    %c0_100 = arith.constant 0 : index
    %c2_101 = arith.constant 2 : index
    %c0_102 = arith.constant 0 : index
    %c0_103 = arith.constant 0 : index
    %141 = vector.load %arg7[%c0_100, %c2_101, %c0_102, %c0_103] : memref<2x4x32x8xbf16, #tpu.memory_space<vmem>>, vector<1x1x32x8xbf16>
    %142 = vector.shape_cast %141 : vector<1x1x32x8xbf16> to vector<32x8xbf16>
    %cst_104 = arith.constant dense<0.000000e+00> : vector<8x8xf32>
    %143 = tpu.matmul %32, %142, %cst_104 {dimension_numbers = #tpu.dot_dimension_numbers<[1], [0], [0], [1], [0, 0, 1, 1], [], []>} : vector<8x32xbf16>, vector<32x8xbf16>, vector<8x8xf32> -> vector<8x8xf32>
    %c0_105 = arith.constant 0 : index
    %c2_106 = arith.constant 2 : index
    %c0_107 = arith.constant 0 : index
    %c0_108 = arith.constant 0 : index
    %144 = vector.load %arg8[%c0_105, %c2_106, %c0_107, %c0_108] : memref<2x4x1x8xf32, #tpu.memory_space<vmem>>, vector<1x1x1x8xf32>
    %145 = vector.shape_cast %144 : vector<1x1x1x8xf32> to vector<1x8xf32>
    %146 = vector.broadcast %145 : vector<1x8xf32> to vector<8x8xf32>
    %147 = arith.addf %143, %146 : vector<8x8xf32>
    %c0_109 = arith.constant 0 : index
    %c2_110 = arith.constant 2 : index
    %c0_111 = arith.constant 0 : index
    %c0_112 = arith.constant 0 : index
    %148 = vector.load %arg9[%c0_109, %c2_110, %c0_111, %c0_112] : memref<2x4x32x8xbf16, #tpu.memory_space<vmem>>, vector<1x1x32x8xbf16>
    %149 = vector.shape_cast %148 : vector<1x1x32x8xbf16> to vector<32x8xbf16>
    %cst_113 = arith.constant dense<0.000000e+00> : vector<8x8xf32>
    %150 = tpu.matmul %32, %149, %cst_113 {dimension_numbers = #tpu.dot_dimension_numbers<[1], [0], [0], [1], [0, 0, 1, 1], [], []>} : vector<8x32xbf16>, vector<32x8xbf16>, vector<8x8xf32> -> vector<8x8xf32>
    %c0_114 = arith.constant 0 : index
    %c2_115 = arith.constant 2 : index
    %c0_116 = arith.constant 0 : index
    %c0_117 = arith.constant 0 : index
    %151 = vector.load %arg10[%c0_114, %c2_115, %c0_116, %c0_117] : memref<2x4x1x8xf32, #tpu.memory_space<vmem>>, vector<1x1x1x8xf32>
    %152 = vector.shape_cast %151 : vector<1x1x1x8xf32> to vector<1x8xf32>
    %153 = vector.broadcast %152 : vector<1x8xf32> to vector<8x8xf32>
    %154 = arith.addf %150, %153 : vector<8x8xf32>
    %155 = vector.shape_cast %140 : vector<8x8xf32> to vector<1x8x8xf32>
    %156 = arith.truncf %155 : vector<1x8x8xf32> to vector<1x8x8xbf16>
    %157 = vector.shape_cast %147 : vector<8x8xf32> to vector<1x8x8xf32>
    %158 = arith.truncf %157 : vector<1x8x8xf32> to vector<1x8x8xbf16>
    %159 = vector.shape_cast %154 : vector<8x8xf32> to vector<1x8x8xf32>
    %160 = arith.truncf %159 : vector<1x8x8xf32> to vector<1x8x8xbf16>
    "tpu.trace_start"() <{level = 10 : i32, message = "bqd,bkd->bqk"}> : () -> ()
    %cst_118 = arith.constant dense<0.000000e+00> : vector<1x8x8xf32>
    %161 = tpu.matmul %156, %158, %cst_118 {dimension_numbers = #tpu.dot_dimension_numbers<[2], [2], [1], [1], [0, 0, 0, 1, 1, 1], [0], [0]>} : vector<1x8x8xbf16>, vector<1x8x8xbf16>, vector<1x8x8xf32> -> vector<1x8x8xf32>
    "tpu.trace_stop"() : () -> ()
    %cst_119 = arith.constant 0.353553385 : f32
    %162 = vector.broadcast %cst_119 : f32 to vector<1x8x8xf32>
    %163 = arith.mulf %161, %162 : vector<1x8x8xf32>
    %cst_120 = arith.constant -1.000000e+09 : f32
    %164 = vector.broadcast %cst_120 : f32 to vector<1x8x8xf32>
    %165 = arith.select %6, %164, %163 : vector<1x8x8xi1>, vector<1x8x8xf32>
    %cst_121 = arith.constant dense<0xFF800000> : vector<1x8xf32>
    %166 = vector.multi_reduction <maximumf>, %165, %cst_121 [2] : vector<1x8x8xf32> to vector<1x8xf32>
    %167 = vector.shape_cast %166 : vector<1x8xf32> to vector<1x8x1xf32>
    %168 = vector.broadcast %167 : vector<1x8x1xf32> to vector<1x8x8xf32>
    %169 = arith.subf %165, %168 : vector<1x8x8xf32>
    %170 = math.exp %169 : vector<1x8x8xf32>
    %cst_122 = arith.constant dense<0.000000e+00> : vector<1x8xf32>
    %171 = vector.multi_reduction <add>, %170, %cst_122 [2] : vector<1x8x8xf32> to vector<1x8xf32>
    %172 = vector.shape_cast %171 : vector<1x8xf32> to vector<1x8x1xf32>
    %173 = tpu.reciprocal %172 {approx = true} : vector<1x8x1xf32> -> vector<1x8x1xf32>
    %174 = vector.broadcast %173 : vector<1x8x1xf32> to vector<1x8x8xf32>
    %175 = arith.mulf %170, %174 : vector<1x8x8xf32>
    %176 = arith.truncf %175 : vector<1x8x8xf32> to vector<1x8x8xbf16>
    "tpu.trace_start"() <{level = 10 : i32, message = "bqk,bkd->bqd"}> : () -> ()
    %cst_123 = arith.constant dense<0.000000e+00> : vector<1x8x8xf32>
    %177 = tpu.matmul %176, %160, %cst_123 {dimension_numbers = #tpu.dot_dimension_numbers<[2], [1], [1], [2], [0, 0, 0, 1, 1, 2], [0], [0]>} : vector<1x8x8xbf16>, vector<1x8x8xbf16>, vector<1x8x8xf32> -> vector<1x8x8xf32>
    "tpu.trace_stop"() : () -> ()
    %178 = vector.shape_cast %177 : vector<1x8x8xf32> to vector<8x8xf32>
    %179 = arith.truncf %178 : vector<8x8xf32> to vector<8x8xbf16>
    %c0_124 = arith.constant 0 : index
    %c2_125 = arith.constant 2 : index
    %c0_126 = arith.constant 0 : index
    %c0_127 = arith.constant 0 : index
    %180 = vector.load %arg11[%c0_124, %c2_125, %c0_126, %c0_127] : memref<2x4x8x32xbf16, #tpu.memory_space<vmem>>, vector<1x1x8x32xbf16>
    %181 = vector.shape_cast %180 : vector<1x1x8x32xbf16> to vector<8x32xbf16>
    %cst_128 = arith.constant dense<0.000000e+00> : vector<8x32xf32>
    %182 = tpu.matmul %179, %181, %cst_128 {dimension_numbers = #tpu.dot_dimension_numbers<[1], [0], [0], [1], [0, 0, 1, 1], [], []>} : vector<8x8xbf16>, vector<8x32xbf16>, vector<8x32xf32> -> vector<8x32xf32>
    %183 = arith.addf %133, %182 : vector<8x32xf32>
    %c0_129 = arith.constant 0 : index
    %c3 = arith.constant 3 : index
    %c0_130 = arith.constant 0 : index
    %c0_131 = arith.constant 0 : index
    %184 = vector.load %arg5[%c0_129, %c3, %c0_130, %c0_131] : memref<2x4x32x8xbf16, #tpu.memory_space<vmem>>, vector<1x1x32x8xbf16>
    %185 = vector.shape_cast %184 : vector<1x1x32x8xbf16> to vector<32x8xbf16>
    %cst_132 = arith.constant dense<0.000000e+00> : vector<8x8xf32>
    %186 = tpu.matmul %32, %185, %cst_132 {dimension_numbers = #tpu.dot_dimension_numbers<[1], [0], [0], [1], [0, 0, 1, 1], [], []>} : vector<8x32xbf16>, vector<32x8xbf16>, vector<8x8xf32> -> vector<8x8xf32>
    %c0_133 = arith.constant 0 : index
    %c3_134 = arith.constant 3 : index
    %c0_135 = arith.constant 0 : index
    %c0_136 = arith.constant 0 : index
    %187 = vector.load %arg6[%c0_133, %c3_134, %c0_135, %c0_136] : memref<2x4x1x8xf32, #tpu.memory_space<vmem>>, vector<1x1x1x8xf32>
    %188 = vector.shape_cast %187 : vector<1x1x1x8xf32> to vector<1x8xf32>
    %189 = vector.broadcast %188 : vector<1x8xf32> to vector<8x8xf32>
    %190 = arith.addf %186, %189 : vector<8x8xf32>
    %c0_137 = arith.constant 0 : index
    %c3_138 = arith.constant 3 : index
    %c0_139 = arith.constant 0 : index
    %c0_140 = arith.constant 0 : index
    %191 = vector.load %arg7[%c0_137, %c3_138, %c0_139, %c0_140] : memref<2x4x32x8xbf16, #tpu.memory_space<vmem>>, vector<1x1x32x8xbf16>
    %192 = vector.shape_cast %191 : vector<1x1x32x8xbf16> to vector<32x8xbf16>
    %cst_141 = arith.constant dense<0.000000e+00> : vector<8x8xf32>
    %193 = tpu.matmul %32, %192, %cst_141 {dimension_numbers = #tpu.dot_dimension_numbers<[1], [0], [0], [1], [0, 0, 1, 1], [], []>} : vector<8x32xbf16>, vector<32x8xbf16>, vector<8x8xf32> -> vector<8x8xf32>
    %c0_142 = arith.constant 0 : index
    %c3_143 = arith.constant 3 : index
    %c0_144 = arith.constant 0 : index
    %c0_145 = arith.constant 0 : index
    %194 = vector.load %arg8[%c0_142, %c3_143, %c0_144, %c0_145] : memref<2x4x1x8xf32, #tpu.memory_space<vmem>>, vector<1x1x1x8xf32>
    %195 = vector.shape_cast %194 : vector<1x1x1x8xf32> to vector<1x8xf32>
    %196 = vector.broadcast %195 : vector<1x8xf32> to vector<8x8xf32>
    %197 = arith.addf %193, %196 : vector<8x8xf32>
    %c0_146 = arith.constant 0 : index
    %c3_147 = arith.constant 3 : index
    %c0_148 = arith.constant 0 : index
    %c0_149 = arith.constant 0 : index
    %198 = vector.load %arg9[%c0_146, %c3_147, %c0_148, %c0_149] : memref<2x4x32x8xbf16, #tpu.memory_space<vmem>>, vector<1x1x32x8xbf16>
    %199 = vector.shape_cast %198 : vector<1x1x32x8xbf16> to vector<32x8xbf16>
    %cst_150 = arith.constant dense<0.000000e+00> : vector<8x8xf32>
    %200 = tpu.matmul %32, %199, %cst_150 {dimension_numbers = #tpu.dot_dimension_numbers<[1], [0], [0], [1], [0, 0, 1, 1], [], []>} : vector<8x32xbf16>, vector<32x8xbf16>, vector<8x8xf32> -> vector<8x8xf32>
    %c0_151 = arith.constant 0 : index
    %c3_152 = arith.constant 3 : index
    %c0_153 = arith.constant 0 : index
    %c0_154 = arith.constant 0 : index
    %201 = vector.load %arg10[%c0_151, %c3_152, %c0_153, %c0_154] : memref<2x4x1x8xf32, #tpu.memory_space<vmem>>, vector<1x1x1x8xf32>
    %202 = vector.shape_cast %201 : vector<1x1x1x8xf32> to vector<1x8xf32>
    %203 = vector.broadcast %202 : vector<1x8xf32> to vector<8x8xf32>
    %204 = arith.addf %200, %203 : vector<8x8xf32>
    %205 = vector.shape_cast %190 : vector<8x8xf32> to vector<1x8x8xf32>
    %206 = arith.truncf %205 : vector<1x8x8xf32> to vector<1x8x8xbf16>
    %207 = vector.shape_cast %197 : vector<8x8xf32> to vector<1x8x8xf32>
    %208 = arith.truncf %207 : vector<1x8x8xf32> to vector<1x8x8xbf16>
    %209 = vector.shape_cast %204 : vector<8x8xf32> to vector<1x8x8xf32>
    %210 = arith.truncf %209 : vector<1x8x8xf32> to vector<1x8x8xbf16>
    "tpu.trace_start"() <{level = 10 : i32, message = "bqd,bkd->bqk"}> : () -> ()
    %cst_155 = arith.constant dense<0.000000e+00> : vector<1x8x8xf32>
    %211 = tpu.matmul %206, %208, %cst_155 {dimension_numbers = #tpu.dot_dimension_numbers<[2], [2], [1], [1], [0, 0, 0, 1, 1, 1], [0], [0]>} : vector<1x8x8xbf16>, vector<1x8x8xbf16>, vector<1x8x8xf32> -> vector<1x8x8xf32>
    "tpu.trace_stop"() : () -> ()
    %cst_156 = arith.constant 0.353553385 : f32
    %212 = vector.broadcast %cst_156 : f32 to vector<1x8x8xf32>
    %213 = arith.mulf %211, %212 : vector<1x8x8xf32>
    %cst_157 = arith.constant -1.000000e+09 : f32
    %214 = vector.broadcast %cst_157 : f32 to vector<1x8x8xf32>
    %215 = arith.select %6, %214, %213 : vector<1x8x8xi1>, vector<1x8x8xf32>
    %cst_158 = arith.constant dense<0xFF800000> : vector<1x8xf32>
    %216 = vector.multi_reduction <maximumf>, %215, %cst_158 [2] : vector<1x8x8xf32> to vector<1x8xf32>
    %217 = vector.shape_cast %216 : vector<1x8xf32> to vector<1x8x1xf32>
    %218 = vector.broadcast %217 : vector<1x8x1xf32> to vector<1x8x8xf32>
    %219 = arith.subf %215, %218 : vector<1x8x8xf32>
    %220 = math.exp %219 : vector<1x8x8xf32>
    %cst_159 = arith.constant dense<0.000000e+00> : vector<1x8xf32>
    %221 = vector.multi_reduction <add>, %220, %cst_159 [2] : vector<1x8x8xf32> to vector<1x8xf32>
    %222 = vector.shape_cast %221 : vector<1x8xf32> to vector<1x8x1xf32>
    %223 = tpu.reciprocal %222 {approx = true} : vector<1x8x1xf32> -> vector<1x8x1xf32>
    %224 = vector.broadcast %223 : vector<1x8x1xf32> to vector<1x8x8xf32>
    %225 = arith.mulf %220, %224 : vector<1x8x8xf32>
    %226 = arith.truncf %225 : vector<1x8x8xf32> to vector<1x8x8xbf16>
    "tpu.trace_start"() <{level = 10 : i32, message = "bqk,bkd->bqd"}> : () -> ()
    %cst_160 = arith.constant dense<0.000000e+00> : vector<1x8x8xf32>
    %227 = tpu.matmul %226, %210, %cst_160 {dimension_numbers = #tpu.dot_dimension_numbers<[2], [1], [1], [2], [0, 0, 0, 1, 1, 2], [0], [0]>} : vector<1x8x8xbf16>, vector<1x8x8xbf16>, vector<1x8x8xf32> -> vector<1x8x8xf32>
    "tpu.trace_stop"() : () -> ()
    %228 = vector.shape_cast %227 : vector<1x8x8xf32> to vector<8x8xf32>
    %229 = arith.truncf %228 : vector<8x8xf32> to vector<8x8xbf16>
    %c0_161 = arith.constant 0 : index
    %c3_162 = arith.constant 3 : index
    %c0_163 = arith.constant 0 : index
    %c0_164 = arith.constant 0 : index
    %230 = vector.load %arg11[%c0_161, %c3_162, %c0_163, %c0_164] : memref<2x4x8x32xbf16, #tpu.memory_space<vmem>>, vector<1x1x8x32xbf16>
    %231 = vector.shape_cast %230 : vector<1x1x8x32xbf16> to vector<8x32xbf16>
    %cst_165 = arith.constant dense<0.000000e+00> : vector<8x32xf32>
    %232 = tpu.matmul %229, %231, %cst_165 {dimension_numbers = #tpu.dot_dimension_numbers<[1], [0], [0], [1], [0, 0, 1, 1], [], []>} : vector<8x8xbf16>, vector<8x32xbf16>, vector<8x32xf32> -> vector<8x32xf32>
    %233 = arith.addf %183, %232 : vector<8x32xf32>
    %234 = arith.addf %2, %233 : vector<8x32xf32>
    %c0_166 = arith.constant 0 : index
    %c0_167 = arith.constant 0 : index
    %c0_168 = arith.constant 0 : index
    %235 = vector.load %arg12[%c0_166, %c0_167, %c0_168] : memref<2x1x32xf32, #tpu.memory_space<vmem>>, vector<1x1x32xf32>
    %236 = vector.shape_cast %235 : vector<1x1x32xf32> to vector<1x32xf32>
    %237 = vector.broadcast %236 : vector<1x32xf32> to vector<8x32xf32>
    %238 = arith.addf %234, %237 : vector<8x32xf32>
    %c0_169 = arith.constant 0 : index
    %c0_170 = arith.constant 0 : index
    %c0_171 = arith.constant 0 : index
    %239 = vector.load %arg13[%c0_169, %c0_170, %c0_171] : memref<2x1x32xf32, #tpu.memory_space<vmem>>, vector<1x1x32xf32>
    %240 = vector.shape_cast %239 : vector<1x1x32xf32> to vector<1x32xf32>
    %c0_172 = arith.constant 0 : index
    %c0_173 = arith.constant 0 : index
    %c0_174 = arith.constant 0 : index
    %241 = vector.load %arg14[%c0_172, %c0_173, %c0_174] : memref<2x1x32xf32, #tpu.memory_space<vmem>>, vector<1x1x32xf32>
    %242 = vector.shape_cast %241 : vector<1x1x32xf32> to vector<1x32xf32>
    %cst_175 = arith.constant dense<0.000000e+00> : vector<8xf32>
    %243 = vector.multi_reduction <add>, %238, %cst_175 [1] : vector<8x32xf32> to vector<8xf32>
    %244 = vector.shape_cast %243 : vector<8xf32> to vector<8x1xf32>
    %cst_176 = arith.constant 3.200000e+01 : f32
    %245 = vector.broadcast %cst_176 : f32 to vector<8x1xf32>
    %246 = arith.divf %244, %245 : vector<8x1xf32>
    %247 = vector.broadcast %246 : vector<8x1xf32> to vector<8x32xf32>
    %248 = arith.subf %238, %247 : vector<8x32xf32>
    %249 = arith.mulf %248, %248 : vector<8x32xf32>
    %cst_177 = arith.constant dense<0.000000e+00> : vector<8xf32>
    %250 = vector.multi_reduction <add>, %249, %cst_177 [1] : vector<8x32xf32> to vector<8xf32>
    %251 = vector.shape_cast %250 : vector<8xf32> to vector<8x1xf32>
    %cst_178 = arith.constant 0.0322580636 : f32
    %252 = vector.broadcast %cst_178 : f32 to vector<8x1xf32>
    %253 = arith.mulf %251, %252 : vector<8x1xf32>
    %254 = math.sqrt %253 : vector<8x1xf32>
    %255 = vector.broadcast %240 : vector<1x32xf32> to vector<8x32xf32>
    %256 = arith.mulf %255, %248 : vector<8x32xf32>
    %cst_179 = arith.constant 9.99999997E-7 : f32
    %257 = vector.broadcast %cst_179 : f32 to vector<8x1xf32>
    %258 = arith.addf %254, %257 : vector<8x1xf32>
    %259 = tpu.reciprocal %258 {approx = true} : vector<8x1xf32> -> vector<8x1xf32>
    %260 = vector.broadcast %259 : vector<8x1xf32> to vector<8x32xf32>
    %261 = arith.mulf %256, %260 : vector<8x32xf32>
    %262 = vector.broadcast %242 : vector<1x32xf32> to vector<8x32xf32>
    %263 = arith.addf %261, %262 : vector<8x32xf32>
    %264 = arith.truncf %263 : vector<8x32xf32> to vector<8x32xbf16>
    %c0_180 = arith.constant 0 : index
    %c0_181 = arith.constant 0 : index
    %c0_182 = arith.constant 0 : index
    %265 = vector.load %arg15[%c0_180, %c0_181, %c0_182] : memref<2x32x64xbf16, #tpu.memory_space<vmem>>, vector<1x32x64xbf16>
    %266 = vector.shape_cast %265 : vector<1x32x64xbf16> to vector<32x64xbf16>
    %cst_183 = arith.constant dense<0.000000e+00> : vector<8x64xf32>
    %267 = tpu.matmul %264, %266, %cst_183 {dimension_numbers = #tpu.dot_dimension_numbers<[1], [0], [0], [1], [0, 0, 1, 1], [], []>} : vector<8x32xbf16>, vector<32x64xbf16>, vector<8x64xf32> -> vector<8x64xf32>
    %c0_184 = arith.constant 0 : index
    %c0_185 = arith.constant 0 : index
    %c0_186 = arith.constant 0 : index
    %268 = vector.load %arg16[%c0_184, %c0_185, %c0_186] : memref<2x1x64xf32, #tpu.memory_space<vmem>>, vector<1x1x64xf32>
    %269 = vector.shape_cast %268 : vector<1x1x64xf32> to vector<1x64xf32>
    %270 = vector.broadcast %269 : vector<1x64xf32> to vector<8x64xf32>
    %271 = arith.addf %267, %270 : vector<8x64xf32>
    %cst_187 = arith.constant 0.000000e+00 : f32
    %272 = vector.broadcast %cst_187 : f32 to vector<8x64xf32>
    %273 = arith.maximumf %271, %272 : vector<8x64xf32>
    %274 = arith.truncf %273 : vector<8x64xf32> to vector<8x64xbf16>
    %c0_188 = arith.constant 0 : index
    %c0_189 = arith.constant 0 : index
    %c0_190 = arith.constant 0 : index
    %275 = vector.load %arg17[%c0_188, %c0_189, %c0_190] : memref<2x64x32xbf16, #tpu.memory_space<vmem>>, vector<1x64x32xbf16>
    %276 = vector.shape_cast %275 : vector<1x64x32xbf16> to vector<64x32xbf16>
    %cst_191 = arith.constant dense<0.000000e+00> : vector<8x32xf32>
    %277 = tpu.matmul %274, %276, %cst_191 {dimension_numbers = #tpu.dot_dimension_numbers<[1], [0], [0], [1], [0, 0, 1, 1], [], []>} : vector<8x64xbf16>, vector<64x32xbf16>, vector<8x32xf32> -> vector<8x32xf32>
    %278 = arith.addf %238, %277 : vector<8x32xf32>
    %c0_192 = arith.constant 0 : index
    %c0_193 = arith.constant 0 : index
    %c0_194 = arith.constant 0 : index
    %279 = vector.load %arg18[%c0_192, %c0_193, %c0_194] : memref<2x1x32xf32, #tpu.memory_space<vmem>>, vector<1x1x32xf32>
    %280 = vector.shape_cast %279 : vector<1x1x32xf32> to vector<1x32xf32>
    %281 = vector.broadcast %280 : vector<1x32xf32> to vector<8x32xf32>
    %282 = arith.addf %278, %281 : vector<8x32xf32>
    %c1_195 = arith.constant 1 : index
    %c0_196 = arith.constant 0 : index
    %c0_197 = arith.constant 0 : index
    %283 = vector.load %arg3[%c1_195, %c0_196, %c0_197] : memref<2x1x32xf32, #tpu.memory_space<vmem>>, vector<1x1x32xf32>
    %284 = vector.shape_cast %283 : vector<1x1x32xf32> to vector<1x32xf32>
    %c1_198 = arith.constant 1 : index
    %c0_199 = arith.constant 0 : index
    %c0_200 = arith.constant 0 : index
    %285 = vector.load %arg4[%c1_198, %c0_199, %c0_200] : memref<2x1x32xf32, #tpu.memory_space<vmem>>, vector<1x1x32xf32>
    %286 = vector.shape_cast %285 : vector<1x1x32xf32> to vector<1x32xf32>
    %cst_201 = arith.constant dense<0.000000e+00> : vector<8xf32>
    %287 = vector.multi_reduction <add>, %282, %cst_201 [1] : vector<8x32xf32> to vector<8xf32>
    %288 = vector.shape_cast %287 : vector<8xf32> to vector<8x1xf32>
    %cst_202 = arith.constant 3.200000e+01 : f32
    %289 = vector.broadcast %cst_202 : f32 to vector<8x1xf32>
    %290 = arith.divf %288, %289 : vector<8x1xf32>
    %291 = vector.broadcast %290 : vector<8x1xf32> to vector<8x32xf32>
    %292 = arith.subf %282, %291 : vector<8x32xf32>
    %293 = arith.mulf %292, %292 : vector<8x32xf32>
    %cst_203 = arith.constant dense<0.000000e+00> : vector<8xf32>
    %294 = vector.multi_reduction <add>, %293, %cst_203 [1] : vector<8x32xf32> to vector<8xf32>
    %295 = vector.shape_cast %294 : vector<8xf32> to vector<8x1xf32>
    %cst_204 = arith.constant 0.0322580636 : f32
    %296 = vector.broadcast %cst_204 : f32 to vector<8x1xf32>
    %297 = arith.mulf %295, %296 : vector<8x1xf32>
    %298 = math.sqrt %297 : vector<8x1xf32>
    %299 = vector.broadcast %284 : vector<1x32xf32> to vector<8x32xf32>
    %300 = arith.mulf %299, %292 : vector<8x32xf32>
    %cst_205 = arith.constant 9.99999997E-7 : f32
    %301 = vector.broadcast %cst_205 : f32 to vector<8x1xf32>
    %302 = arith.addf %298, %301 : vector<8x1xf32>
    %303 = tpu.reciprocal %302 {approx = true} : vector<8x1xf32> -> vector<8x1xf32>
    %304 = vector.broadcast %303 : vector<8x1xf32> to vector<8x32xf32>
    %305 = arith.mulf %300, %304 : vector<8x32xf32>
    %306 = vector.broadcast %286 : vector<1x32xf32> to vector<8x32xf32>
    %307 = arith.addf %305, %306 : vector<8x32xf32>
    %308 = arith.truncf %307 : vector<8x32xf32> to vector<8x32xbf16>
    %cst_206 = arith.constant 0.000000e+00 : f32
    %309 = vector.broadcast %cst_206 : f32 to vector<8x32xf32>
    %c1_207 = arith.constant 1 : index
    %c0_208 = arith.constant 0 : index
    %c0_209 = arith.constant 0 : index
    %c0_210 = arith.constant 0 : index
    %310 = vector.load %arg5[%c1_207, %c0_208, %c0_209, %c0_210] : memref<2x4x32x8xbf16, #tpu.memory_space<vmem>>, vector<1x1x32x8xbf16>
    %311 = vector.shape_cast %310 : vector<1x1x32x8xbf16> to vector<32x8xbf16>
    %cst_211 = arith.constant dense<0.000000e+00> : vector<8x8xf32>
    %312 = tpu.matmul %308, %311, %cst_211 {dimension_numbers = #tpu.dot_dimension_numbers<[1], [0], [0], [1], [0, 0, 1, 1], [], []>} : vector<8x32xbf16>, vector<32x8xbf16>, vector<8x8xf32> -> vector<8x8xf32>
    %c1_212 = arith.constant 1 : index
    %c0_213 = arith.constant 0 : index
    %c0_214 = arith.constant 0 : index
    %c0_215 = arith.constant 0 : index
    %313 = vector.load %arg6[%c1_212, %c0_213, %c0_214, %c0_215] : memref<2x4x1x8xf32, #tpu.memory_space<vmem>>, vector<1x1x1x8xf32>
    %314 = vector.shape_cast %313 : vector<1x1x1x8xf32> to vector<1x8xf32>
    %315 = vector.broadcast %314 : vector<1x8xf32> to vector<8x8xf32>
    %316 = arith.addf %312, %315 : vector<8x8xf32>
    %c1_216 = arith.constant 1 : index
    %c0_217 = arith.constant 0 : index
    %c0_218 = arith.constant 0 : index
    %c0_219 = arith.constant 0 : index
    %317 = vector.load %arg7[%c1_216, %c0_217, %c0_218, %c0_219] : memref<2x4x32x8xbf16, #tpu.memory_space<vmem>>, vector<1x1x32x8xbf16>
    %318 = vector.shape_cast %317 : vector<1x1x32x8xbf16> to vector<32x8xbf16>
    %cst_220 = arith.constant dense<0.000000e+00> : vector<8x8xf32>
    %319 = tpu.matmul %308, %318, %cst_220 {dimension_numbers = #tpu.dot_dimension_numbers<[1], [0], [0], [1], [0, 0, 1, 1], [], []>} : vector<8x32xbf16>, vector<32x8xbf16>, vector<8x8xf32> -> vector<8x8xf32>
    %c1_221 = arith.constant 1 : index
    %c0_222 = arith.constant 0 : index
    %c0_223 = arith.constant 0 : index
    %c0_224 = arith.constant 0 : index
    %320 = vector.load %arg8[%c1_221, %c0_222, %c0_223, %c0_224] : memref<2x4x1x8xf32, #tpu.memory_space<vmem>>, vector<1x1x1x8xf32>
    %321 = vector.shape_cast %320 : vector<1x1x1x8xf32> to vector<1x8xf32>
    %322 = vector.broadcast %321 : vector<1x8xf32> to vector<8x8xf32>
    %323 = arith.addf %319, %322 : vector<8x8xf32>
    %c1_225 = arith.constant 1 : index
    %c0_226 = arith.constant 0 : index
    %c0_227 = arith.constant 0 : index
    %c0_228 = arith.constant 0 : index
    %324 = vector.load %arg9[%c1_225, %c0_226, %c0_227, %c0_228] : memref<2x4x32x8xbf16, #tpu.memory_space<vmem>>, vector<1x1x32x8xbf16>
    %325 = vector.shape_cast %324 : vector<1x1x32x8xbf16> to vector<32x8xbf16>
    %cst_229 = arith.constant dense<0.000000e+00> : vector<8x8xf32>
    %326 = tpu.matmul %308, %325, %cst_229 {dimension_numbers = #tpu.dot_dimension_numbers<[1], [0], [0], [1], [0, 0, 1, 1], [], []>} : vector<8x32xbf16>, vector<32x8xbf16>, vector<8x8xf32> -> vector<8x8xf32>
    %c1_230 = arith.constant 1 : index
    %c0_231 = arith.constant 0 : index
    %c0_232 = arith.constant 0 : index
    %c0_233 = arith.constant 0 : index
    %327 = vector.load %arg10[%c1_230, %c0_231, %c0_232, %c0_233] : memref<2x4x1x8xf32, #tpu.memory_space<vmem>>, vector<1x1x1x8xf32>
    %328 = vector.shape_cast %327 : vector<1x1x1x8xf32> to vector<1x8xf32>
    %329 = vector.broadcast %328 : vector<1x8xf32> to vector<8x8xf32>
    %330 = arith.addf %326, %329 : vector<8x8xf32>
    %331 = vector.shape_cast %316 : vector<8x8xf32> to vector<1x8x8xf32>
    %332 = arith.truncf %331 : vector<1x8x8xf32> to vector<1x8x8xbf16>
    %333 = vector.shape_cast %323 : vector<8x8xf32> to vector<1x8x8xf32>
    %334 = arith.truncf %333 : vector<1x8x8xf32> to vector<1x8x8xbf16>
    %335 = vector.shape_cast %330 : vector<8x8xf32> to vector<1x8x8xf32>
    %336 = arith.truncf %335 : vector<1x8x8xf32> to vector<1x8x8xbf16>
    "tpu.trace_start"() <{level = 10 : i32, message = "bqd,bkd->bqk"}> : () -> ()
    %cst_234 = arith.constant dense<0.000000e+00> : vector<1x8x8xf32>
    %337 = tpu.matmul %332, %334, %cst_234 {dimension_numbers = #tpu.dot_dimension_numbers<[2], [2], [1], [1], [0, 0, 0, 1, 1, 1], [0], [0]>} : vector<1x8x8xbf16>, vector<1x8x8xbf16>, vector<1x8x8xf32> -> vector<1x8x8xf32>
    "tpu.trace_stop"() : () -> ()
    %cst_235 = arith.constant 0.353553385 : f32
    %338 = vector.broadcast %cst_235 : f32 to vector<1x8x8xf32>
    %339 = arith.mulf %337, %338 : vector<1x8x8xf32>
    %cst_236 = arith.constant -1.000000e+09 : f32
    %340 = vector.broadcast %cst_236 : f32 to vector<1x8x8xf32>
    %341 = arith.select %6, %340, %339 : vector<1x8x8xi1>, vector<1x8x8xf32>
    %cst_237 = arith.constant dense<0xFF800000> : vector<1x8xf32>
    %342 = vector.multi_reduction <maximumf>, %341, %cst_237 [2] : vector<1x8x8xf32> to vector<1x8xf32>
    %343 = vector.shape_cast %342 : vector<1x8xf32> to vector<1x8x1xf32>
    %344 = vector.broadcast %343 : vector<1x8x1xf32> to vector<1x8x8xf32>
    %345 = arith.subf %341, %344 : vector<1x8x8xf32>
    %346 = math.exp %345 : vector<1x8x8xf32>
    %cst_238 = arith.constant dense<0.000000e+00> : vector<1x8xf32>
    %347 = vector.multi_reduction <add>, %346, %cst_238 [2] : vector<1x8x8xf32> to vector<1x8xf32>
    %348 = vector.shape_cast %347 : vector<1x8xf32> to vector<1x8x1xf32>
    %349 = tpu.reciprocal %348 {approx = true} : vector<1x8x1xf32> -> vector<1x8x1xf32>
    %350 = vector.broadcast %349 : vector<1x8x1xf32> to vector<1x8x8xf32>
    %351 = arith.mulf %346, %350 : vector<1x8x8xf32>
    %352 = arith.truncf %351 : vector<1x8x8xf32> to vector<1x8x8xbf16>
    "tpu.trace_start"() <{level = 10 : i32, message = "bqk,bkd->bqd"}> : () -> ()
    %cst_239 = arith.constant dense<0.000000e+00> : vector<1x8x8xf32>
    %353 = tpu.matmul %352, %336, %cst_239 {dimension_numbers = #tpu.dot_dimension_numbers<[2], [1], [1], [2], [0, 0, 0, 1, 1, 2], [0], [0]>} : vector<1x8x8xbf16>, vector<1x8x8xbf16>, vector<1x8x8xf32> -> vector<1x8x8xf32>
    "tpu.trace_stop"() : () -> ()
    %354 = vector.shape_cast %353 : vector<1x8x8xf32> to vector<8x8xf32>
    %355 = arith.truncf %354 : vector<8x8xf32> to vector<8x8xbf16>
    %c1_240 = arith.constant 1 : index
    %c0_241 = arith.constant 0 : index
    %c0_242 = arith.constant 0 : index
    %c0_243 = arith.constant 0 : index
    %356 = vector.load %arg11[%c1_240, %c0_241, %c0_242, %c0_243] : memref<2x4x8x32xbf16, #tpu.memory_space<vmem>>, vector<1x1x8x32xbf16>
    %357 = vector.shape_cast %356 : vector<1x1x8x32xbf16> to vector<8x32xbf16>
    %cst_244 = arith.constant dense<0.000000e+00> : vector<8x32xf32>
    %358 = tpu.matmul %355, %357, %cst_244 {dimension_numbers = #tpu.dot_dimension_numbers<[1], [0], [0], [1], [0, 0, 1, 1], [], []>} : vector<8x8xbf16>, vector<8x32xbf16>, vector<8x32xf32> -> vector<8x32xf32>
    %359 = arith.addf %309, %358 : vector<8x32xf32>
    %c1_245 = arith.constant 1 : index
    %c1_246 = arith.constant 1 : index
    %c0_247 = arith.constant 0 : index
    %c0_248 = arith.constant 0 : index
    %360 = vector.load %arg5[%c1_245, %c1_246, %c0_247, %c0_248] : memref<2x4x32x8xbf16, #tpu.memory_space<vmem>>, vector<1x1x32x8xbf16>
    %361 = vector.shape_cast %360 : vector<1x1x32x8xbf16> to vector<32x8xbf16>
    %cst_249 = arith.constant dense<0.000000e+00> : vector<8x8xf32>
    %362 = tpu.matmul %308, %361, %cst_249 {dimension_numbers = #tpu.dot_dimension_numbers<[1], [0], [0], [1], [0, 0, 1, 1], [], []>} : vector<8x32xbf16>, vector<32x8xbf16>, vector<8x8xf32> -> vector<8x8xf32>
    %c1_250 = arith.constant 1 : index
    %c1_251 = arith.constant 1 : index
    %c0_252 = arith.constant 0 : index
    %c0_253 = arith.constant 0 : index
    %363 = vector.load %arg6[%c1_250, %c1_251, %c0_252, %c0_253] : memref<2x4x1x8xf32, #tpu.memory_space<vmem>>, vector<1x1x1x8xf32>
    %364 = vector.shape_cast %363 : vector<1x1x1x8xf32> to vector<1x8xf32>
    %365 = vector.broadcast %364 : vector<1x8xf32> to vector<8x8xf32>
    %366 = arith.addf %362, %365 : vector<8x8xf32>
    %c1_254 = arith.constant 1 : index
    %c1_255 = arith.constant 1 : index
    %c0_256 = arith.constant 0 : index
    %c0_257 = arith.constant 0 : index
    %367 = vector.load %arg7[%c1_254, %c1_255, %c0_256, %c0_257] : memref<2x4x32x8xbf16, #tpu.memory_space<vmem>>, vector<1x1x32x8xbf16>
    %368 = vector.shape_cast %367 : vector<1x1x32x8xbf16> to vector<32x8xbf16>
    %cst_258 = arith.constant dense<0.000000e+00> : vector<8x8xf32>
    %369 = tpu.matmul %308, %368, %cst_258 {dimension_numbers = #tpu.dot_dimension_numbers<[1], [0], [0], [1], [0, 0, 1, 1], [], []>} : vector<8x32xbf16>, vector<32x8xbf16>, vector<8x8xf32> -> vector<8x8xf32>
    %c1_259 = arith.constant 1 : index
    %c1_260 = arith.constant 1 : index
    %c0_261 = arith.constant 0 : index
    %c0_262 = arith.constant 0 : index
    %370 = vector.load %arg8[%c1_259, %c1_260, %c0_261, %c0_262] : memref<2x4x1x8xf32, #tpu.memory_space<vmem>>, vector<1x1x1x8xf32>
    %371 = vector.shape_cast %370 : vector<1x1x1x8xf32> to vector<1x8xf32>
    %372 = vector.broadcast %371 : vector<1x8xf32> to vector<8x8xf32>
    %373 = arith.addf %369, %372 : vector<8x8xf32>
    %c1_263 = arith.constant 1 : index
    %c1_264 = arith.constant 1 : index
    %c0_265 = arith.constant 0 : index
    %c0_266 = arith.constant 0 : index
    %374 = vector.load %arg9[%c1_263, %c1_264, %c0_265, %c0_266] : memref<2x4x32x8xbf16, #tpu.memory_space<vmem>>, vector<1x1x32x8xbf16>
    %375 = vector.shape_cast %374 : vector<1x1x32x8xbf16> to vector<32x8xbf16>
    %cst_267 = arith.constant dense<0.000000e+00> : vector<8x8xf32>
    %376 = tpu.matmul %308, %375, %cst_267 {dimension_numbers = #tpu.dot_dimension_numbers<[1], [0], [0], [1], [0, 0, 1, 1], [], []>} : vector<8x32xbf16>, vector<32x8xbf16>, vector<8x8xf32> -> vector<8x8xf32>
    %c1_268 = arith.constant 1 : index
    %c1_269 = arith.constant 1 : index
    %c0_270 = arith.constant 0 : index
    %c0_271 = arith.constant 0 : index
    %377 = vector.load %arg10[%c1_268, %c1_269, %c0_270, %c0_271] : memref<2x4x1x8xf32, #tpu.memory_space<vmem>>, vector<1x1x1x8xf32>
    %378 = vector.shape_cast %377 : vector<1x1x1x8xf32> to vector<1x8xf32>
    %379 = vector.broadcast %378 : vector<1x8xf32> to vector<8x8xf32>
    %380 = arith.addf %376, %379 : vector<8x8xf32>
    %381 = vector.shape_cast %366 : vector<8x8xf32> to vector<1x8x8xf32>
    %382 = arith.truncf %381 : vector<1x8x8xf32> to vector<1x8x8xbf16>
    %383 = vector.shape_cast %373 : vector<8x8xf32> to vector<1x8x8xf32>
    %384 = arith.truncf %383 : vector<1x8x8xf32> to vector<1x8x8xbf16>
    %385 = vector.shape_cast %380 : vector<8x8xf32> to vector<1x8x8xf32>
    %386 = arith.truncf %385 : vector<1x8x8xf32> to vector<1x8x8xbf16>
    "tpu.trace_start"() <{level = 10 : i32, message = "bqd,bkd->bqk"}> : () -> ()
    %cst_272 = arith.constant dense<0.000000e+00> : vector<1x8x8xf32>
    %387 = tpu.matmul %382, %384, %cst_272 {dimension_numbers = #tpu.dot_dimension_numbers<[2], [2], [1], [1], [0, 0, 0, 1, 1, 1], [0], [0]>} : vector<1x8x8xbf16>, vector<1x8x8xbf16>, vector<1x8x8xf32> -> vector<1x8x8xf32>
    "tpu.trace_stop"() : () -> ()
    %cst_273 = arith.constant 0.353553385 : f32
    %388 = vector.broadcast %cst_273 : f32 to vector<1x8x8xf32>
    %389 = arith.mulf %387, %388 : vector<1x8x8xf32>
    %cst_274 = arith.constant -1.000000e+09 : f32
    %390 = vector.broadcast %cst_274 : f32 to vector<1x8x8xf32>
    %391 = arith.select %6, %390, %389 : vector<1x8x8xi1>, vector<1x8x8xf32>
    %cst_275 = arith.constant dense<0xFF800000> : vector<1x8xf32>
    %392 = vector.multi_reduction <maximumf>, %391, %cst_275 [2] : vector<1x8x8xf32> to vector<1x8xf32>
    %393 = vector.shape_cast %392 : vector<1x8xf32> to vector<1x8x1xf32>
    %394 = vector.broadcast %393 : vector<1x8x1xf32> to vector<1x8x8xf32>
    %395 = arith.subf %391, %394 : vector<1x8x8xf32>
    %396 = math.exp %395 : vector<1x8x8xf32>
    %cst_276 = arith.constant dense<0.000000e+00> : vector<1x8xf32>
    %397 = vector.multi_reduction <add>, %396, %cst_276 [2] : vector<1x8x8xf32> to vector<1x8xf32>
    %398 = vector.shape_cast %397 : vector<1x8xf32> to vector<1x8x1xf32>
    %399 = tpu.reciprocal %398 {approx = true} : vector<1x8x1xf32> -> vector<1x8x1xf32>
    %400 = vector.broadcast %399 : vector<1x8x1xf32> to vector<1x8x8xf32>
    %401 = arith.mulf %396, %400 : vector<1x8x8xf32>
    %402 = arith.truncf %401 : vector<1x8x8xf32> to vector<1x8x8xbf16>
    "tpu.trace_start"() <{level = 10 : i32, message = "bqk,bkd->bqd"}> : () -> ()
    %cst_277 = arith.constant dense<0.000000e+00> : vector<1x8x8xf32>
    %403 = tpu.matmul %402, %386, %cst_277 {dimension_numbers = #tpu.dot_dimension_numbers<[2], [1], [1], [2], [0, 0, 0, 1, 1, 2], [0], [0]>} : vector<1x8x8xbf16>, vector<1x8x8xbf16>, vector<1x8x8xf32> -> vector<1x8x8xf32>
    "tpu.trace_stop"() : () -> ()
    %404 = vector.shape_cast %403 : vector<1x8x8xf32> to vector<8x8xf32>
    %405 = arith.truncf %404 : vector<8x8xf32> to vector<8x8xbf16>
    %c1_278 = arith.constant 1 : index
    %c1_279 = arith.constant 1 : index
    %c0_280 = arith.constant 0 : index
    %c0_281 = arith.constant 0 : index
    %406 = vector.load %arg11[%c1_278, %c1_279, %c0_280, %c0_281] : memref<2x4x8x32xbf16, #tpu.memory_space<vmem>>, vector<1x1x8x32xbf16>
    %407 = vector.shape_cast %406 : vector<1x1x8x32xbf16> to vector<8x32xbf16>
    %cst_282 = arith.constant dense<0.000000e+00> : vector<8x32xf32>
    %408 = tpu.matmul %405, %407, %cst_282 {dimension_numbers = #tpu.dot_dimension_numbers<[1], [0], [0], [1], [0, 0, 1, 1], [], []>} : vector<8x8xbf16>, vector<8x32xbf16>, vector<8x32xf32> -> vector<8x32xf32>
    %409 = arith.addf %359, %408 : vector<8x32xf32>
    %c1_283 = arith.constant 1 : index
    %c2_284 = arith.constant 2 : index
    %c0_285 = arith.constant 0 : index
    %c0_286 = arith.constant 0 : index
    %410 = vector.load %arg5[%c1_283, %c2_284, %c0_285, %c0_286] : memref<2x4x32x8xbf16, #tpu.memory_space<vmem>>, vector<1x1x32x8xbf16>
    %411 = vector.shape_cast %410 : vector<1x1x32x8xbf16> to vector<32x8xbf16>
    %cst_287 = arith.constant dense<0.000000e+00> : vector<8x8xf32>
    %412 = tpu.matmul %308, %411, %cst_287 {dimension_numbers = #tpu.dot_dimension_numbers<[1], [0], [0], [1], [0, 0, 1, 1], [], []>} : vector<8x32xbf16>, vector<32x8xbf16>, vector<8x8xf32> -> vector<8x8xf32>
    %c1_288 = arith.constant 1 : index
    %c2_289 = arith.constant 2 : index
    %c0_290 = arith.constant 0 : index
    %c0_291 = arith.constant 0 : index
    %413 = vector.load %arg6[%c1_288, %c2_289, %c0_290, %c0_291] : memref<2x4x1x8xf32, #tpu.memory_space<vmem>>, vector<1x1x1x8xf32>
    %414 = vector.shape_cast %413 : vector<1x1x1x8xf32> to vector<1x8xf32>
    %415 = vector.broadcast %414 : vector<1x8xf32> to vector<8x8xf32>
    %416 = arith.addf %412, %415 : vector<8x8xf32>
    %c1_292 = arith.constant 1 : index
    %c2_293 = arith.constant 2 : index
    %c0_294 = arith.constant 0 : index
    %c0_295 = arith.constant 0 : index
    %417 = vector.load %arg7[%c1_292, %c2_293, %c0_294, %c0_295] : memref<2x4x32x8xbf16, #tpu.memory_space<vmem>>, vector<1x1x32x8xbf16>
    %418 = vector.shape_cast %417 : vector<1x1x32x8xbf16> to vector<32x8xbf16>
    %cst_296 = arith.constant dense<0.000000e+00> : vector<8x8xf32>
    %419 = tpu.matmul %308, %418, %cst_296 {dimension_numbers = #tpu.dot_dimension_numbers<[1], [0], [0], [1], [0, 0, 1, 1], [], []>} : vector<8x32xbf16>, vector<32x8xbf16>, vector<8x8xf32> -> vector<8x8xf32>
    %c1_297 = arith.constant 1 : index
    %c2_298 = arith.constant 2 : index
    %c0_299 = arith.constant 0 : index
    %c0_300 = arith.constant 0 : index
    %420 = vector.load %arg8[%c1_297, %c2_298, %c0_299, %c0_300] : memref<2x4x1x8xf32, #tpu.memory_space<vmem>>, vector<1x1x1x8xf32>
    %421 = vector.shape_cast %420 : vector<1x1x1x8xf32> to vector<1x8xf32>
    %422 = vector.broadcast %421 : vector<1x8xf32> to vector<8x8xf32>
    %423 = arith.addf %419, %422 : vector<8x8xf32>
    %c1_301 = arith.constant 1 : index
    %c2_302 = arith.constant 2 : index
    %c0_303 = arith.constant 0 : index
    %c0_304 = arith.constant 0 : index
    %424 = vector.load %arg9[%c1_301, %c2_302, %c0_303, %c0_304] : memref<2x4x32x8xbf16, #tpu.memory_space<vmem>>, vector<1x1x32x8xbf16>
    %425 = vector.shape_cast %424 : vector<1x1x32x8xbf16> to vector<32x8xbf16>
    %cst_305 = arith.constant dense<0.000000e+00> : vector<8x8xf32>
    %426 = tpu.matmul %308, %425, %cst_305 {dimension_numbers = #tpu.dot_dimension_numbers<[1], [0], [0], [1], [0, 0, 1, 1], [], []>} : vector<8x32xbf16>, vector<32x8xbf16>, vector<8x8xf32> -> vector<8x8xf32>
    %c1_306 = arith.constant 1 : index
    %c2_307 = arith.constant 2 : index
    %c0_308 = arith.constant 0 : index
    %c0_309 = arith.constant 0 : index
    %427 = vector.load %arg10[%c1_306, %c2_307, %c0_308, %c0_309] : memref<2x4x1x8xf32, #tpu.memory_space<vmem>>, vector<1x1x1x8xf32>
    %428 = vector.shape_cast %427 : vector<1x1x1x8xf32> to vector<1x8xf32>
    %429 = vector.broadcast %428 : vector<1x8xf32> to vector<8x8xf32>
    %430 = arith.addf %426, %429 : vector<8x8xf32>
    %431 = vector.shape_cast %416 : vector<8x8xf32> to vector<1x8x8xf32>
    %432 = arith.truncf %431 : vector<1x8x8xf32> to vector<1x8x8xbf16>
    %433 = vector.shape_cast %423 : vector<8x8xf32> to vector<1x8x8xf32>
    %434 = arith.truncf %433 : vector<1x8x8xf32> to vector<1x8x8xbf16>
    %435 = vector.shape_cast %430 : vector<8x8xf32> to vector<1x8x8xf32>
    %436 = arith.truncf %435 : vector<1x8x8xf32> to vector<1x8x8xbf16>
    "tpu.trace_start"() <{level = 10 : i32, message = "bqd,bkd->bqk"}> : () -> ()
    %cst_310 = arith.constant dense<0.000000e+00> : vector<1x8x8xf32>
    %437 = tpu.matmul %432, %434, %cst_310 {dimension_numbers = #tpu.dot_dimension_numbers<[2], [2], [1], [1], [0, 0, 0, 1, 1, 1], [0], [0]>} : vector<1x8x8xbf16>, vector<1x8x8xbf16>, vector<1x8x8xf32> -> vector<1x8x8xf32>
    "tpu.trace_stop"() : () -> ()
    %cst_311 = arith.constant 0.353553385 : f32
    %438 = vector.broadcast %cst_311 : f32 to vector<1x8x8xf32>
    %439 = arith.mulf %437, %438 : vector<1x8x8xf32>
    %cst_312 = arith.constant -1.000000e+09 : f32
    %440 = vector.broadcast %cst_312 : f32 to vector<1x8x8xf32>
    %441 = arith.select %6, %440, %439 : vector<1x8x8xi1>, vector<1x8x8xf32>
    %cst_313 = arith.constant dense<0xFF800000> : vector<1x8xf32>
    %442 = vector.multi_reduction <maximumf>, %441, %cst_313 [2] : vector<1x8x8xf32> to vector<1x8xf32>
    %443 = vector.shape_cast %442 : vector<1x8xf32> to vector<1x8x1xf32>
    %444 = vector.broadcast %443 : vector<1x8x1xf32> to vector<1x8x8xf32>
    %445 = arith.subf %441, %444 : vector<1x8x8xf32>
    %446 = math.exp %445 : vector<1x8x8xf32>
    %cst_314 = arith.constant dense<0.000000e+00> : vector<1x8xf32>
    %447 = vector.multi_reduction <add>, %446, %cst_314 [2] : vector<1x8x8xf32> to vector<1x8xf32>
    %448 = vector.shape_cast %447 : vector<1x8xf32> to vector<1x8x1xf32>
    %449 = tpu.reciprocal %448 {approx = true} : vector<1x8x1xf32> -> vector<1x8x1xf32>
    %450 = vector.broadcast %449 : vector<1x8x1xf32> to vector<1x8x8xf32>
    %451 = arith.mulf %446, %450 : vector<1x8x8xf32>
    %452 = arith.truncf %451 : vector<1x8x8xf32> to vector<1x8x8xbf16>
    "tpu.trace_start"() <{level = 10 : i32, message = "bqk,bkd->bqd"}> : () -> ()
    %cst_315 = arith.constant dense<0.000000e+00> : vector<1x8x8xf32>
    %453 = tpu.matmul %452, %436, %cst_315 {dimension_numbers = #tpu.dot_dimension_numbers<[2], [1], [1], [2], [0, 0, 0, 1, 1, 2], [0], [0]>} : vector<1x8x8xbf16>, vector<1x8x8xbf16>, vector<1x8x8xf32> -> vector<1x8x8xf32>
    "tpu.trace_stop"() : () -> ()
    %454 = vector.shape_cast %453 : vector<1x8x8xf32> to vector<8x8xf32>
    %455 = arith.truncf %454 : vector<8x8xf32> to vector<8x8xbf16>
    %c1_316 = arith.constant 1 : index
    %c2_317 = arith.constant 2 : index
    %c0_318 = arith.constant 0 : index
    %c0_319 = arith.constant 0 : index
    %456 = vector.load %arg11[%c1_316, %c2_317, %c0_318, %c0_319] : memref<2x4x8x32xbf16, #tpu.memory_space<vmem>>, vector<1x1x8x32xbf16>
    %457 = vector.shape_cast %456 : vector<1x1x8x32xbf16> to vector<8x32xbf16>
    %cst_320 = arith.constant dense<0.000000e+00> : vector<8x32xf32>
    %458 = tpu.matmul %455, %457, %cst_320 {dimension_numbers = #tpu.dot_dimension_numbers<[1], [0], [0], [1], [0, 0, 1, 1], [], []>} : vector<8x8xbf16>, vector<8x32xbf16>, vector<8x32xf32> -> vector<8x32xf32>
    %459 = arith.addf %409, %458 : vector<8x32xf32>
    %c1_321 = arith.constant 1 : index
    %c3_322 = arith.constant 3 : index
    %c0_323 = arith.constant 0 : index
    %c0_324 = arith.constant 0 : index
    %460 = vector.load %arg5[%c1_321, %c3_322, %c0_323, %c0_324] : memref<2x4x32x8xbf16, #tpu.memory_space<vmem>>, vector<1x1x32x8xbf16>
    %461 = vector.shape_cast %460 : vector<1x1x32x8xbf16> to vector<32x8xbf16>
    %cst_325 = arith.constant dense<0.000000e+00> : vector<8x8xf32>
    %462 = tpu.matmul %308, %461, %cst_325 {dimension_numbers = #tpu.dot_dimension_numbers<[1], [0], [0], [1], [0, 0, 1, 1], [], []>} : vector<8x32xbf16>, vector<32x8xbf16>, vector<8x8xf32> -> vector<8x8xf32>
    %c1_326 = arith.constant 1 : index
    %c3_327 = arith.constant 3 : index
    %c0_328 = arith.constant 0 : index
    %c0_329 = arith.constant 0 : index
    %463 = vector.load %arg6[%c1_326, %c3_327, %c0_328, %c0_329] : memref<2x4x1x8xf32, #tpu.memory_space<vmem>>, vector<1x1x1x8xf32>
    %464 = vector.shape_cast %463 : vector<1x1x1x8xf32> to vector<1x8xf32>
    %465 = vector.broadcast %464 : vector<1x8xf32> to vector<8x8xf32>
    %466 = arith.addf %462, %465 : vector<8x8xf32>
    %c1_330 = arith.constant 1 : index
    %c3_331 = arith.constant 3 : index
    %c0_332 = arith.constant 0 : index
    %c0_333 = arith.constant 0 : index
    %467 = vector.load %arg7[%c1_330, %c3_331, %c0_332, %c0_333] : memref<2x4x32x8xbf16, #tpu.memory_space<vmem>>, vector<1x1x32x8xbf16>
    %468 = vector.shape_cast %467 : vector<1x1x32x8xbf16> to vector<32x8xbf16>
    %cst_334 = arith.constant dense<0.000000e+00> : vector<8x8xf32>
    %469 = tpu.matmul %308, %468, %cst_334 {dimension_numbers = #tpu.dot_dimension_numbers<[1], [0], [0], [1], [0, 0, 1, 1], [], []>} : vector<8x32xbf16>, vector<32x8xbf16>, vector<8x8xf32> -> vector<8x8xf32>
    %c1_335 = arith.constant 1 : index
    %c3_336 = arith.constant 3 : index
    %c0_337 = arith.constant 0 : index
    %c0_338 = arith.constant 0 : index
    %470 = vector.load %arg8[%c1_335, %c3_336, %c0_337, %c0_338] : memref<2x4x1x8xf32, #tpu.memory_space<vmem>>, vector<1x1x1x8xf32>
    %471 = vector.shape_cast %470 : vector<1x1x1x8xf32> to vector<1x8xf32>
    %472 = vector.broadcast %471 : vector<1x8xf32> to vector<8x8xf32>
    %473 = arith.addf %469, %472 : vector<8x8xf32>
    %c1_339 = arith.constant 1 : index
    %c3_340 = arith.constant 3 : index
    %c0_341 = arith.constant 0 : index
    %c0_342 = arith.constant 0 : index
    %474 = vector.load %arg9[%c1_339, %c3_340, %c0_341, %c0_342] : memref<2x4x32x8xbf16, #tpu.memory_space<vmem>>, vector<1x1x32x8xbf16>
    %475 = vector.shape_cast %474 : vector<1x1x32x8xbf16> to vector<32x8xbf16>
    %cst_343 = arith.constant dense<0.000000e+00> : vector<8x8xf32>
    %476 = tpu.matmul %308, %475, %cst_343 {dimension_numbers = #tpu.dot_dimension_numbers<[1], [0], [0], [1], [0, 0, 1, 1], [], []>} : vector<8x32xbf16>, vector<32x8xbf16>, vector<8x8xf32> -> vector<8x8xf32>
    %c1_344 = arith.constant 1 : index
    %c3_345 = arith.constant 3 : index
    %c0_346 = arith.constant 0 : index
    %c0_347 = arith.constant 0 : index
    %477 = vector.load %arg10[%c1_344, %c3_345, %c0_346, %c0_347] : memref<2x4x1x8xf32, #tpu.memory_space<vmem>>, vector<1x1x1x8xf32>
    %478 = vector.shape_cast %477 : vector<1x1x1x8xf32> to vector<1x8xf32>
    %479 = vector.broadcast %478 : vector<1x8xf32> to vector<8x8xf32>
    %480 = arith.addf %476, %479 : vector<8x8xf32>
    %481 = vector.shape_cast %466 : vector<8x8xf32> to vector<1x8x8xf32>
    %482 = arith.truncf %481 : vector<1x8x8xf32> to vector<1x8x8xbf16>
    %483 = vector.shape_cast %473 : vector<8x8xf32> to vector<1x8x8xf32>
    %484 = arith.truncf %483 : vector<1x8x8xf32> to vector<1x8x8xbf16>
    %485 = vector.shape_cast %480 : vector<8x8xf32> to vector<1x8x8xf32>
    %486 = arith.truncf %485 : vector<1x8x8xf32> to vector<1x8x8xbf16>
    "tpu.trace_start"() <{level = 10 : i32, message = "bqd,bkd->bqk"}> : () -> ()
    %cst_348 = arith.constant dense<0.000000e+00> : vector<1x8x8xf32>
    %487 = tpu.matmul %482, %484, %cst_348 {dimension_numbers = #tpu.dot_dimension_numbers<[2], [2], [1], [1], [0, 0, 0, 1, 1, 1], [0], [0]>} : vector<1x8x8xbf16>, vector<1x8x8xbf16>, vector<1x8x8xf32> -> vector<1x8x8xf32>
    "tpu.trace_stop"() : () -> ()
    %cst_349 = arith.constant 0.353553385 : f32
    %488 = vector.broadcast %cst_349 : f32 to vector<1x8x8xf32>
    %489 = arith.mulf %487, %488 : vector<1x8x8xf32>
    %cst_350 = arith.constant -1.000000e+09 : f32
    %490 = vector.broadcast %cst_350 : f32 to vector<1x8x8xf32>
    %491 = arith.select %6, %490, %489 : vector<1x8x8xi1>, vector<1x8x8xf32>
    %cst_351 = arith.constant dense<0xFF800000> : vector<1x8xf32>
    %492 = vector.multi_reduction <maximumf>, %491, %cst_351 [2] : vector<1x8x8xf32> to vector<1x8xf32>
    %493 = vector.shape_cast %492 : vector<1x8xf32> to vector<1x8x1xf32>
    %494 = vector.broadcast %493 : vector<1x8x1xf32> to vector<1x8x8xf32>
    %495 = arith.subf %491, %494 : vector<1x8x8xf32>
    %496 = math.exp %495 : vector<1x8x8xf32>
    %cst_352 = arith.constant dense<0.000000e+00> : vector<1x8xf32>
    %497 = vector.multi_reduction <add>, %496, %cst_352 [2] : vector<1x8x8xf32> to vector<1x8xf32>
    %498 = vector.shape_cast %497 : vector<1x8xf32> to vector<1x8x1xf32>
    %499 = tpu.reciprocal %498 {approx = true} : vector<1x8x1xf32> -> vector<1x8x1xf32>
    %500 = vector.broadcast %499 : vector<1x8x1xf32> to vector<1x8x8xf32>
    %501 = arith.mulf %496, %500 : vector<1x8x8xf32>
    %502 = arith.truncf %501 : vector<1x8x8xf32> to vector<1x8x8xbf16>
    "tpu.trace_start"() <{level = 10 : i32, message = "bqk,bkd->bqd"}> : () -> ()
    %cst_353 = arith.constant dense<0.000000e+00> : vector<1x8x8xf32>
    %503 = tpu.matmul %502, %486, %cst_353 {dimension_numbers = #tpu.dot_dimension_numbers<[2], [1], [1], [2], [0, 0, 0, 1, 1, 2], [0], [0]>} : vector<1x8x8xbf16>, vector<1x8x8xbf16>, vector<1x8x8xf32> -> vector<1x8x8xf32>
    "tpu.trace_stop"() : () -> ()
    %504 = vector.shape_cast %503 : vector<1x8x8xf32> to vector<8x8xf32>
    %505 = arith.truncf %504 : vector<8x8xf32> to vector<8x8xbf16>
    %c1_354 = arith.constant 1 : index
    %c3_355 = arith.constant 3 : index
    %c0_356 = arith.constant 0 : index
    %c0_357 = arith.constant 0 : index
    %506 = vector.load %arg11[%c1_354, %c3_355, %c0_356, %c0_357] : memref<2x4x8x32xbf16, #tpu.memory_space<vmem>>, vector<1x1x8x32xbf16>
    %507 = vector.shape_cast %506 : vector<1x1x8x32xbf16> to vector<8x32xbf16>
    %cst_358 = arith.constant dense<0.000000e+00> : vector<8x32xf32>
    %508 = tpu.matmul %505, %507, %cst_358 {dimension_numbers = #tpu.dot_dimension_numbers<[1], [0], [0], [1], [0, 0, 1, 1], [], []>} : vector<8x8xbf16>, vector<8x32xbf16>, vector<8x32xf32> -> vector<8x32xf32>
    %509 = arith.addf %459, %508 : vector<8x32xf32>
    %510 = arith.addf %282, %509 : vector<8x32xf32>
    %c1_359 = arith.constant 1 : index
    %c0_360 = arith.constant 0 : index
    %c0_361 = arith.constant 0 : index
    %511 = vector.load %arg12[%c1_359, %c0_360, %c0_361] : memref<2x1x32xf32, #tpu.memory_space<vmem>>, vector<1x1x32xf32>
    %512 = vector.shape_cast %511 : vector<1x1x32xf32> to vector<1x32xf32>
    %513 = vector.broadcast %512 : vector<1x32xf32> to vector<8x32xf32>
    %514 = arith.addf %510, %513 : vector<8x32xf32>
    %c1_362 = arith.constant 1 : index
    %c0_363 = arith.constant 0 : index
    %c0_364 = arith.constant 0 : index
    %515 = vector.load %arg13[%c1_362, %c0_363, %c0_364] : memref<2x1x32xf32, #tpu.memory_space<vmem>>, vector<1x1x32xf32>
    %516 = vector.shape_cast %515 : vector<1x1x32xf32> to vector<1x32xf32>
    %c1_365 = arith.constant 1 : index
    %c0_366 = arith.constant 0 : index
    %c0_367 = arith.constant 0 : index
    %517 = vector.load %arg14[%c1_365, %c0_366, %c0_367] : memref<2x1x32xf32, #tpu.memory_space<vmem>>, vector<1x1x32xf32>
    %518 = vector.shape_cast %517 : vector<1x1x32xf32> to vector<1x32xf32>
    %cst_368 = arith.constant dense<0.000000e+00> : vector<8xf32>
    %519 = vector.multi_reduction <add>, %514, %cst_368 [1] : vector<8x32xf32> to vector<8xf32>
    %520 = vector.shape_cast %519 : vector<8xf32> to vector<8x1xf32>
    %cst_369 = arith.constant 3.200000e+01 : f32
    %521 = vector.broadcast %cst_369 : f32 to vector<8x1xf32>
    %522 = arith.divf %520, %521 : vector<8x1xf32>
    %523 = vector.broadcast %522 : vector<8x1xf32> to vector<8x32xf32>
    %524 = arith.subf %514, %523 : vector<8x32xf32>
    %525 = arith.mulf %524, %524 : vector<8x32xf32>
    %cst_370 = arith.constant dense<0.000000e+00> : vector<8xf32>
    %526 = vector.multi_reduction <add>, %525, %cst_370 [1] : vector<8x32xf32> to vector<8xf32>
    %527 = vector.shape_cast %526 : vector<8xf32> to vector<8x1xf32>
    %cst_371 = arith.constant 0.0322580636 : f32
    %528 = vector.broadcast %cst_371 : f32 to vector<8x1xf32>
    %529 = arith.mulf %527, %528 : vector<8x1xf32>
    %530 = math.sqrt %529 : vector<8x1xf32>
    %531 = vector.broadcast %516 : vector<1x32xf32> to vector<8x32xf32>
    %532 = arith.mulf %531, %524 : vector<8x32xf32>
    %cst_372 = arith.constant 9.99999997E-7 : f32
    %533 = vector.broadcast %cst_372 : f32 to vector<8x1xf32>
    %534 = arith.addf %530, %533 : vector<8x1xf32>
    %535 = tpu.reciprocal %534 {approx = true} : vector<8x1xf32> -> vector<8x1xf32>
    %536 = vector.broadcast %535 : vector<8x1xf32> to vector<8x32xf32>
    %537 = arith.mulf %532, %536 : vector<8x32xf32>
    %538 = vector.broadcast %518 : vector<1x32xf32> to vector<8x32xf32>
    %539 = arith.addf %537, %538 : vector<8x32xf32>
    %540 = arith.truncf %539 : vector<8x32xf32> to vector<8x32xbf16>
    %c1_373 = arith.constant 1 : index
    %c0_374 = arith.constant 0 : index
    %c0_375 = arith.constant 0 : index
    %541 = vector.load %arg15[%c1_373, %c0_374, %c0_375] : memref<2x32x64xbf16, #tpu.memory_space<vmem>>, vector<1x32x64xbf16>
    %542 = vector.shape_cast %541 : vector<1x32x64xbf16> to vector<32x64xbf16>
    %cst_376 = arith.constant dense<0.000000e+00> : vector<8x64xf32>
    %543 = tpu.matmul %540, %542, %cst_376 {dimension_numbers = #tpu.dot_dimension_numbers<[1], [0], [0], [1], [0, 0, 1, 1], [], []>} : vector<8x32xbf16>, vector<32x64xbf16>, vector<8x64xf32> -> vector<8x64xf32>
    %c1_377 = arith.constant 1 : index
    %c0_378 = arith.constant 0 : index
    %c0_379 = arith.constant 0 : index
    %544 = vector.load %arg16[%c1_377, %c0_378, %c0_379] : memref<2x1x64xf32, #tpu.memory_space<vmem>>, vector<1x1x64xf32>
    %545 = vector.shape_cast %544 : vector<1x1x64xf32> to vector<1x64xf32>
    %546 = vector.broadcast %545 : vector<1x64xf32> to vector<8x64xf32>
    %547 = arith.addf %543, %546 : vector<8x64xf32>
    %cst_380 = arith.constant 0.000000e+00 : f32
    %548 = vector.broadcast %cst_380 : f32 to vector<8x64xf32>
    %549 = arith.maximumf %547, %548 : vector<8x64xf32>
    %550 = arith.truncf %549 : vector<8x64xf32> to vector<8x64xbf16>
    %c1_381 = arith.constant 1 : index
    %c0_382 = arith.constant 0 : index
    %c0_383 = arith.constant 0 : index
    %551 = vector.load %arg17[%c1_381, %c0_382, %c0_383] : memref<2x64x32xbf16, #tpu.memory_space<vmem>>, vector<1x64x32xbf16>
    %552 = vector.shape_cast %551 : vector<1x64x32xbf16> to vector<64x32xbf16>
    %cst_384 = arith.constant dense<0.000000e+00> : vector<8x32xf32>
    %553 = tpu.matmul %550, %552, %cst_384 {dimension_numbers = #tpu.dot_dimension_numbers<[1], [0], [0], [1], [0, 0, 1, 1], [], []>} : vector<8x64xbf16>, vector<64x32xbf16>, vector<8x32xf32> -> vector<8x32xf32>
    %554 = arith.addf %514, %553 : vector<8x32xf32>
    %c1_385 = arith.constant 1 : index
    %c0_386 = arith.constant 0 : index
    %c0_387 = arith.constant 0 : index
    %555 = vector.load %arg18[%c1_385, %c0_386, %c0_387] : memref<2x1x32xf32, #tpu.memory_space<vmem>>, vector<1x1x32xf32>
    %556 = vector.shape_cast %555 : vector<1x1x32xf32> to vector<1x32xf32>
    %557 = vector.broadcast %556 : vector<1x32xf32> to vector<8x32xf32>
    %558 = arith.addf %554, %557 : vector<8x32xf32>
    %c0_388 = arith.constant 0 : index
    %c0_389 = arith.constant 0 : index
    %559 = vector.load %arg19[%c0_388, %c0_389] : memref<1x32xf32, #tpu.memory_space<vmem>>, vector<1x32xf32>
    %c0_390 = arith.constant 0 : index
    %c0_391 = arith.constant 0 : index
    %560 = vector.load %arg20[%c0_390, %c0_391] : memref<1x32xf32, #tpu.memory_space<vmem>>, vector<1x32xf32>
    %cst_392 = arith.constant dense<0.000000e+00> : vector<8xf32>
    %561 = vector.multi_reduction <add>, %558, %cst_392 [1] : vector<8x32xf32> to vector<8xf32>
    %562 = vector.shape_cast %561 : vector<8xf32> to vector<8x1xf32>
    %cst_393 = arith.constant 3.200000e+01 : f32
    %563 = vector.broadcast %cst_393 : f32 to vector<8x1xf32>
    %564 = arith.divf %562, %563 : vector<8x1xf32>
    %565 = vector.broadcast %564 : vector<8x1xf32> to vector<8x32xf32>
    %566 = arith.subf %558, %565 : vector<8x32xf32>
    %567 = arith.mulf %566, %566 : vector<8x32xf32>
    %cst_394 = arith.constant dense<0.000000e+00> : vector<8xf32>
    %568 = vector.multi_reduction <add>, %567, %cst_394 [1] : vector<8x32xf32> to vector<8xf32>
    %569 = vector.shape_cast %568 : vector<8xf32> to vector<8x1xf32>
    %cst_395 = arith.constant 0.0322580636 : f32
    %570 = vector.broadcast %cst_395 : f32 to vector<8x1xf32>
    %571 = arith.mulf %569, %570 : vector<8x1xf32>
    %572 = math.sqrt %571 : vector<8x1xf32>
    %573 = vector.broadcast %559 : vector<1x32xf32> to vector<8x32xf32>
    %574 = arith.mulf %573, %566 : vector<8x32xf32>
    %cst_396 = arith.constant 9.99999997E-7 : f32
    %575 = vector.broadcast %cst_396 : f32 to vector<8x1xf32>
    %576 = arith.addf %572, %575 : vector<8x1xf32>
    %577 = tpu.reciprocal %576 {approx = true} : vector<8x1xf32> -> vector<8x1xf32>
    %578 = vector.broadcast %577 : vector<8x1xf32> to vector<8x32xf32>
    %579 = arith.mulf %574, %578 : vector<8x32xf32>
    %580 = vector.broadcast %560 : vector<1x32xf32> to vector<8x32xf32>
    %581 = arith.addf %579, %580 : vector<8x32xf32>
    %cst_397 = arith.constant dense<0.000000e+00> : vector<1x1xf32>
    %582 = vector.multi_reduction <add>, %1, %cst_397 [1] : vector<1x8x1xf32> to vector<1x1xf32>
    %cst_398 = arith.constant 9.99999971E-10 : f32
    %583 = vector.broadcast %cst_398 : f32 to vector<1x1xf32>
    %584 = arith.addf %582, %583 : vector<1x1xf32>
    %585 = vector.shape_cast %581 : vector<8x32xf32> to vector<1x8x32xf32>
    %cst_399 = arith.constant dense<0.000000e+00> : vector<1x32xf32>
    %586 = vector.multi_reduction <add>, %585, %cst_399 [1] : vector<1x8x32xf32> to vector<1x32xf32>
    %587 = tpu.reciprocal %584 {approx = true} : vector<1x1xf32> -> vector<1x1xf32>
    %588 = vector.broadcast %587 : vector<1x1xf32> to vector<1x32xf32>
    %589 = arith.mulf %586, %588 : vector<1x32xf32>
    %590 = arith.truncf %589 : vector<1x32xf32> to vector<1x32xbf16>
    %c0_400 = arith.constant 0 : index
    %c0_401 = arith.constant 0 : index
    %591 = vector.load %arg21[%c0_400, %c0_401] : memref<32x128xbf16, #tpu.memory_space<vmem>>, vector<32x128xbf16>
    %cst_402 = arith.constant dense<0.000000e+00> : vector<1x128xf32>
    %592 = tpu.matmul %590, %591, %cst_402 {dimension_numbers = #tpu.dot_dimension_numbers<[1], [0], [0], [1], [0, 0, 1, 1], [], []>} : vector<1x32xbf16>, vector<32x128xbf16>, vector<1x128xf32> -> vector<1x128xf32>
    %c0_403 = arith.constant 0 : index
    %c0_404 = arith.constant 0 : index
    %593 = vector.load %arg22[%c0_403, %c0_404] : memref<1x128xf32, #tpu.memory_space<vmem>>, vector<1x128xf32>
    %594 = arith.addf %592, %593 : vector<1x128xf32>
    %595 = vector.shape_cast %594 : vector<1x128xf32> to vector<1x1x128xf32>
    %c0_405 = arith.constant 0 : index
    %c0_406 = arith.constant 0 : index
    %c0_407 = arith.constant 0 : index
    %596 = vector.load %arg23[%c0_405, %c0_406, %c0_407] : memref<1x1x128xf32, #tpu.memory_space<vmem>>, vector<1x1x128xf32>
    tpu.vector_store %arg23[%c0_405, %c0_406, %c0_407], %595 {strides = array<i32>} : memref<1x1x128xf32, #tpu.memory_space<vmem>>, vector<1x1x128xf32>,
    return
  }
  func.func @transform_0(%arg0: i32) -> (i32, i32, i32) {
    %c0_i32 = arith.constant 0 : i32
    %c0_i32_0 = arith.constant 0 : i32
    %c0_i32_1 = arith.constant 0 : i32
    return %arg0, %c0_i32, %c0_i32_0 : i32, i32, i32
  }
  func.func @transform_1(%arg0: i32) -> (i32, i32, i32) {
    %c0_i32 = arith.constant 0 : i32
    %c0_i32_0 = arith.constant 0 : i32
    %c0_i32_1 = arith.constant 0 : i32
    return %arg0, %c0_i32, %c0_i32_0 : i32, i32, i32
  }
  func.func @transform_2(%arg0: i32) -> (i32, i32, i32) {
    %c0_i32 = arith.constant 0 : i32
    %c0_i32_0 = arith.constant 0 : i32
    %c0_i32_1 = arith.constant 0 : i32
    %c0_i32_2 = arith.constant 0 : i32
    return %c0_i32, %c0_i32_0, %c0_i32_1 : i32, i32, i32
  }
  func.func @transform_3(%arg0: i32) -> (i32, i32, i32) {
    %c0_i32 = arith.constant 0 : i32
    %c0_i32_0 = arith.constant 0 : i32
    %c0_i32_1 = arith.constant 0 : i32
    %c0_i32_2 = arith.constant 0 : i32
    return %c0_i32, %c0_i32_0, %c0_i32_1 : i32, i32, i32
  }
  func.func @transform_4(%arg0: i32) -> (i32, i32, i32, i32) {
    %c0_i32 = arith.constant 0 : i32
    %c0_i32_0 = arith.constant 0 : i32
    %c0_i32_1 = arith.constant 0 : i32
    %c0_i32_2 = arith.constant 0 : i32
    %c0_i32_3 = arith.constant 0 : i32
    return %c0_i32, %c0_i32_0, %c0_i32_1, %c0_i32_2 : i32, i32, i32, i32
  }
  func.func @transform_5(%arg0: i32) -> (i32, i32, i32, i32) {
    %c0_i32 = arith.constant 0 : i32
    %c0_i32_0 = arith.constant 0 : i32
    %c0_i32_1 = arith.constant 0 : i32
    %c0_i32_2 = arith.constant 0 : i32
    %c0_i32_3 = arith.constant 0 : i32
    return %c0_i32, %c0_i32_0, %c0_i32_1, %c0_i32_2 : i32, i32, i32, i32
  }
  func.func @transform_6(%arg0: i32) -> (i32, i32, i32, i32) {
    %c0_i32 = arith.constant 0 : i32
    %c0_i32_0 = arith.constant 0 : i32
    %c0_i32_1 = arith.constant 0 : i32
    %c0_i32_2 = arith.constant 0 : i32
    %c0_i32_3 = arith.constant 0 : i32
    return %c0_i32, %c0_i32_0, %c0_i32_1, %c0_i32_2 : i32, i32, i32, i32
  }
  func.func @transform_7(%arg0: i32) -> (i32, i32, i32, i32) {
    %c0_i32 = arith.constant 0 : i32
    %c0_i32_0 = arith.constant 0 : i32
    %c0_i32_1 = arith.constant 0 : i32
    %c0_i32_2 = arith.constant 0 : i32
    %c0_i32_3 = arith.constant 0 : i32
    return %c0_i32, %c0_i32_0, %c0_i32_1, %c0_i32_2 : i32, i32, i32, i32
  }
  func.func @transform_8(%arg0: i32) -> (i32, i32, i32, i32) {
    %c0_i32 = arith.constant 0 : i32
    %c0_i32_0 = arith.constant 0 : i32
    %c0_i32_1 = arith.constant 0 : i32
    %c0_i32_2 = arith.constant 0 : i32
    %c0_i32_3 = arith.constant 0 : i32
    return %c0_i32, %c0_i32_0, %c0_i32_1, %c0_i32_2 : i32, i32, i32, i32
  }
  func.func @transform_9(%arg0: i32) -> (i32, i32, i32, i32) {
    %c0_i32 = arith.constant 0 : i32
    %c0_i32_0 = arith.constant 0 : i32
    %c0_i32_1 = arith.constant 0 : i32
    %c0_i32_2 = arith.constant 0 : i32
    %c0_i32_3 = arith.constant 0 : i32
    return %c0_i32, %c0_i32_0, %c0_i32_1, %c0_i32_2 : i32, i32, i32, i32
  }
  func.func @transform_10(%arg0: i32) -> (i32, i32, i32, i32) {
    %c0_i32 = arith.constant 0 : i32
    %c0_i32_0 = arith.constant 0 : i32
    %c0_i32_1 = arith.constant 0 : i32
    %c0_i32_2 = arith.constant 0 : i32
    %c0_i32_3 = arith.constant 0 : i32
    return %c0_i32, %c0_i32_0, %c0_i32_1, %c0_i32_2 : i32, i32, i32, i32
  }
  func.func @transform_11(%arg0: i32) -> (i32, i32, i32) {
    %c0_i32 = arith.constant 0 : i32
    %c0_i32_0 = arith.constant 0 : i32
    %c0_i32_1 = arith.constant 0 : i32
    %c0_i32_2 = arith.constant 0 : i32
    return %c0_i32, %c0_i32_0, %c0_i32_1 : i32, i32, i32
  }
  func.func @transform_12(%arg0: i32) -> (i32, i32, i32) {
    %c0_i32 = arith.constant 0 : i32
    %c0_i32_0 = arith.constant 0 : i32
    %c0_i32_1 = arith.constant 0 : i32
    %c0_i32_2 = arith.constant 0 : i32
    return %c0_i32, %c0_i32_0, %c0_i32_1 : i32, i32, i32
  }
  func.func @transform_13(%arg0: i32) -> (i32, i32, i32) {
    %c0_i32 = arith.constant 0 : i32
    %c0_i32_0 = arith.constant 0 : i32
    %c0_i32_1 = arith.constant 0 : i32
    %c0_i32_2 = arith.constant 0 : i32
    return %c0_i32, %c0_i32_0, %c0_i32_1 : i32, i32, i32
  }
  func.func @transform_14(%arg0: i32) -> (i32, i32, i32) {
    %c0_i32 = arith.constant 0 : i32
    %c0_i32_0 = arith.constant 0 : i32
    %c0_i32_1 = arith.constant 0 : i32
    %c0_i32_2 = arith.constant 0 : i32
    return %c0_i32, %c0_i32_0, %c0_i32_1 : i32, i32, i32
  }
  func.func @transform_15(%arg0: i32) -> (i32, i32, i32) {
    %c0_i32 = arith.constant 0 : i32
    %c0_i32_0 = arith.constant 0 : i32
    %c0_i32_1 = arith.constant 0 : i32
    %c0_i32_2 = arith.constant 0 : i32
    return %c0_i32, %c0_i32_0, %c0_i32_1 : i32, i32, i32
  }
  func.func @transform_16(%arg0: i32) -> (i32, i32, i32) {
    %c0_i32 = arith.constant 0 : i32
    %c0_i32_0 = arith.constant 0 : i32
    %c0_i32_1 = arith.constant 0 : i32
    %c0_i32_2 = arith.constant 0 : i32
    return %c0_i32, %c0_i32_0, %c0_i32_1 : i32, i32, i32
  }
  func.func @transform_17(%arg0: i32) -> (i32, i32, i32) {
    %c0_i32 = arith.constant 0 : i32
    %c0_i32_0 = arith.constant 0 : i32
    %c0_i32_1 = arith.constant 0 : i32
    %c0_i32_2 = arith.constant 0 : i32
    return %c0_i32, %c0_i32_0, %c0_i32_1 : i32, i32, i32
  }
  func.func @transform_18(%arg0: i32) -> (i32, i32) {
    %c0_i32 = arith.constant 0 : i32
    %c0_i32_0 = arith.constant 0 : i32
    %c0_i32_1 = arith.constant 0 : i32
    return %c0_i32, %c0_i32_0 : i32, i32
  }
  func.func @transform_19(%arg0: i32) -> (i32, i32) {
    %c0_i32 = arith.constant 0 : i32
    %c0_i32_0 = arith.constant 0 : i32
    %c0_i32_1 = arith.constant 0 : i32
    return %c0_i32, %c0_i32_0 : i32, i32
  }
  func.func @transform_20(%arg0: i32) -> (i32, i32) {
    %c0_i32 = arith.constant 0 : i32
    %c0_i32_0 = arith.constant 0 : i32
    %c0_i32_1 = arith.constant 0 : i32
    return %c0_i32, %c0_i32_0 : i32, i32
  }
  func.func @transform_21(%arg0: i32) -> (i32, i32) {
    %c0_i32 = arith.constant 0 : i32
    %c0_i32_0 = arith.constant 0 : i32
    %c0_i32_1 = arith.constant 0 : i32
    return %c0_i32, %c0_i32_0 : i32, i32
  }
  func.func @transform_22(%arg0: i32) -> (i32, i32, i32) {
    %c0_i32 = arith.constant 0 : i32
    %c0_i32_0 = arith.constant 0 : i32
    %c0_i32_1 = arith.constant 0 : i32
    return %arg0, %c0_i32, %c0_i32_0 : i32, i32, i32
  }
}

</mosaic_0001>

<llo_original>
// kernel: tpu_custom_call.1
$region0: #{tpu_custom_call.1}
  #allocation0 [shape = 'u32[]', space=smem, size = 0x4, offset = 0x4, fixed_abs, tag = 'smem constant byte address 0x4 - core index']
  #allocation1 [shape = 'u32[144,128]{1,0:T(1,128)}', space=vmem, size = 0x12000, scoped, tag = 'internal scratch']
  %s0 = inlined_call_operand.vmem [shape: f32[2,8,32], index: 0, kind: input, shape index: {}]
  %s1 = inlined_call_operand.vmem [shape: f32[2,8,1], index: 1, kind: input, shape index: {}]
  %s2 = inlined_call_operand.vmem [shape: f32[2,1,32], index: 2, kind: input, shape index: {}]
  %s3 = inlined_call_operand.vmem [shape: f32[2,1,32], index: 3, kind: input, shape index: {}]
  %s4 = inlined_call_operand.vmem [shape: bf16[2,4,32,8], index: 4, kind: input, shape index: {}]
  %s5 = inlined_call_operand.vmem [shape: f32[2,4,1,8], index: 5, kind: input, shape index: {}]
  %s6 = inlined_call_operand.vmem [shape: bf16[2,4,32,8], index: 6, kind: input, shape index: {}]
  %s7 = inlined_call_operand.vmem [shape: f32[2,4,1,8], index: 7, kind: input, shape index: {}]
  %s8 = inlined_call_operand.vmem [shape: bf16[2,4,32,8], index: 8, kind: input, shape index: {}]
  %s9 = inlined_call_operand.vmem [shape: f32[2,4,1,8], index: 9, kind: input, shape index: {}]
  %s10 = inlined_call_operand.vmem [shape: bf16[2,4,8,32], index: 10, kind: input, shape index: {}]
  %s11 = inlined_call_operand.vmem [shape: f32[2,1,32], index: 11, kind: input, shape index: {}]
  %s12 = inlined_call_operand.vmem [shape: f32[2,1,32], index: 12, kind: input, shape index: {}]
  %s13 = inlined_call_operand.vmem [shape: f32[2,1,32], index: 13, kind: input, shape index: {}]
  %s14 = inlined_call_operand.vmem [shape: bf16[2,32,64], index: 14, kind: input, shape index: {}]
  %s15 = inlined_call_operand.vmem [shape: f32[2,1,64], index: 15, kind: input, shape index: {}]
  %s16 = inlined_call_operand.vmem [shape: bf16[2,64,32], index: 16, kind: input, shape index: {}]
  %s17 = inlined_call_operand.vmem [shape: f32[2,1,32], index: 17, kind: input, shape index: {}]
  %s18 = inlined_call_operand.vmem [shape: f32[1,32], index: 18, kind: input, shape index: {}]
  %s19 = inlined_call_operand.vmem [shape: f32[1,32], index: 19, kind: input, shape index: {}]
  %s20 = inlined_call_operand.vmem [shape: bf16[32,128], index: 20, kind: input, shape index: {}]
  %s21 = inlined_call_operand.vmem [shape: f32[1,128], index: 21, kind: input, shape index: {}]
  %s22 = inlined_call_operand.hbm [shape: f32[2,1,128], index: 22, kind: output, shape index: {}]
  %s23 = sld [smem:[#allocation0]]
  $region121: #{tpu_custom_call.1} parent=0
    _
  %s25 = ssub.s32 1, %s23
  %s26 = scalar_select 0, %s25, %s23
  $region1: #{tpu_custom_call.1} parent=0
    #allocation2 [shape = 'u8[1024]{0}', space=vmem, size = 0x400, scoped, tag = 'output window, operand 0']
    #allocation3 [shape = 's32[2]{0}', space=sflag, size = 0x8, scoped, tag = 'scoped memory for tpu_custom_call.1']
    %27 = vsyncpa [#allocation3], 0
    %s28 = scalar_lea.sflag [#allocation3], 1
    %29 = vsyncpa %s28, 0
    loop: start=0, step=1, limit=4
    $region2: #{tpu_custom_call.1} parent=1 // loop_pre_header
      _
    $region3: #{tpu_custom_call.1} parent=1 // loop_header
      %s31 = sphi 0, %s35
      %p32 = scmp.ge.s32.totalorder %s31, 4
      %s41 = sphi 0, %s43
      %s44 = sphi 0, %s41
      %s45 = sphi 0, %s44
      %s61 = sphi 0, %s45
      %s67 = sphi 0, %s69
      %s70 = sphi 0, %s67
      %s71 = sphi 0, %s70
      %s87 = sphi 0, %s71
      %s91 = sphi 0, %s91
      %s93 = sphi 0, %s91
      %s94 = sphi 0, %s93
      %s108 = sphi 0, %s94
      %s112 = sphi 0, %s112
      %s114 = sphi 0, %s112
      %s115 = sphi 0, %s114
      %s129 = sphi 0, %s115
      %s133 = sphi 0, %s133
      %s135 = sphi 0, %s133
      %s136 = sphi 0, %s135
      %s150 = sphi 0, %s136
      %s154 = sphi 0, %s154
      %s156 = sphi 0, %s154
      %s157 = sphi 0, %s156
      %s171 = sphi 0, %s157
      %s175 = sphi 0, %s175
      %s177 = sphi 0, %s175
      %s178 = sphi 0, %s177
      %s192 = sphi 0, %s178
      %s196 = sphi 0, %s196
      %s198 = sphi 0, %s196
      %s199 = sphi 0, %s198
      %s213 = sphi 0, %s199
      %s217 = sphi 0, %s217
      %s219 = sphi 0, %s217
      %s220 = sphi 0, %s219
      %s234 = sphi 0, %s220
      %s238 = sphi 0, %s238
      %s240 = sphi 0, %s238
      %s241 = sphi 0, %s240
      %s255 = sphi 0, %s241
      %s259 = sphi 0, %s259
      %s261 = sphi 0, %s259
      %s262 = sphi 0, %s261
      %s276 = sphi 0, %s262
      %s280 = sphi 0, %s280
      %s282 = sphi 0, %s280
      %s283 = sphi 0, %s282
      %s297 = sphi 0, %s283
      %s301 = sphi 0, %s301
      %s303 = sphi 0, %s301
      %s304 = sphi 0, %s303
      %s318 = sphi 0, %s304
      %s322 = sphi 0, %s322
      %s324 = sphi 0, %s322
      %s325 = sphi 0, %s324
      %s339 = sphi 0, %s325
      %s343 = sphi 0, %s343
      %s345 = sphi 0, %s343
      %s346 = sphi 0, %s345
      %s360 = sphi 0, %s346
      %s364 = sphi 0, %s364
      %s366 = sphi 0, %s364
      %s367 = sphi 0, %s366
      %s381 = sphi 0, %s367
      %s385 = sphi 0, %s385
      %s387 = sphi 0, %s385
      %s388 = sphi 0, %s387
      %s402 = sphi 0, %s388
      %s406 = sphi 0, %s406
      %s408 = sphi 0, %s406
      %s409 = sphi 0, %s408
      %s423 = sphi 0, %s409
      %s427 = sphi 0, %s427
      %s429 = sphi 0, %s427
      %s430 = sphi 0, %s429
      %s444 = sphi 0, %s430
      %s448 = sphi 0, %s448
      %s450 = sphi 0, %s448
      %s451 = sphi 0, %s450
      %s465 = sphi 0, %s451
      %s469 = sphi 0, %s469
      %s471 = sphi 0, %s469
      %s472 = sphi 0, %s471
      %s486 = sphi 0, %s472
      %s490 = sphi 0, %s490
      %s492 = sphi 0, %s490
      %s493 = sphi 0, %s492
      %s507 = sphi 0, %s493
      %s513 = sphi 0, %s515
      %s516 = sphi 0, %s513
      %s517 = sphi 0, %s516
      %s533 = sphi 0, %s517
    $region4: #{tpu_custom_call.1} parent=1 // loop_header_branch
      %34 = sbr.rel (%p32) target = $region8
    $region5: #{tpu_custom_call.1} parent=1 // loop_body
      %s36 = ssub.s32 %s31, 1
      %s37 = ssub.s32 %s31, 2
      %s38 = sadd.s32 %s31, 1
      %s39 = ssub.s32 %s31, %s38
      %p40 = scmp.eq.s32.totalorder %s39, 0
      %s42 = sadd.s32 %s41, 1
      %s43 = scalar_select %p40, %s41, %s42
      %p46 = pneg %p40
      %p47 = scmp.eq.s32.totalorder %s31, 1
      %p48 = por %p46, %p47
      %p49 = scmp.ne.s32.totalorder %s41, %s44
      %p50 = scmp.eq.s32.totalorder %s31, 0
      %p51 = por %p49, %p50
      %p52 = scmp.ne.s32.totalorder %s41, %s44
      %p53 = scmp.eq.s32.totalorder %s36, 1
      %p54 = por %p52, %p53
      %p55 = scmp.ne.s32.totalorder %s44, %s45
      %p56 = scmp.eq.s32.totalorder %s36, 0
      %p57 = por %p55, %p56
      %p58 = scmp.ne.s32.totalorder %s44, %s45
      %p59 = scmp.eq.s32.totalorder %s37, 1
      %p60 = por %p58, %p59
      %p62 = scmp.ne.s32.totalorder %s45, %s61
      %p63 = scmp.eq.s32.totalorder %s37, 0
      %p64 = por %p62, %p63
      %s65 = ssub.s32 %s31, %s38
      %p66 = scmp.eq.s32.totalorder %s65, 0
      %s68 = sadd.s32 %s67, 1
      %s69 = scalar_select %p66, %s67, %s68
      %p72 = pneg %p66
      %p73 = scmp.eq.s32.totalorder %s31, 1
      %p74 = por %p72, %p73
      %p75 = scmp.ne.s32.totalorder %s67, %s70
      %p76 = scmp.eq.s32.totalorder %s31, 0
      %p77 = por %p75, %p76
      %p78 = scmp.ne.s32.totalorder %s67, %s70
      %p79 = scmp.eq.s32.totalorder %s36, 1
      %p80 = por %p78, %p79
      %p81 = scmp.ne.s32.totalorder %s70, %s71
      %p82 = scmp.eq.s32.totalorder %s36, 0
      %p83 = por %p81, %p82
      %p84 = scmp.ne.s32.totalorder %s70, %s71
      %p85 = scmp.eq.s32.totalorder %s37, 1
      %p86 = por %p84, %p85
      %p88 = scmp.ne.s32.totalorder %s71, %s87
      %p89 = scmp.eq.s32.totalorder %s37, 0
      %p90 = por %p88, %p89
      %s92 = sadd.s32 %s91, 1
      %p95 = scmp.eq.s32.totalorder %s31, 1
      %p96 = scmp.ne.s32.totalorder %s91, %s93
      %p97 = scmp.eq.s32.totalorder %s31, 0
      %p98 = por %p96, %p97
      %p99 = scmp.ne.s32.totalorder %s91, %s93
      %p100 = scmp.eq.s32.totalorder %s36, 1
      %p101 = por %p99, %p100
      %p102 = scmp.ne.s32.totalorder %s93, %s94
      %p103 = scmp.eq.s32.totalorder %s36, 0
      %p104 = por %p102, %p103
      %p105 = scmp.ne.s32.totalorder %s93, %s94
      %p106 = scmp.eq.s32.totalorder %s37, 1
      %p107 = por %p105, %p106
      %p109 = scmp.ne.s32.totalorder %s94, %s108
      %p110 = scmp.eq.s32.totalorder %s37, 0
      %p111 = por %p109, %p110
      %s113 = sadd.s32 %s112, 1
      %p116 = scmp.eq.s32.totalorder %s31, 1
      %p117 = scmp.ne.s32.totalorder %s112, %s114
      %p118 = scmp.eq.s32.totalorder %s31, 0
      %p119 = por %p117, %p118
      %p120 = scmp.ne.s32.totalorder %s112, %s114
      %p121 = scmp.eq.s32.totalorder %s36, 1
      %p122 = por %p120, %p121
      %p123 = scmp.ne.s32.totalorder %s114, %s115
      %p124 = scmp.eq.s32.totalorder %s36, 0
      %p125 = por %p123, %p124
      %p126 = scmp.ne.s32.totalorder %s114, %s115
      %p127 = scmp.eq.s32.totalorder %s37, 1
      %p128 = por %p126, %p127
      %p130 = scmp.ne.s32.totalorder %s115, %s129
      %p131 = scmp.eq.s32.totalorder %s37, 0
      %p132 = por %p130, %p131
      %s134 = sadd.s32 %s133, 1
      %p137 = scmp.eq.s32.totalorder %s31, 1
      %p138 = scmp.ne.s32.totalorder %s133, %s135
      %p139 = scmp.eq.s32.totalorder %s31, 0
      %p140 = por %p138, %p139
      %p141 = scmp.ne.s32.totalorder %s133, %s135
      %p142 = scmp.eq.s32.totalorder %s36, 1
      %p143 = por %p141, %p142
      %p144 = scmp.ne.s32.totalorder %s135, %s136
      %p145 = scmp.eq.s32.totalorder %s36, 0
      %p146 = por %p144, %p145
      %p147 = scmp.ne.s32.totalorder %s135, %s136
      %p148 = scmp.eq.s32.totalorder %s37, 1
      %p149 = por %p147, %p148
      %p151 = scmp.ne.s32.totalorder %s136, %s150
      %p152 = scmp.eq.s32.totalorder %s37, 0
      %p153 = por %p151, %p152
      %s155 = sadd.s32 %s154, 1
      %p158 = scmp.eq.s32.totalorder %s31, 1
      %p159 = scmp.ne.s32.totalorder %s154, %s156
      %p160 = scmp.eq.s32.totalorder %s31, 0
      %p161 = por %p159, %p160
      %p162 = scmp.ne.s32.totalorder %s154, %s156
      %p163 = scmp.eq.s32.totalorder %s36, 1
      %p164 = por %p162, %p163
      %p165 = scmp.ne.s32.totalorder %s156, %s157
      %p166 = scmp.eq.s32.totalorder %s36, 0
      %p167 = por %p165, %p166
      %p168 = scmp.ne.s32.totalorder %s156, %s157
      %p169 = scmp.eq.s32.totalorder %s37, 1
      %p170 = por %p168, %p169
      %p172 = scmp.ne.s32.totalorder %s157, %s171
      %p173 = scmp.eq.s32.totalorder %s37, 0
      %p174 = por %p172, %p173
      %s176 = sadd.s32 %s175, 1
      %p179 = scmp.eq.s32.totalorder %s31, 1
      %p180 = scmp.ne.s32.totalorder %s175, %s177
      %p181 = scmp.eq.s32.totalorder %s31, 0
      %p182 = por %p180, %p181
      %p183 = scmp.ne.s32.totalorder %s175, %s177
      %p184 = scmp.eq.s32.totalorder %s36, 1
      %p185 = por %p183, %p184
      %p186 = scmp.ne.s32.totalorder %s177, %s178
      %p187 = scmp.eq.s32.totalorder %s36, 0
      %p188 = por %p186, %p187
      %p189 = scmp.ne.s32.totalorder %s177, %s178
      %p190 = scmp.eq.s32.totalorder %s37, 1
      %p191 = por %p189, %p190
      %p193 = scmp.ne.s32.totalorder %s178, %s192
      %p194 = scmp.eq.s32.totalorder %s37, 0
      %p195 = por %p193, %p194
      %s197 = sadd.s32 %s196, 1
      %p200 = scmp.eq.s32.totalorder %s31, 1
      %p201 = scmp.ne.s32.totalorder %s196, %s198
      %p202 = scmp.eq.s32.totalorder %s31, 0
      %p203 = por %p201, %p202
      %p204 = scmp.ne.s32.totalorder %s196, %s198
      %p205 = scmp.eq.s32.totalorder %s36, 1
      %p206 = por %p204, %p205
      %p207 = scmp.ne.s32.totalorder %s198, %s199
      %p208 = scmp.eq.s32.totalorder %s36, 0
      %p209 = por %p207, %p208
      %p210 = scmp.ne.s32.totalorder %s198, %s199
      %p211 = scmp.eq.s32.totalorder %s37, 1
      %p212 = por %p210, %p211
      %p214 = scmp.ne.s32.totalorder %s199, %s213
      %p215 = scmp.eq.s32.totalorder %s37, 0
      %p216 = por %p214, %p215
      %s218 = sadd.s32 %s217, 1
      %p221 = scmp.eq.s32.totalorder %s31, 1
      %p222 = scmp.ne.s32.totalorder %s217, %s219
      %p223 = scmp.eq.s32.totalorder %s31, 0
      %p224 = por %p222, %p223
      %p225 = scmp.ne.s32.totalorder %s217, %s219
      %p226 = scmp.eq.s32.totalorder %s36, 1
      %p227 = por %p225, %p226
      %p228 = scmp.ne.s32.totalorder %s219, %s220
      %p229 = scmp.eq.s32.totalorder %s36, 0
      %p230 = por %p228, %p229
      %p231 = scmp.ne.s32.totalorder %s219, %s220
      %p232 = scmp.eq.s32.totalorder %s37, 1
      %p233 = por %p231, %p232
      %p235 = scmp.ne.s32.totalorder %s220, %s234
      %p236 = scmp.eq.s32.totalorder %s37, 0
      %p237 = por %p235, %p236
      %s239 = sadd.s32 %s238, 1
      %p242 = scmp.eq.s32.totalorder %s31, 1
      %p243 = scmp.ne.s32.totalorder %s238, %s240
      %p244 = scmp.eq.s32.totalorder %s31, 0
      %p245 = por %p243, %p244
      %p246 = scmp.ne.s32.totalorder %s238, %s240
      %p247 = scmp.eq.s32.totalorder %s36, 1
      %p248 = por %p246, %p247
      %p249 = scmp.ne.s32.totalorder %s240, %s241
      %p250 = scmp.eq.s32.totalorder %s36, 0
      %p251 = por %p249, %p250
      %p252 = scmp.ne.s32.totalorder %s240, %s241
      %p253 = scmp.eq.s32.totalorder %s37, 1
      %p254 = por %p252, %p253
      %p256 = scmp.ne.s32.totalorder %s241, %s255
      %p257 = scmp.eq.s32.totalorder %s37, 0
      %p258 = por %p256, %p257
      %s260 = sadd.s32 %s259, 1
      %p263 = scmp.eq.s32.totalorder %s31, 1
      %p264 = scmp.ne.s32.totalorder %s259, %s261
      %p265 = scmp.eq.s32.totalorder %s31, 0
      %p266 = por %p264, %p265
      %p267 = scmp.ne.s32.totalorder %s259, %s261
      %p268 = scmp.eq.s32.totalorder %s36, 1
      %p269 = por %p267, %p268
      %p270 = scmp.ne.s32.totalorder %s261, %s262
      %p271 = scmp.eq.s32.totalorder %s36, 0
      %p272 = por %p270, %p271
      %p273 = scmp.ne.s32.totalorder %s261, %s262
      %p274 = scmp.eq.s32.totalorder %s37, 1
      %p275 = por %p273, %p274
      %p277 = scmp.ne.s32.totalorder %s262, %s276
      %p278 = scmp.eq.s32.totalorder %s37, 0
      %p279 = por %p277, %p278
      %s281 = sadd.s32 %s280, 1
      %p284 = scmp.eq.s32.totalorder %s31, 1
      %p285 = scmp.ne.s32.totalorder %s280, %s282
      %p286 = scmp.eq.s32.totalorder %s31, 0
      %p287 = por %p285, %p286
      %p288 = scmp.ne.s32.totalorder %s280, %s282
      %p289 = scmp.eq.s32.totalorder %s36, 1
      %p290 = por %p288, %p289
      %p291 = scmp.ne.s32.totalorder %s282, %s283
      %p292 = scmp.eq.s32.totalorder %s36, 0
      %p293 = por %p291, %p292
      %p294 = scmp.ne.s32.totalorder %s282, %s283
      %p295 = scmp.eq.s32.totalorder %s37, 1
      %p296 = por %p294, %p295
      %p298 = scmp.ne.s32.totalorder %s283, %s297
      %p299 = scmp.eq.s32.totalorder %s37, 0
      %p300 = por %p298, %p299
      %s302 = sadd.s32 %s301, 1
      %p305 = scmp.eq.s32.totalorder %s31, 1
      %p306 = scmp.ne.s32.totalorder %s301, %s303
      %p307 = scmp.eq.s32.totalorder %s31, 0
      %p308 = por %p306, %p307
      %p309 = scmp.ne.s32.totalorder %s301, %s303
      %p310 = scmp.eq.s32.totalorder %s36, 1
      %p311 = por %p309, %p310
      %p312 = scmp.ne.s32.totalorder %s303, %s304
      %p313 = scmp.eq.s32.totalorder %s36, 0
      %p314 = por %p312, %p313
      %p315 = scmp.ne.s32.totalorder %s303, %s304
      %p316 = scmp.eq.s32.totalorder %s37, 1
      %p317 = por %p315, %p316
      %p319 = scmp.ne.s32.totalorder %s304, %s318
      %p320 = scmp.eq.s32.totalorder %s37, 0
      %p321 = por %p319, %p320
      %s323 = sadd.s32 %s322, 1
      %p326 = scmp.eq.s32.totalorder %s31, 1
      %p327 = scmp.ne.s32.totalorder %s322, %s324
      %p328 = scmp.eq.s32.totalorder %s31, 0
      %p329 = por %p327, %p328
      %p330 = scmp.ne.s32.totalorder %s322, %s324
      %p331 = scmp.eq.s32.totalorder %s36, 1
      %p332 = por %p330, %p331
      %p333 = scmp.ne.s32.totalorder %s324, %s325
      %p334 = scmp.eq.s32.totalorder %s36, 0
      %p335 = por %p333, %p334
      %p336 = scmp.ne.s32.totalorder %s324, %s325
      %p337 = scmp.eq.s32.totalorder %s37, 1
      %p338 = por %p336, %p337
      %p340 = scmp.ne.s32.totalorder %s325, %s339
      %p341 = scmp.eq.s32.totalorder %s37, 0
      %p342 = por %p340, %p341
      %s344 = sadd.s32 %s343, 1
      %p347 = scmp.eq.s32.totalorder %s31, 1
      %p348 = scmp.ne.s32.totalorder %s343, %s345
      %p349 = scmp.eq.s32.totalorder %s31, 0
      %p350 = por %p348, %p349
      %p351 = scmp.ne.s32.totalorder %s343, %s345
      %p352 = scmp.eq.s32.totalorder %s36, 1
      %p353 = por %p351, %p352
      %p354 = scmp.ne.s32.totalorder %s345, %s346
      %p355 = scmp.eq.s32.totalorder %s36, 0
      %p356 = por %p354, %p355
      %p357 = scmp.ne.s32.totalorder %s345, %s346
      %p358 = scmp.eq.s32.totalorder %s37, 1
      %p359 = por %p357, %p358
      %p361 = scmp.ne.s32.totalorder %s346, %s360
      %p362 = scmp.eq.s32.totalorder %s37, 0
      %p363 = por %p361, %p362
      %s365 = sadd.s32 %s364, 1
      %p368 = scmp.eq.s32.totalorder %s31, 1
      %p369 = scmp.ne.s32.totalorder %s364, %s366
      %p370 = scmp.eq.s32.totalorder %s31, 0
      %p371 = por %p369, %p370
      %p372 = scmp.ne.s32.totalorder %s364, %s366
      %p373 = scmp.eq.s32.totalorder %s36, 1
      %p374 = por %p372, %p373
      %p375 = scmp.ne.s32.totalorder %s366, %s367
      %p376 = scmp.eq.s32.totalorder %s36, 0
      %p377 = por %p375, %p376
      %p378 = scmp.ne.s32.totalorder %s366, %s367
      %p379 = scmp.eq.s32.totalorder %s37, 1
      %p380 = por %p378, %p379
      %p382 = scmp.ne.s32.totalorder %s367, %s381
      %p383 = scmp.eq.s32.totalorder %s37, 0
      %p384 = por %p382, %p383
      %s386 = sadd.s32 %s385, 1
      %p389 = scmp.eq.s32.totalorder %s31, 1
      %p390 = scmp.ne.s32.totalorder %s385, %s387
      %p391 = scmp.eq.s32.totalorder %s31, 0
      %p392 = por %p390, %p391
      %p393 = scmp.ne.s32.totalorder %s385, %s387
      %p394 = scmp.eq.s32.totalorder %s36, 1
      %p395 = por %p393, %p394
      %p396 = scmp.ne.s32.totalorder %s387, %s388
      %p397 = scmp.eq.s32.totalorder %s36, 0
      %p398 = por %p396, %p397
      %p399 = scmp.ne.s32.totalorder %s387, %s388
      %p400 = scmp.eq.s32.totalorder %s37, 1
      %p401 = por %p399, %p400
      %p403 = scmp.ne.s32.totalorder %s388, %s402
      %p404 = scmp.eq.s32.totalorder %s37, 0
      %p405 = por %p403, %p404
      %s407 = sadd.s32 %s406, 1
      %p410 = scmp.eq.s32.totalorder %s31, 1
      %p411 = scmp.ne.s32.totalorder %s406, %s408
      %p412 = scmp.eq.s32.totalorder %s31, 0
      %p413 = por %p411, %p412
      %p414 = scmp.ne.s32.totalorder %s406, %s408
      %p415 = scmp.eq.s32.totalorder %s36, 1
      %p416 = por %p414, %p415
      %p417 = scmp.ne.s32.totalorder %s408, %s409
      %p418 = scmp.eq.s32.totalorder %s36, 0
      %p419 = por %p417, %p418
      %p420 = scmp.ne.s32.totalorder %s408, %s409
      %p421 = scmp.eq.s32.totalorder %s37, 1
      %p422 = por %p420, %p421
      %p424 = scmp.ne.s32.totalorder %s409, %s423
      %p425 = scmp.eq.s32.totalorder %s37, 0
      %p426 = por %p424, %p425
      %s428 = sadd.s32 %s427, 1
      %p431 = scmp.eq.s32.totalorder %s31, 1
      %p432 = scmp.ne.s32.totalorder %s427, %s429
      %p433 = scmp.eq.s32.totalorder %s31, 0
      %p434 = por %p432, %p433
      %p435 = scmp.ne.s32.totalorder %s427, %s429
      %p436 = scmp.eq.s32.totalorder %s36, 1
      %p437 = por %p435, %p436
      %p438 = scmp.ne.s32.totalorder %s429, %s430
      %p439 = scmp.eq.s32.totalorder %s36, 0
      %p440 = por %p438, %p439
      %p441 = scmp.ne.s32.totalorder %s429, %s430
      %p442 = scmp.eq.s32.totalorder %s37, 1
      %p443 = por %p441, %p442
      %p445 = scmp.ne.s32.totalorder %s430, %s444
      %p446 = scmp.eq.s32.totalorder %s37, 0
      %p447 = por %p445, %p446
      %s449 = sadd.s32 %s448, 1
      %p452 = scmp.eq.s32.totalorder %s31, 1
      %p453 = scmp.ne.s32.totalorder %s448, %s450
      %p454 = scmp.eq.s32.totalorder %s31, 0
      %p455 = por %p453, %p454
      %p456 = scmp.ne.s32.totalorder %s448, %s450
      %p457 = scmp.eq.s32.totalorder %s36, 1
      %p458 = por %p456, %p457
      %p459 = scmp.ne.s32.totalorder %s450, %s451
      %p460 = scmp.eq.s32.totalorder %s36, 0
      %p461 = por %p459, %p460
      %p462 = scmp.ne.s32.totalorder %s450, %s451
      %p463 = scmp.eq.s32.totalorder %s37, 1
      %p464 = por %p462, %p463
      %p466 = scmp.ne.s32.totalorder %s451, %s465
      %p467 = scmp.eq.s32.totalorder %s37, 0
      %p468 = por %p466, %p467
      %s470 = sadd.s32 %s469, 1
      %p473 = scmp.eq.s32.totalorder %s31, 1
      %p474 = scmp.ne.s32.totalorder %s469, %s471
      %p475 = scmp.eq.s32.totalorder %s31, 0
      %p476 = por %p474, %p475
      %p477 = scmp.ne.s32.totalorder %s469, %s471
      %p478 = scmp.eq.s32.totalorder %s36, 1
      %p479 = por %p477, %p478
      %p480 = scmp.ne.s32.totalorder %s471, %s472
      %p481 = scmp.eq.s32.totalorder %s36, 0
      %p482 = por %p480, %p481
      %p483 = scmp.ne.s32.totalorder %s471, %s472
      %p484 = scmp.eq.s32.totalorder %s37, 1
      %p485 = por %p483, %p484
      %p487 = scmp.ne.s32.totalorder %s472, %s486
      %p488 = scmp.eq.s32.totalorder %s37, 0
      %p489 = por %p487, %p488
      %s491 = sadd.s32 %s490, 1
      %p494 = scmp.eq.s32.totalorder %s31, 1
      %p495 = scmp.ne.s32.totalorder %s490, %s492
      %p496 = scmp.eq.s32.totalorder %s31, 0
      %p497 = por %p495, %p496
      %p498 = scmp.ne.s32.totalorder %s490, %s492
      %p499 = scmp.eq.s32.totalorder %s36, 1
      %p500 = por %p498, %p499
      %p501 = scmp.ne.s32.totalorder %s492, %s493
      %p502 = scmp.eq.s32.totalorder %s36, 0
      %p503 = por %p501, %p502
      %p504 = scmp.ne.s32.totalorder %s492, %s493
      %p505 = scmp.eq.s32.totalorder %s37, 1
      %p506 = por %p504, %p505
      %p508 = scmp.ne.s32.totalorder %s493, %s507
      %p509 = scmp.eq.s32.totalorder %s37, 0
      %p510 = por %p508, %p509
      %s511 = ssub.s32 %s31, %s38
      %p512 = scmp.eq.s32.totalorder %s511, 0
      %s514 = sadd.s32 %s513, 1
      %s515 = scalar_select %p512, %s513, %s514
      %p518 = pneg %p512
      %p519 = scmp.eq.s32.totalorder %s31, 1
      %p520 = por %p518, %p519
      %p521 = scmp.ne.s32.totalorder %s513, %s516
      %p522 = scmp.eq.s32.totalorder %s31, 0
      %p523 = por %p521, %p522
      %p524 = scmp.ne.s32.totalorder %s513, %s516
      %p525 = scmp.eq.s32.totalorder %s36, 1
      %p526 = por %p524, %p525
      %p527 = scmp.ne.s32.totalorder %s516, %s517
      %p528 = scmp.eq.s32.totalorder %s36, 0
      %p529 = por %p527, %p528
      %p530 = scmp.ne.s32.totalorder %s516, %s517
      %p531 = scmp.eq.s32.totalorder %s37, 1
      %p532 = por %p530, %p531
      %p534 = scmp.ne.s32.totalorder %s517, %s533
      %p535 = scmp.eq.s32.totalorder %s37, 0
      %p536 = por %p534, %p535
      %p537 = scmp.le.s32.totalorder 1, %s31
      %p538 = scmp.lt.s32.totalorder %s31, 3
      %p539 = pnand %p537, %p538
      %p540 = pneg %p539
      // Predicated region
      $region9: #{tpu_custom_call.1} parent=5 // pred_check
        _
      $region10: #{tpu_custom_call.1} parent=5 // pred_check_branch
        %542 = sbr.rel (%p539) target = $region12
      $region11: #{tpu_custom_call.1} parent=5 // pred_region
        %s543 = ssub.s32 %s31, 1
        // Predicated region
        $region13: #{tpu_custom_call.1} parent=11 // pred_check
          %p544 = pneg %p104
        $region14: #{tpu_custom_call.1} parent=11 // pred_check_branch
          %546 = sbr.rel (%p544) target = $region16
        $region15: #{tpu_custom_call.1} parent=11 // pred_region
          _
        $region16: #{tpu_custom_call.1} parent=11 // pred_fallthru
          _
        // Predicated region
        $region17: #{tpu_custom_call.1} parent=11 // pred_check
          %p547 = pneg %p125
        $region18: #{tpu_custom_call.1} parent=11 // pred_check_branch
          %549 = sbr.rel (%p547) target = $region20
        $region19: #{tpu_custom_call.1} parent=11 // pred_region
          _
        $region20: #{tpu_custom_call.1} parent=11 // pred_fallthru
          _
        // Predicated region
        $region21: #{tpu_custom_call.1} parent=11 // pred_check
          %p550 = pneg %p146
        $region22: #{tpu_custom_call.1} parent=11 // pred_check_branch
          %552 = sbr.rel (%p550) target = $region24
        $region23: #{tpu_custom_call.1} parent=11 // pred_region
          _
        $region24: #{tpu_custom_call.1} parent=11 // pred_fallthru
          _
        // Predicated region
        $region25: #{tpu_custom_call.1} parent=11 // pred_check
          %p553 = pneg %p167
        $region26: #{tpu_custom_call.1} parent=11 // pred_check_branch
          %555 = sbr.rel (%p553) target = $region28
        $region27: #{tpu_custom_call.1} parent=11 // pred_region
          _
        $region28: #{tpu_custom_call.1} parent=11 // pred_fallthru
          _
        // Predicated region
        $region29: #{tpu_custom_call.1} parent=11 // pred_check
          %p556 = pneg %p188
        $region30: #{tpu_custom_call.1} parent=11 // pred_check_branch
          %558 = sbr.rel (%p556) target = $region32
        $region31: #{tpu_custom_call.1} parent=11 // pred_region
          _
        $region32: #{tpu_custom_call.1} parent=11 // pred_fallthru
          _
        // Predicated region
        $region33: #{tpu_custom_call.1} parent=11 // pred_check
          %p559 = pneg %p209
        $region34: #{tpu_custom_call.1} parent=11 // pred_check_branch
          %561 = sbr.rel (%p559) target = $region36
        $region35: #{tpu_custom_call.1} parent=11 // pred_region
          _
        $region36: #{tpu_custom_call.1} parent=11 // pred_fallthru
          _
        // Predicated region
        $region37: #{tpu_custom_call.1} parent=11 // pred_check
          %p562 = pneg %p230
        $region38: #{tpu_custom_call.1} parent=11 // pred_check_branch
          %564 = sbr.rel (%p562) target = $region40
        $region39: #{tpu_custom_call.1} parent=11 // pred_region
          _
        $region40: #{tpu_custom_call.1} parent=11 // pred_fallthru
          _
        // Predicated region
        $region41: #{tpu_custom_call.1} parent=11 // pred_check
          %p565 = pneg %p251
        $region42: #{tpu_custom_call.1} parent=11 // pred_check_branch
          %567 = sbr.rel (%p565) target = $region44
        $region43: #{tpu_custom_call.1} parent=11 // pred_region
          _
        $region44: #{tpu_custom_call.1} parent=11 // pred_fallthru
          _
        // Predicated region
        $region45: #{tpu_custom_call.1} parent=11 // pred_check
          %p568 = pneg %p272
        $region46: #{tpu_custom_call.1} parent=11 // pred_check_branch
          %570 = sbr.rel (%p568) target = $region48
        $region47: #{tpu_custom_call.1} parent=11 // pred_region
          _
        $region48: #{tpu_custom_call.1} parent=11 // pred_fallthru
          _
        // Predicated region
        $region49: #{tpu_custom_call.1} parent=11 // pred_check
          %p571 = pneg %p293
        $region50: #{tpu_custom_call.1} parent=11 // pred_check_branch
          %573 = sbr.rel (%p571) target = $region52
        $region51: #{tpu_custom_call.1} parent=11 // pred_region
          _
        $region52: #{tpu_custom_call.1} parent=11 // pred_fallthru
          _
        // Predicated region
        $region53: #{tpu_custom_call.1} parent=11 // pred_check
          %p574 = pneg %p314
        $region54: #{tpu_custom_call.1} parent=11 // pred_check_branch
          %576 = sbr.rel (%p574) target = $region56
        $region55: #{tpu_custom_call.1} parent=11 // pred_region
          _
        $region56: #{tpu_custom_call.1} parent=11 // pred_fallthru
          _
        // Predicated region
        $region57: #{tpu_custom_call.1} parent=11 // pred_check
          %p577 = pneg %p335
        $region58: #{tpu_custom_call.1} parent=11 // pred_check_branch
          %579 = sbr.rel (%p577) target = $region60
        $region59: #{tpu_custom_call.1} parent=11 // pred_region
          _
        $region60: #{tpu_custom_call.1} parent=11 // pred_fallthru
          _
        // Predicated region
        $region61: #{tpu_custom_call.1} parent=11 // pred_check
          %p580 = pneg %p356
        $region62: #{tpu_custom_call.1} parent=11 // pred_check_branch
          %582 = sbr.rel (%p580) target = $region64
        $region63: #{tpu_custom_call.1} parent=11 // pred_region
          _
        $region64: #{tpu_custom_call.1} parent=11 // pred_fallthru
          _
        // Predicated region
        $region65: #{tpu_custom_call.1} parent=11 // pred_check
          %p583 = pneg %p377
        $region66: #{tpu_custom_call.1} parent=11 // pred_check_branch
          %585 = sbr.rel (%p583) target = $region68
        $region67: #{tpu_custom_call.1} parent=11 // pred_region
          _
        $region68: #{tpu_custom_call.1} parent=11 // pred_fallthru
          _
        // Predicated region
        $region69: #{tpu_custom_call.1} parent=11 // pred_check
          %p586 = pneg %p398
        $region70: #{tpu_custom_call.1} parent=11 // pred_check_branch
          %588 = sbr.rel (%p586) target = $region72
        $region71: #{tpu_custom_call.1} parent=11 // pred_region
          _
        $region72: #{tpu_custom_call.1} parent=11 // pred_fallthru
          _
        // Predicated region
        $region73: #{tpu_custom_call.1} parent=11 // pred_check
          %p589 = pneg %p419
        $region74: #{tpu_custom_call.1} parent=11 // pred_check_branch
          %591 = sbr.rel (%p589) target = $region76
        $region75: #{tpu_custom_call.1} parent=11 // pred_region
          _
        $region76: #{tpu_custom_call.1} parent=11 // pred_fallthru
          _
        // Predicated region
        $region77: #{tpu_custom_call.1} parent=11 // pred_check
          %p592 = pneg %p440
        $region78: #{tpu_custom_call.1} parent=11 // pred_check_branch
          %594 = sbr.rel (%p592) target = $region80
        $region79: #{tpu_custom_call.1} parent=11 // pred_region
          _
        $region80: #{tpu_custom_call.1} parent=11 // pred_fallthru
          _
        // Predicated region
        $region81: #{tpu_custom_call.1} parent=11 // pred_check
          %p595 = pneg %p461
        $region82: #{tpu_custom_call.1} parent=11 // pred_check_branch
          %597 = sbr.rel (%p595) target = $region84
        $region83: #{tpu_custom_call.1} parent=11 // pred_region
          _
        $region84: #{tpu_custom_call.1} parent=11 // pred_fallthru
          _
        // Predicated region
        $region85: #{tpu_custom_call.1} parent=11 // pred_check
          %p598 = pneg %p482
        $region86: #{tpu_custom_call.1} parent=11 // pred_check_branch
          %600 = sbr.rel (%p598) target = $region88
        $region87: #{tpu_custom_call.1} parent=11 // pred_region
          _
        $region88: #{tpu_custom_call.1} parent=11 // pred_fallthru
          _
        // Predicated region
        $region89: #{tpu_custom_call.1} parent=11 // pred_check
          %p601 = pneg %p503
        $region90: #{tpu_custom_call.1} parent=11 // pred_check_branch
          %603 = sbr.rel (%p601) target = $region92
        $region91: #{tpu_custom_call.1} parent=11 // pred_region
          _
        $region92: #{tpu_custom_call.1} parent=11 // pred_fallthru
          _
      $region12: #{tpu_custom_call.1} parent=5 // pred_fallthru
        _
      %p604 = scmp.lt.s32.totalorder %s31, 2
      // Predicated region
      $region93: #{tpu_custom_call.1} parent=5 // pred_check
        %p605 = pneg %p604
      $region94: #{tpu_custom_call.1} parent=5 // pred_check_branch
        %607 = sbr.rel (%p605) target = $region96
      $region95: #{tpu_custom_call.1} parent=5 // pred_region
        // Predicated region
        $region97: #{tpu_custom_call.1} parent=95 // pred_check
          %p608 = pneg %p51
        $region98: #{tpu_custom_call.1} parent=95 // pred_check_branch
          %610 = sbr.rel (%p608) target = $region100
        $region99: #{tpu_custom_call.1} parent=95 // pred_region
          %p611 = scmp.lt.s32.totalorder %s31, 1
          %s612 = scalar_select %p611, %s31, 1
          %s613 = smul.addr %s612, 8
          %s614 = scalar_lea.vmem %s0, %s613
        $region100: #{tpu_custom_call.1} parent=95 // pred_fallthru
          _
        // Predicated region
        $region101: #{tpu_custom_call.1} parent=95 // pred_check
          %p615 = pneg %p77
        $region102: #{tpu_custom_call.1} parent=95 // pred_check_branch
          %617 = sbr.rel (%p615) target = $region104
        $region103: #{tpu_custom_call.1} parent=95 // pred_region
          %p618 = scmp.lt.s32.totalorder %s31, 1
          %s619 = scalar_select %p618, %s31, 1
          %s620 = smul.addr %s619, 8
          %s621 = scalar_lea.vmem %s1, %s620
        $region104: #{tpu_custom_call.1} parent=95 // pred_fallthru
          _
      $region96: #{tpu_custom_call.1} parent=5 // pred_fallthru
        _
      %p622 = scmp.le.s32.totalorder 1, %s31
      %p623 = scmp.lt.s32.totalorder %s31, 3
      %p624 = pnand %p622, %p623
      %p625 = pneg %p624
      // Predicated region
      $region105: #{tpu_custom_call.1} parent=5 // pred_check
        _
      $region106: #{tpu_custom_call.1} parent=5 // pred_check_branch
        %627 = sbr.rel (%p624) target = $region108
      $region107: #{tpu_custom_call.1} parent=5 // pred_region
        %s628 = ssub.s32 %s31, 1
        %p629 = scmp.lt.s32.totalorder %s36, 1
        %s630 = scalar_select %p629, %s36, 1
        %s631 = smul.addr %s630, 8
        %s632 = scalar_lea.vmem %s0, %s631
        %p633 = pneg %p57
        %p634 = pneg %p54
        %p635 = scmp.lt.s32.totalorder %s36, 1
        %s636 = scalar_select %p635, %s36, 1
        %s637 = smul.addr %s636, 8
        %s638 = scalar_lea.vmem %s1, %s637
        %p639 = pneg %p83
        %p640 = pneg %p80
        %p641 = pneg %p104
        %p642 = pneg %p101
        %p643 = pneg %p125
        %p644 = pneg %p122
        %p645 = pneg %p146
        %p646 = pneg %p143
        %p647 = pneg %p167
        %p648 = pneg %p164
        %p649 = pneg %p188
        %p650 = pneg %p185
        %p651 = pneg %p209
        %p652 = pneg %p206
        %p653 = pneg %p230
        %p654 = pneg %p227
        %p655 = pneg %p251
        %p656 = pneg %p248
        %p657 = pneg %p272
        %p658 = pneg %p269
        %p659 = pneg %p293
        %p660 = pneg %p290
        %p661 = pneg %p314
        %p662 = pneg %p311
        %p663 = pneg %p335
        %p664 = pneg %p332
        %p665 = pneg %p356
        %p666 = pneg %p353
        %p667 = pneg %p377
        %p668 = pneg %p374
        %p669 = pneg %p398
        %p670 = pneg %p395
        %p671 = pneg %p419
        %p672 = pneg %p416
        %p673 = pneg %p440
        %p674 = pneg %p437
        %p675 = pneg %p461
        %p676 = pneg %p458
        %p677 = pneg %p482
        %p678 = pneg %p479
        %p679 = pneg %p503
        %p680 = pneg %p500
        %p681 = pneg %p529
        %p682 = pneg %p526
        %s683 = sand.u32 %s516, 1
        %s684 = scalar_lea.sflag [#allocation3], %s683
        %s685 = sand.u32 %s516, 1
        %s686 = scalar_lea.vmem [#allocation2], %s685
        %p687 = scmp.lt.s32.totalorder %s36, 1
        %s688 = scalar_select %p687, %s36, 1
        %s689 = smul.addr %s688, 8
        %s690 = scalar_lea.vmem %s0, %s689
        %p691 = scmp.lt.s32.totalorder %s36, 1
        %s692 = scalar_select %p691, %s36, 1
        %s693 = smul.addr %s692, 8
        %s694 = scalar_lea.vmem %s1, %s693
        %v696 = vld [vmem:[%s690] sm:$0xff]
        %v697 = vld [vmem:[%s694] sm:$0xff]
        %vm698 = vcmp.eq.f32.partialorder %v697, 0.0
        %v699 = vsel %vm698, 1, 0
        %700 = vset.pattern.permute.xlu0 0
        %701 = vperm.xlu0 %700, %v699
        %v702 = vpop.permute.xlu0 %701
        %vm703 = vcmp.eq.s32.totalorder %v702, 1
        %v704 = vld [vmem:[%s2] sm:$0x1]
        %v705 = vld [vmem:[%s3] sm:$0x1]
        %vm706 = vcmask 261120
        %v707 = vsel %vm706, %v696, 0.0
        %708 = vadd.xlane.f32.xlu0 %v707
        %v709 = vpop.xlane.xlu0 %708
        %v710 = vrcp.pop 32.0
        %v711 = vmul.f32 %v709, %v710
        %v712 = vsub.f32 %v696, %v711
        %v713 = vmul.f32 %v712, %v712
        %v714 = vsel %vm706, %v713, 0.0
        %715 = vadd.xlane.f32.xlu0 %v714
        %v716 = vpop.xlane.xlu0 %715
        %v717 = vmul.f32 %v716, 0.032258064
        %v718 = vrsqrt.pop %v717
        %v719 = vmul.f32 %v717, %v718
        %vm720 = vcmp.eq.f32.partialorder %v717, inf
        %v721 = vsel %vm720, %v717, %v719
        %vm722 = vcmp.eq.f32.partialorder %v717, 0.0
        %v723 = vand.u32 %v717, 2147483648
        %v724 = vsel %vm722, %v723, %v721
        %v726 = vlaneseq
        %v727 = vshrl.u32 %v726, 7
        %v728 = vsub.s32 0, %v727
        %v729 = vrot.slane %v704, %v728
        %v731 = vmul.f32 %v729, %v712
        %v732 = vadd.f32 %v724, 1e-06
        %v733 = vrcp.pop %v732
        %v734 = vmul.f32 %v731, %v733
        %v736 = vlaneseq
        %v737 = vshrl.u32 %v736, 7
        %v738 = vsub.s32 0, %v737
        %v739 = vrot.slane %v705, %v738
        %v741 = vadd.f32 %v734, %v739
        %v742 = vpack.c.bf16 %v741, %v741
        %v743 = vld [vmem:[%s4] sm:$0xf]
        %v744 = vld [vmem:[%s4 + $0x4] sm:$0xf]
        %v745 = vld [vmem:[%s4 + $0x8] sm:$0xf]
        %v746 = vld [vmem:[%s4 + $0xc] sm:$0xf]
        %v747 = vld [vmem:[%s5] sm:$0x1]
        %v749 = vlaneseq
        %v750 = vshrl.u32 %v749, 7
        %v751 = vsub.s32 0, %v750
        %v752 = vrot.slane %v747, %v751
        %v758 = vunpack.c.l.b16 %v743
        %v759 = vunpack.c.l.b16 %v744
        %v760 = vunpack.c.l.b16 %v745
        %v761 = vunpack.c.l.b16 %v746
        %v762 = vpack.c.b16 %v759, %v758
        %v763 = vpack.c.b16 %v761, %v760
        %v767 = vsel %vm706, %v742, 0
        %769 = vmatprep.subr.bf16.mxu0 0
        %770 = vmatpush1.bf16.msra.mxu0 %v762
        %771 = vmatprep.subr.bf16.mxu0 0
        %772 = vmatpush1.bf16.msra.mxu0 %v763
        %773 = vmatprep.subr.bf16.mxu0 0
        %774 = vmatpush1.bf16.msra.mxu0 0
        %775 = vmatprep.subr.bf16.mxu0 0
        %776 = vmatpush1.bf16.msra.mxu0 0
        %777 = vmatprep.subr.bf16.mxu0 0
        %778 = vmatpush1.bf16.msra.mxu0 0
        %779 = vmatprep.subr.bf16.mxu0 0
        %780 = vmatpush1.bf16.msra.mxu0 0
        %781 = vmatprep.subr.bf16.mxu0 0
        %782 = vmatpush1.bf16.msra.mxu0 0
        %783 = vmatprep.subr.bf16.mxu0 0
        %784 = vmatpush1.bf16.msra.mxu0 0
        %785 = vmatprep.subr.bf16.mxu0 0
        %786 = vmatpush1.bf16.msra.mxu0 0
        %787 = vmatprep.subr.bf16.mxu0 0
        %788 = vmatpush1.bf16.msra.mxu0 0
        %789 = vmatprep.subr.bf16.mxu0 0
        %790 = vmatpush1.bf16.msra.mxu0 0
        %791 = vmatprep.subr.bf16.mxu0 0
        %792 = vmatpush1.bf16.msra.mxu0 0
        %793 = vmatprep.subr.bf16.mxu0 0
        %794 = vmatpush1.bf16.msra.mxu0 0
        %795 = vmatprep.subr.bf16.mxu0 0
        %796 = vmatpush1.bf16.msra.mxu0 0
        %797 = vmatprep.subr.bf16.mxu0 0
        %798 = vmatpush1.bf16.msra.mxu0 0
        %799 = vmatprep.subr.bf16.mxu0 0
        %800 = vmatpush1.bf16.msra.mxu0 0
        %801 = vmatprep.mubr.bf16.mxu0 0
        %802 = vmatmul.mubr.bf16.gmra.mrb[0].mxu0 %v767
        %v803 = vpop.f32.mrb[0].mxu0
        %v804 = vadd.f32 %v752, %v803
        %v805 = vpop.f32.mrb[0].mxu0
        %v806 = vpop.f32.mrb[0].mxu0
        %v807 = vpop.f32.mrb[0].mxu0
        %808 = vdwg.mxu0
        %v809 = vld [vmem:[%s6] sm:$0xf]
        %v810 = vld [vmem:[%s6 + $0x4] sm:$0xf]
        %v811 = vld [vmem:[%s6 + $0x8] sm:$0xf]
        %v812 = vld [vmem:[%s6 + $0xc] sm:$0xf]
        %v813 = vld [vmem:[%s7] sm:$0x1]
        %v815 = vlaneseq
        %v816 = vshrl.u32 %v815, 7
        %v817 = vsub.s32 0, %v816
        %v818 = vrot.slane %v813, %v817
        %v824 = vunpack.c.l.b16 %v809
        %v825 = vunpack.c.l.b16 %v810
        %v826 = vunpack.c.l.b16 %v811
        %v827 = vunpack.c.l.b16 %v812
        %v828 = vpack.c.b16 %v825, %v824
        %v829 = vpack.c.b16 %v827, %v826
        %832 = vmatprep.subr.bf16.mxu0 0
        %833 = vmatpush1.bf16.msra.mxu0 %v828
        %834 = vmatprep.subr.bf16.mxu0 0
        %835 = vmatpush1.bf16.msra.mxu0 %v829
        %836 = vmatprep.subr.bf16.mxu0 0
        %837 = vmatpush1.bf16.msra.mxu0 0
        %838 = vmatprep.subr.bf16.mxu0 0
        %839 = vmatpush1.bf16.msra.mxu0 0
        %840 = vmatprep.subr.bf16.mxu0 0
        %841 = vmatpush1.bf16.msra.mxu0 0
        %842 = vmatprep.subr.bf16.mxu0 0
        %843 = vmatpush1.bf16.msra.mxu0 0
        %844 = vmatprep.subr.bf16.mxu0 0
        %845 = vmatpush1.bf16.msra.mxu0 0
        %846 = vmatprep.subr.bf16.mxu0 0
        %847 = vmatpush1.bf16.msra.mxu0 0
        %848 = vmatprep.subr.bf16.mxu0 0
        %849 = vmatpush1.bf16.msra.mxu0 0
        %850 = vmatprep.subr.bf16.mxu0 0
        %851 = vmatpush1.bf16.msra.mxu0 0
        %852 = vmatprep.subr.bf16.mxu0 0
        %853 = vmatpush1.bf16.msra.mxu0 0
        %854 = vmatprep.subr.bf16.mxu0 0
        %855 = vmatpush1.bf16.msra.mxu0 0
        %856 = vmatprep.subr.bf16.mxu0 0
        %857 = vmatpush1.bf16.msra.mxu0 0
        %858 = vmatprep.subr.bf16.mxu0 0
        %859 = vmatpush1.bf16.msra.mxu0 0
        %860 = vmatprep.subr.bf16.mxu0 0
        %861 = vmatpush1.bf16.msra.mxu0 0
        %862 = vmatprep.subr.bf16.mxu0 0
        %863 = vmatpush1.bf16.msra.mxu0 0
        %864 = vmatprep.mubr.bf16.mxu0 0
        %865 = vmatmul.mubr.bf16.gmra.mrb[0].mxu0 %v767
        %v866 = vpop.f32.mrb[0].mxu0
        %v867 = vadd.f32 %v818, %v866
        %v868 = vpop.f32.mrb[0].mxu0
        %v869 = vpop.f32.mrb[0].mxu0
        %v870 = vpop.f32.mrb[0].mxu0
        %871 = vdwg.mxu0
        %v872 = vld [vmem:[%s8] sm:$0xf]
        %v873 = vld [vmem:[%s8 + $0x4] sm:$0xf]
        %v874 = vld [vmem:[%s8 + $0x8] sm:$0xf]
        %v875 = vld [vmem:[%s8 + $0xc] sm:$0xf]
        %v876 = vld [vmem:[%s9] sm:$0x1]
        %v878 = vlaneseq
        %v879 = vshrl.u32 %v878, 7
        %v880 = vsub.s32 0, %v879
        %v881 = vrot.slane %v876, %v880
        %v887 = vunpack.c.l.b16 %v872
        %v888 = vunpack.c.l.b16 %v873
        %v889 = vunpack.c.l.b16 %v874
        %v890 = vunpack.c.l.b16 %v875
        %v891 = vpack.c.b16 %v888, %v887
        %v892 = vpack.c.b16 %v890, %v889
        %895 = vmatprep.subr.bf16.mxu0 0
        %896 = vmatpush1.bf16.msra.mxu0 %v891
        %897 = vmatprep.subr.bf16.mxu0 0
        %898 = vmatpush1.bf16.msra.mxu0 %v892
        %899 = vmatprep.subr.bf16.mxu0 0
        %900 = vmatpush1.bf16.msra.mxu0 0
        %901 = vmatprep.subr.bf16.mxu0 0
        %902 = vmatpush1.bf16.msra.mxu0 0
        %903 = vmatprep.subr.bf16.mxu0 0
        %904 = vmatpush1.bf16.msra.mxu0 0
        %905 = vmatprep.subr.bf16.mxu0 0
        %906 = vmatpush1.bf16.msra.mxu0 0
        %907 = vmatprep.subr.bf16.mxu0 0
        %908 = vmatpush1.bf16.msra.mxu0 0
        %909 = vmatprep.subr.bf16.mxu0 0
        %910 = vmatpush1.bf16.msra.mxu0 0
        %911 = vmatprep.subr.bf16.mxu0 0
        %912 = vmatpush1.bf16.msra.mxu0 0
        %913 = vmatprep.subr.bf16.mxu0 0
        %914 = vmatpush1.bf16.msra.mxu0 0
        %915 = vmatprep.subr.bf16.mxu0 0
        %916 = vmatpush1.bf16.msra.mxu0 0
        %917 = vmatprep.subr.bf16.mxu0 0
        %918 = vmatpush1.bf16.msra.mxu0 0
        %919 = vmatprep.subr.bf16.mxu0 0
        %920 = vmatpush1.bf16.msra.mxu0 0
        %921 = vmatprep.subr.bf16.mxu0 0
        %922 = vmatpush1.bf16.msra.mxu0 0
        %923 = vmatprep.subr.bf16.mxu0 0
        %924 = vmatpush1.bf16.msra.mxu0 0
        %925 = vmatprep.subr.bf16.mxu0 0
        %926 = vmatpush1.bf16.msra.mxu0 0
        %927 = vmatprep.mubr.bf16.mxu0 0
        %928 = vmatmul.mubr.bf16.gmra.mrb[0].mxu0 %v767
        %v929 = vpop.f32.mrb[0].mxu0
        %v930 = vadd.f32 %v881, %v929
        %v931 = vpop.f32.mrb[0].mxu0
        %v932 = vpop.f32.mrb[0].mxu0
        %v933 = vpop.f32.mrb[0].mxu0
        %934 = vdwg.mxu0
        %v935 = vpack.c.bf16 %v804, %v804
        %v936 = vpack.c.bf16 %v867, %v867
        %v937 = vpack.c.bf16 %v930, %v930
        %vm938 = vcmask 64512
        %v940 = vsel %vm938, %v935, 0
        %v943 = vsel %vm938, %v936, 0
        %945 = vmatprep.subr.bf16.mxu0 0
        %946 = vmatpush1.bf16.xpose.msra.mxu0 %v943
        %947 = vmatprep.subr.bf16.mxu0 0
        %948 = vmatpush1.bf16.xpose.msra.mxu0 0
        %949 = vmatprep.subr.bf16.mxu0 0
        %950 = vmatpush1.bf16.xpose.msra.mxu0 0
        %951 = vmatprep.subr.bf16.mxu0 0
        %952 = vmatpush1.bf16.xpose.msra.mxu0 0
        %953 = vmatprep.subr.bf16.mxu0 0
        %954 = vmatpush1.bf16.xpose.msra.mxu0 0
        %955 = vmatprep.subr.bf16.mxu0 0
        %956 = vmatpush1.bf16.xpose.msra.mxu0 0
        %957 = vmatprep.subr.bf16.mxu0 0
        %958 = vmatpush1.bf16.xpose.msra.mxu0 0
        %959 = vmatprep.subr.bf16.mxu0 0
        %960 = vmatpush1.bf16.xpose.msra.mxu0 0
        %961 = vmatprep.subr.bf16.mxu0 0
        %962 = vmatpush1.bf16.xpose.msra.mxu0 0
        %963 = vmatprep.subr.bf16.mxu0 0
        %964 = vmatpush1.bf16.xpose.msra.mxu0 0
        %965 = vmatprep.subr.bf16.mxu0 0
        %966 = vmatpush1.bf16.xpose.msra.mxu0 0
        %967 = vmatprep.subr.bf16.mxu0 0
        %968 = vmatpush1.bf16.xpose.msra.mxu0 0
        %969 = vmatprep.subr.bf16.mxu0 0
        %970 = vmatpush1.bf16.xpose.msra.mxu0 0
        %971 = vmatprep.subr.bf16.mxu0 0
        %972 = vmatpush1.bf16.xpose.msra.mxu0 0
        %973 = vmatprep.subr.bf16.mxu0 0
        %974 = vmatpush1.bf16.xpose.msra.mxu0 0
        %975 = vmatprep.subr.bf16.mxu0 0
        %976 = vmatpush1.bf16.xpose.msra.mxu0 0
        %977 = vmatprep.mubr.bf16.mxu0 0
        %978 = vmatmul.mubr.bf16.gmra.mrb[0].mxu0 %v940
        %v979 = vpop.f32.mrb[0].mxu0
        %v980 = vadd.f32 0.0, %v979
        %v981 = vpop.f32.mrb[0].mxu0
        %v982 = vpop.f32.mrb[0].mxu0
        %v983 = vpop.f32.mrb[0].mxu0
        %984 = vdwg.mxu0
        %v985 = vmul.f32 %v980, 0.35355338
        %v986 = vsel %vm703, -1e+09, %v985
        %v987 = vsel %vm938, %v986, -inf
        %988 = vmax.xlane.f32.xlu0 %v987
        %v989 = vpop.xlane.xlu0 %988
        %v990 = vsub.f32 %v986, %v989
        %v991 = vmul.f32 %v990, 1.442695
        %v992 = vpow.pop %v991
        %v993 = vsel %vm938, %v992, 0.0
        %994 = vadd.xlane.f32.xlu0 %v993
        %v995 = vpop.xlane.xlu0 %994
        %v996 = vrcp.pop %v995
        %v997 = vmul.f32 %v992, %v996
        %v998 = vpack.c.bf16 %v997, %v997
        %v1000 = vsel %vm938, %v998, 0
        %vm1002 = vcmask 1043456
        %v1004 = vsel %vm1002, %v937, 0
        %1006 = vmatprep.subr.bf16.mxu0 0
        %1007 = vmatpush1.bf16.msra.mxu0 %v1004
        %1008 = vmatprep.subr.bf16.mxu0 0
        %1009 = vmatpush1.bf16.msra.mxu0 0
        %1010 = vmatprep.subr.bf16.mxu0 0
        %1011 = vmatpush1.bf16.msra.mxu0 0
        %1012 = vmatprep.subr.bf16.mxu0 0
        %1013 = vmatpush1.bf16.msra.mxu0 0
        %1014 = vmatprep.subr.bf16.mxu0 0
        %1015 = vmatpush1.bf16.msra.mxu0 0
        %1016 = vmatprep.subr.bf16.mxu0 0
        %1017 = vmatpush1.bf16.msra.mxu0 0
        %1018 = vmatprep.subr.bf16.mxu0 0
        %1019 = vmatpush1.bf16.msra.mxu0 0
        %1020 = vmatprep.subr.bf16.mxu0 0
        %1021 = vmatpush1.bf16.msra.mxu0 0
        %1022 = vmatprep.subr.bf16.mxu0 0
        %1023 = vmatpush1.bf16.msra.mxu0 0
        %1024 = vmatprep.subr.bf16.mxu0 0
        %1025 = vmatpush1.bf16.msra.mxu0 0
        %1026 = vmatprep.subr.bf16.mxu0 0
        %1027 = vmatpush1.bf16.msra.mxu0 0
        %1028 = vmatprep.subr.bf16.mxu0 0
        %1029 = vmatpush1.bf16.msra.mxu0 0
        %1030 = vmatprep.subr.bf16.mxu0 0
        %1031 = vmatpush1.bf16.msra.mxu0 0
        %1032 = vmatprep.subr.bf16.mxu0 0
        %1033 = vmatpush1.bf16.msra.mxu0 0
        %1034 = vmatprep.subr.bf16.mxu0 0
        %1035 = vmatpush1.bf16.msra.mxu0 0
        %1036 = vmatprep.subr.bf16.mxu0 0
        %1037 = vmatpush1.bf16.msra.mxu0 0
        %1038 = vmatprep.mubr.bf16.mxu0 0
        %1039 = vmatmul.mubr.bf16.gmra.mrb[0].mxu0 %v1000
        %v1040 = vpop.f32.mrb[0].mxu0
        %v1041 = vadd.f32 0.0, %v1040
        %v1042 = vpop.f32.mrb[0].mxu0
        %v1043 = vpop.f32.mrb[0].mxu0
        %v1044 = vpop.f32.mrb[0].mxu0
        %1045 = vdwg.mxu0
        %v1046 = vpack.c.bf16 %v1041, %v1041
        %v1047 = vld [vmem:[%s10] sm:$0xf]
        %s1048 = scalar_lea.vmem %s4, 16
        %v1049 = vld [vmem:[%s1048] sm:$0xf]
        %v1050 = vld [vmem:[%s1048 + $0x4] sm:$0xf]
        %v1051 = vld [vmem:[%s1048 + $0x8] sm:$0xf]
        %v1052 = vld [vmem:[%s1048 + $0xc] sm:$0xf]
        %s1053 = scalar_lea.vmem %s5, 1
        %v1054 = vld [vmem:[%s1053] sm:$0x1]
        %v1056 = vlaneseq
        %v1057 = vshrl.u32 %v1056, 7
        %v1058 = vsub.s32 0, %v1057
        %v1059 = vrot.slane %v1054, %v1058
        %v1065 = vunpack.c.l.b16 %v1049
        %v1066 = vunpack.c.l.b16 %v1050
        %v1067 = vunpack.c.l.b16 %v1051
        %v1068 = vunpack.c.l.b16 %v1052
        %v1069 = vpack.c.b16 %v1066, %v1065
        %v1070 = vpack.c.b16 %v1068, %v1067
        %1073 = vmatprep.subr.bf16.mxu0 0
        %1074 = vmatpush1.bf16.msra.mxu0 %v1069
        %1075 = vmatprep.subr.bf16.mxu0 0
        %1076 = vmatpush1.bf16.msra.mxu0 %v1070
        %1077 = vmatprep.subr.bf16.mxu0 0
        %1078 = vmatpush1.bf16.msra.mxu0 0
        %1079 = vmatprep.subr.bf16.mxu0 0
        %1080 = vmatpush1.bf16.msra.mxu0 0
        %1081 = vmatprep.subr.bf16.mxu0 0
        %1082 = vmatpush1.bf16.msra.mxu0 0
        %1083 = vmatprep.subr.bf16.mxu0 0
        %1084 = vmatpush1.bf16.msra.mxu0 0
        %1085 = vmatprep.subr.bf16.mxu0 0
        %1086 = vmatpush1.bf16.msra.mxu0 0
        %1087 = vmatprep.subr.bf16.mxu0 0
        %1088 = vmatpush1.bf16.msra.mxu0 0
        %1089 = vmatprep.subr.bf16.mxu0 0
        %1090 = vmatpush1.bf16.msra.mxu0 0
        %1091 = vmatprep.subr.bf16.mxu0 0
        %1092 = vmatpush1.bf16.msra.mxu0 0
        %1093 = vmatprep.subr.bf16.mxu0 0
        %1094 = vmatpush1.bf16.msra.mxu0 0
        %1095 = vmatprep.subr.bf16.mxu0 0
        %1096 = vmatpush1.bf16.msra.mxu0 0
        %1097 = vmatprep.subr.bf16.mxu0 0
        %1098 = vmatpush1.bf16.msra.mxu0 0
        %1099 = vmatprep.subr.bf16.mxu0 0
        %1100 = vmatpush1.bf16.msra.mxu0 0
        %1101 = vmatprep.subr.bf16.mxu0 0
        %1102 = vmatpush1.bf16.msra.mxu0 0
        %1103 = vmatprep.subr.bf16.mxu0 0
        %1104 = vmatpush1.bf16.msra.mxu0 0
        %1105 = vmatprep.mubr.bf16.mxu0 0
        %1106 = vmatmul.mubr.bf16.gmra.mrb[0].mxu0 %v767
        %v1107 = vpop.f32.mrb[0].mxu0
        %v1108 = vadd.f32 %v1059, %v1107
        %v1109 = vpop.f32.mrb[0].mxu0
        %v1110 = vpop.f32.mrb[0].mxu0
        %v1111 = vpop.f32.mrb[0].mxu0
        %1112 = vdwg.mxu0
        %s1113 = scalar_lea.vmem %s6, 16
        %v1114 = vld [vmem:[%s1113] sm:$0xf]
        %v1115 = vld [vmem:[%s1113 + $0x4] sm:$0xf]
        %v1116 = vld [vmem:[%s1113 + $0x8] sm:$0xf]
        %v1117 = vld [vmem:[%s1113 + $0xc] sm:$0xf]
        %s1118 = scalar_lea.vmem %s7, 1
        %v1119 = vld [vmem:[%s1118] sm:$0x1]
        %v1121 = vlaneseq
        %v1122 = vshrl.u32 %v1121, 7
        %v1123 = vsub.s32 0, %v1122
        %v1124 = vrot.slane %v1119, %v1123
        %v1130 = vunpack.c.l.b16 %v1114
        %v1131 = vunpack.c.l.b16 %v1115
        %v1132 = vunpack.c.l.b16 %v1116
        %v1133 = vunpack.c.l.b16 %v1117
        %v1134 = vpack.c.b16 %v1131, %v1130
        %v1135 = vpack.c.b16 %v1133, %v1132
        %1138 = vmatprep.subr.bf16.mxu0 0
        %1139 = vmatpush1.bf16.msra.mxu0 %v1134
        %1140 = vmatprep.subr.bf16.mxu0 0
        %1141 = vmatpush1.bf16.msra.mxu0 %v1135
        %1142 = vmatprep.subr.bf16.mxu0 0
        %1143 = vmatpush1.bf16.msra.mxu0 0
        %1144 = vmatprep.subr.bf16.mxu0 0
        %1145 = vmatpush1.bf16.msra.mxu0 0
        %1146 = vmatprep.subr.bf16.mxu0 0
        %1147 = vmatpush1.bf16.msra.mxu0 0
        %1148 = vmatprep.subr.bf16.mxu0 0
        %1149 = vmatpush1.bf16.msra.mxu0 0
        %1150 = vmatprep.subr.bf16.mxu0 0
        %1151 = vmatpush1.bf16.msra.mxu0 0
        %1152 = vmatprep.subr.bf16.mxu0 0
        %1153 = vmatpush1.bf16.msra.mxu0 0
        %1154 = vmatprep.subr.bf16.mxu0 0
        %1155 = vmatpush1.bf16.msra.mxu0 0
        %1156 = vmatprep.subr.bf16.mxu0 0
        %1157 = vmatpush1.bf16.msra.mxu0 0
        %1158 = vmatprep.subr.bf16.mxu0 0
        %1159 = vmatpush1.bf16.msra.mxu0 0
        %1160 = vmatprep.subr.bf16.mxu0 0
        %1161 = vmatpush1.bf16.msra.mxu0 0
        %1162 = vmatprep.subr.bf16.mxu0 0
        %1163 = vmatpush1.bf16.msra.mxu0 0
        %1164 = vmatprep.subr.bf16.mxu0 0
        %1165 = vmatpush1.bf16.msra.mxu0 0
        %1166 = vmatprep.subr.bf16.mxu0 0
        %1167 = vmatpush1.bf16.msra.mxu0 0
        %1168 = vmatprep.subr.bf16.mxu0 0
        %1169 = vmatpush1.bf16.msra.mxu0 0
        %1170 = vmatprep.mubr.bf16.mxu0 0
        %1171 = vmatmul.mubr.bf16.gmra.mrb[0].mxu0 %v767
        %v1172 = vpop.f32.mrb[0].mxu0
        %v1173 = vadd.f32 %v1124, %v1172
        %v1174 = vpop.f32.mrb[0].mxu0
        %v1175 = vpop.f32.mrb[0].mxu0
        %v1176 = vpop.f32.mrb[0].mxu0
        %1177 = vdwg.mxu0
        %s1178 = scalar_lea.vmem %s8, 16
        %v1179 = vld [vmem:[%s1178] sm:$0xf]
        %v1180 = vld [vmem:[%s1178 + $0x4] sm:$0xf]
        %v1181 = vld [vmem:[%s1178 + $0x8] sm:$0xf]
        %v1182 = vld [vmem:[%s1178 + $0xc] sm:$0xf]
        %s1183 = scalar_lea.vmem %s9, 1
        %v1184 = vld [vmem:[%s1183] sm:$0x1]
        %v1186 = vlaneseq
        %v1187 = vshrl.u32 %v1186, 7
        %v1188 = vsub.s32 0, %v1187
        %v1189 = vrot.slane %v1184, %v1188
        %v1195 = vunpack.c.l.b16 %v1179
        %v1196 = vunpack.c.l.b16 %v1180
        %v1197 = vunpack.c.l.b16 %v1181
        %v1198 = vunpack.c.l.b16 %v1182
        %v1199 = vpack.c.b16 %v1196, %v1195
        %v1200 = vpack.c.b16 %v1198, %v1197
        %1203 = vmatprep.subr.bf16.mxu0 0
        %1204 = vmatpush1.bf16.msra.mxu0 %v1199
        %1205 = vmatprep.subr.bf16.mxu0 0
        %1206 = vmatpush1.bf16.msra.mxu0 %v1200
        %1207 = vmatprep.subr.bf16.mxu0 0
        %1208 = vmatpush1.bf16.msra.mxu0 0
        %1209 = vmatprep.subr.bf16.mxu0 0
        %1210 = vmatpush1.bf16.msra.mxu0 0
        %1211 = vmatprep.subr.bf16.mxu0 0
        %1212 = vmatpush1.bf16.msra.mxu0 0
        %1213 = vmatprep.subr.bf16.mxu0 0
        %1214 = vmatpush1.bf16.msra.mxu0 0
        %1215 = vmatprep.subr.bf16.mxu0 0
        %1216 = vmatpush1.bf16.msra.mxu0 0
        %1217 = vmatprep.subr.bf16.mxu0 0
        %1218 = vmatpush1.bf16.msra.mxu0 0
        %1219 = vmatprep.subr.bf16.mxu0 0
        %1220 = vmatpush1.bf16.msra.mxu0 0
        %1221 = vmatprep.subr.bf16.mxu0 0
        %1222 = vmatpush1.bf16.msra.mxu0 0
        %1223 = vmatprep.subr.bf16.mxu0 0
        %1224 = vmatpush1.bf16.msra.mxu0 0
        %1225 = vmatprep.subr.bf16.mxu0 0
        %1226 = vmatpush1.bf16.msra.mxu0 0
        %1227 = vmatprep.subr.bf16.mxu0 0
        %1228 = vmatpush1.bf16.msra.mxu0 0
        %1229 = vmatprep.subr.bf16.mxu0 0
        %1230 = vmatpush1.bf16.msra.mxu0 0
        %1231 = vmatprep.subr.bf16.mxu0 0
        %1232 = vmatpush1.bf16.msra.mxu0 0
        %1233 = vmatprep.subr.bf16.mxu0 0
        %1234 = vmatpush1.bf16.msra.mxu0 0
        %1235 = vmatprep.mubr.bf16.mxu0 0
        %1236 = vmatmul.mubr.bf16.gmra.mrb[0].mxu0 %v767
        %v1237 = vpop.f32.mrb[0].mxu0
        %v1238 = vadd.f32 %v1189, %v1237
        %v1239 = vpop.f32.mrb[0].mxu0
        %v1240 = vpop.f32.mrb[0].mxu0
        %v1241 = vpop.f32.mrb[0].mxu0
        %1242 = vdwg.mxu0
        %v1243 = vpack.c.bf16 %v1108, %v1108
        %v1244 = vpack.c.bf16 %v1173, %v1173
        %v1245 = vpack.c.bf16 %v1238, %v1238
        %v1247 = vsel %vm938, %v1243, 0
        %v1250 = vsel %vm938, %v1244, 0
        %1252 = vmatprep.subr.bf16.mxu0 0
        %1253 = vmatpush1.bf16.xpose.msra.mxu0 %v1250
        %1254 = vmatprep.subr.bf16.mxu0 0
        %1255 = vmatpush1.bf16.xpose.msra.mxu0 0
        %1256 = vmatprep.subr.bf16.mxu0 0
        %1257 = vmatpush1.bf16.xpose.msra.mxu0 0
        %1258 = vmatprep.subr.bf16.mxu0 0
        %1259 = vmatpush1.bf16.xpose.msra.mxu0 0
        %1260 = vmatprep.subr.bf16.mxu0 0
        %1261 = vmatpush1.bf16.xpose.msra.mxu0 0
        %1262 = vmatprep.subr.bf16.mxu0 0
        %1263 = vmatpush1.bf16.xpose.msra.mxu0 0
        %1264 = vmatprep.subr.bf16.mxu0 0
        %1265 = vmatpush1.bf16.xpose.msra.mxu0 0
        %1266 = vmatprep.subr.bf16.mxu0 0
        %1267 = vmatpush1.bf16.xpose.msra.mxu0 0
        %1268 = vmatprep.subr.bf16.mxu0 0
        %1269 = vmatpush1.bf16.xpose.msra.mxu0 0
        %1270 = vmatprep.subr.bf16.mxu0 0
        %1271 = vmatpush1.bf16.xpose.msra.mxu0 0
        %1272 = vmatprep.subr.bf16.mxu0 0
        %1273 = vmatpush1.bf16.xpose.msra.mxu0 0
        %1274 = vmatprep.subr.bf16.mxu0 0
        %1275 = vmatpush1.bf16.xpose.msra.mxu0 0
        %1276 = vmatprep.subr.bf16.mxu0 0
        %1277 = vmatpush1.bf16.xpose.msra.mxu0 0
        %1278 = vmatprep.subr.bf16.mxu0 0
        %1279 = vmatpush1.bf16.xpose.msra.mxu0 0
        %1280 = vmatprep.subr.bf16.mxu0 0
        %1281 = vmatpush1.bf16.xpose.msra.mxu0 0
        %1282 = vmatprep.subr.bf16.mxu0 0
        %1283 = vmatpush1.bf16.xpose.msra.mxu0 0
        %1284 = vmatprep.mubr.bf16.mxu0 0
        %1285 = vmatmul.mubr.bf16.gmra.mrb[0].mxu0 %v1247
        %v1286 = vpop.f32.mrb[0].mxu0
        %v1287 = vadd.f32 0.0, %v1286
        %v1288 = vpop.f32.mrb[0].mxu0
        %v1289 = vpop.f32.mrb[0].mxu0
        %v1290 = vpop.f32.mrb[0].mxu0
        %1291 = vdwg.mxu0
        %v1292 = vmul.f32 %v1287, 0.35355338
        %v1293 = vsel %vm703, -1e+09, %v1292
        %v1294 = vsel %vm938, %v1293, -inf
        %1295 = vmax.xlane.f32.xlu0 %v1294
        %v1296 = vpop.xlane.xlu0 %1295
        %v1297 = vsub.f32 %v1293, %v1296
        %v1298 = vmul.f32 %v1297, 1.442695
        %v1299 = vpow.pop %v1298
        %v1300 = vsel %vm938, %v1299, 0.0
        %1301 = vadd.xlane.f32.xlu0 %v1300
        %v1302 = vpop.xlane.xlu0 %1301
        %v1303 = vrcp.pop %v1302
        %v1304 = vmul.f32 %v1299, %v1303
        %v1305 = vpack.c.bf16 %v1304, %v1304
        %v1307 = vsel %vm938, %v1305, 0
        %v1310 = vsel %vm1002, %v1245, 0
        %1312 = vmatprep.subr.bf16.mxu0 0
        %1313 = vmatpush1.bf16.msra.mxu0 %v1310
        %1314 = vmatprep.subr.bf16.mxu0 0
        %1315 = vmatpush1.bf16.msra.mxu0 0
        %1316 = vmatprep.subr.bf16.mxu0 0
        %1317 = vmatpush1.bf16.msra.mxu0 0
        %1318 = vmatprep.subr.bf16.mxu0 0
        %1319 = vmatpush1.bf16.msra.mxu0 0
        %1320 = vmatprep.subr.bf16.mxu0 0
        %1321 = vmatpush1.bf16.msra.mxu0 0
        %1322 = vmatprep.subr.bf16.mxu0 0
        %1323 = vmatpush1.bf16.msra.mxu0 0
        %1324 = vmatprep.subr.bf16.mxu0 0
        %1325 = vmatpush1.bf16.msra.mxu0 0
        %1326 = vmatprep.subr.bf16.mxu0 0
        %1327 = vmatpush1.bf16.msra.mxu0 0
        %1328 = vmatprep.subr.bf16.mxu0 0
        %1329 = vmatpush1.bf16.msra.mxu0 0
        %1330 = vmatprep.subr.bf16.mxu0 0
        %1331 = vmatpush1.bf16.msra.mxu0 0
        %1332 = vmatprep.subr.bf16.mxu0 0
        %1333 = vmatpush1.bf16.msra.mxu0 0
        %1334 = vmatprep.subr.bf16.mxu0 0
        %1335 = vmatpush1.bf16.msra.mxu0 0
        %1336 = vmatprep.subr.bf16.mxu0 0
        %1337 = vmatpush1.bf16.msra.mxu0 0
        %1338 = vmatprep.subr.bf16.mxu0 0
        %1339 = vmatpush1.bf16.msra.mxu0 0
        %1340 = vmatprep.subr.bf16.mxu0 0
        %1341 = vmatpush1.bf16.msra.mxu0 0
        %1342 = vmatprep.subr.bf16.mxu0 0
        %1343 = vmatpush1.bf16.msra.mxu0 0
        %1344 = vmatprep.mubr.bf16.mxu0 0
        %1345 = vmatmul.mubr.bf16.gmra.mrb[0].mxu0 %v1307
        %v1346 = vpop.f32.mrb[0].mxu0
        %v1347 = vadd.f32 0.0, %v1346
        %v1348 = vpop.f32.mrb[0].mxu0
        %v1349 = vpop.f32.mrb[0].mxu0
        %v1350 = vpop.f32.mrb[0].mxu0
        %1351 = vdwg.mxu0
        %v1352 = vpack.c.bf16 %v1347, %v1347
        %s1353 = scalar_lea.vmem %s10, 4
        %v1354 = vld [vmem:[%s1353] sm:$0xf]
        %v1356 = vsel %vm938, %v1352, 0
        %v1359 = vsel %vm1002, %v1354, 0
        %1361 = vmatprep.subr.bf16.mxu0 0
        %1362 = vmatpush1.bf16.msra.mxu0 %v1359
        %1363 = vmatprep.subr.bf16.mxu0 0
        %1364 = vmatpush1.bf16.msra.mxu0 0
        %1365 = vmatprep.subr.bf16.mxu0 0
        %1366 = vmatpush1.bf16.msra.mxu0 0
        %1367 = vmatprep.subr.bf16.mxu0 0
        %1368 = vmatpush1.bf16.msra.mxu0 0
        %1369 = vmatprep.subr.bf16.mxu0 0
        %1370 = vmatpush1.bf16.msra.mxu0 0
        %1371 = vmatprep.subr.bf16.mxu0 0
        %1372 = vmatpush1.bf16.msra.mxu0 0
        %1373 = vmatprep.subr.bf16.mxu0 0
        %1374 = vmatpush1.bf16.msra.mxu0 0
        %1375 = vmatprep.subr.bf16.mxu0 0
        %1376 = vmatpush1.bf16.msra.mxu0 0
        %1377 = vmatprep.subr.bf16.mxu0 0
        %1378 = vmatpush1.bf16.msra.mxu0 0
        %1379 = vmatprep.subr.bf16.mxu0 0
        %1380 = vmatpush1.bf16.msra.mxu0 0
        %1381 = vmatprep.subr.bf16.mxu0 0
        %1382 = vmatpush1.bf16.msra.mxu0 0
        %1383 = vmatprep.subr.bf16.mxu0 0
        %1384 = vmatpush1.bf16.msra.mxu0 0
        %1385 = vmatprep.subr.bf16.mxu0 0
        %1386 = vmatpush1.bf16.msra.mxu0 0
        %1387 = vmatprep.subr.bf16.mxu0 0
        %1388 = vmatpush1.bf16.msra.mxu0 0
        %1389 = vmatprep.subr.bf16.mxu0 0
        %1390 = vmatpush1.bf16.msra.mxu0 0
        %1391 = vmatprep.subr.bf16.mxu0 0
        %1392 = vmatpush1.bf16.msra.mxu0 0
        %1393 = vmatprep.mubr.bf16.mxu0 0
        %1394 = vmatmul.mubr.bf16.gmra.mrb[0].mxu0 %v1356
        %v1395 = vpop.f32.mrb[0].mxu0
        %v1396 = vadd.f32 0.0, %v1395
        %v1397 = vpop.f32.mrb[0].mxu0
        %v1398 = vpop.f32.mrb[0].mxu0
        %v1399 = vpop.f32.mrb[0].mxu0
        %1400 = vdwg.mxu0
        %v1402 = vsel %vm938, %v1046, 0
        %v1405 = vsel %vm1002, %v1047, 0
        %1407 = vmatprep.subr.bf16.mxu0 0
        %1408 = vmatpush1.bf16.msra.mxu0 %v1405
        %1409 = vmatprep.subr.bf16.mxu0 0
        %1410 = vmatpush1.bf16.msra.mxu0 0
        %1411 = vmatprep.subr.bf16.mxu0 0
        %1412 = vmatpush1.bf16.msra.mxu0 0
        %1413 = vmatprep.subr.bf16.mxu0 0
        %1414 = vmatpush1.bf16.msra.mxu0 0
        %1415 = vmatprep.subr.bf16.mxu0 0
        %1416 = vmatpush1.bf16.msra.mxu0 0
        %1417 = vmatprep.subr.bf16.mxu0 0
        %1418 = vmatpush1.bf16.msra.mxu0 0
        %1419 = vmatprep.subr.bf16.mxu0 0
        %1420 = vmatpush1.bf16.msra.mxu0 0
        %1421 = vmatprep.subr.bf16.mxu0 0
        %1422 = vmatpush1.bf16.msra.mxu0 0
        %1423 = vmatprep.subr.bf16.mxu0 0
        %1424 = vmatpush1.bf16.msra.mxu0 0
        %1425 = vmatprep.subr.bf16.mxu0 0
        %1426 = vmatpush1.bf16.msra.mxu0 0
        %1427 = vmatprep.subr.bf16.mxu0 0
        %1428 = vmatpush1.bf16.msra.mxu0 0
        %1429 = vmatprep.subr.bf16.mxu0 0
        %1430 = vmatpush1.bf16.msra.mxu0 0
        %1431 = vmatprep.subr.bf16.mxu0 0
        %1432 = vmatpush1.bf16.msra.mxu0 0
        %1433 = vmatprep.subr.bf16.mxu0 0
        %1434 = vmatpush1.bf16.msra.mxu0 0
        %1435 = vmatprep.subr.bf16.mxu0 0
        %1436 = vmatpush1.bf16.msra.mxu0 0
        %1437 = vmatprep.subr.bf16.mxu0 0
        %1438 = vmatpush1.bf16.msra.mxu0 0
        %1439 = vmatprep.mubr.bf16.mxu0 0
        %1440 = vmatmul.mubr.bf16.gmra.mrb[0].mxu0 %v1402
        %v1441 = vpop.f32.mrb[0].mxu0
        %v1442 = vadd.f32 %v1396, %v1441
        %v1443 = vpop.f32.mrb[0].mxu0
        %v1444 = vpop.f32.mrb[0].mxu0
        %v1445 = vpop.f32.mrb[0].mxu0
        %1446 = vdwg.mxu0
        %s1447 = scalar_lea.vmem %s4, 32
        %v1448 = vld [vmem:[%s1447] sm:$0xf]
        %v1449 = vld [vmem:[%s1447 + $0x4] sm:$0xf]
        %v1450 = vld [vmem:[%s1447 + $0x8] sm:$0xf]
        %v1451 = vld [vmem:[%s1447 + $0xc] sm:$0xf]
        %s1452 = scalar_lea.vmem %s5, 2
        %v1453 = vld [vmem:[%s1452] sm:$0x1]
        %v1455 = vlaneseq
        %v1456 = vshrl.u32 %v1455, 7
        %v1457 = vsub.s32 0, %v1456
        %v1458 = vrot.slane %v1453, %v1457
        %v1464 = vunpack.c.l.b16 %v1448
        %v1465 = vunpack.c.l.b16 %v1449
        %v1466 = vunpack.c.l.b16 %v1450
        %v1467 = vunpack.c.l.b16 %v1451
        %v1468 = vpack.c.b16 %v1465, %v1464
        %v1469 = vpack.c.b16 %v1467, %v1466
        %1472 = vmatprep.subr.bf16.mxu0 0
        %1473 = vmatpush1.bf16.msra.mxu0 %v1468
        %1474 = vmatprep.subr.bf16.mxu0 0
        %1475 = vmatpush1.bf16.msra.mxu0 %v1469
        %1476 = vmatprep.subr.bf16.mxu0 0
        %1477 = vmatpush1.bf16.msra.mxu0 0
        %1478 = vmatprep.subr.bf16.mxu0 0
        %1479 = vmatpush1.bf16.msra.mxu0 0
        %1480 = vmatprep.subr.bf16.mxu0 0
        %1481 = vmatpush1.bf16.msra.mxu0 0
        %1482 = vmatprep.subr.bf16.mxu0 0
        %1483 = vmatpush1.bf16.msra.mxu0 0
        %1484 = vmatprep.subr.bf16.mxu0 0
        %1485 = vmatpush1.bf16.msra.mxu0 0
        %1486 = vmatprep.subr.bf16.mxu0 0
        %1487 = vmatpush1.bf16.msra.mxu0 0
        %1488 = vmatprep.subr.bf16.mxu0 0
        %1489 = vmatpush1.bf16.msra.mxu0 0
        %1490 = vmatprep.subr.bf16.mxu0 0
        %1491 = vmatpush1.bf16.msra.mxu0 0
        %1492 = vmatprep.subr.bf16.mxu0 0
        %1493 = vmatpush1.bf16.msra.mxu0 0
        %1494 = vmatprep.subr.bf16.mxu0 0
        %1495 = vmatpush1.bf16.msra.mxu0 0
        %1496 = vmatprep.subr.bf16.mxu0 0
        %1497 = vmatpush1.bf16.msra.mxu0 0
        %1498 = vmatprep.subr.bf16.mxu0 0
        %1499 = vmatpush1.bf16.msra.mxu0 0
        %1500 = vmatprep.subr.bf16.mxu0 0
        %1501 = vmatpush1.bf16.msra.mxu0 0
        %1502 = vmatprep.subr.bf16.mxu0 0
        %1503 = vmatpush1.bf16.msra.mxu0 0
        %1504 = vmatprep.mubr.bf16.mxu0 0
        %1505 = vmatmul.mubr.bf16.gmra.mrb[0].mxu0 %v767
        %v1506 = vpop.f32.mrb[0].mxu0
        %v1507 = vadd.f32 %v1458, %v1506
        %v1508 = vpop.f32.mrb[0].mxu0
        %v1509 = vpop.f32.mrb[0].mxu0
        %v1510 = vpop.f32.mrb[0].mxu0
        %1511 = vdwg.mxu0
        %s1512 = scalar_lea.vmem %s6, 32
        %v1513 = vld [vmem:[%s1512] sm:$0xf]
        %v1514 = vld [vmem:[%s1512 + $0x4] sm:$0xf]
        %v1515 = vld [vmem:[%s1512 + $0x8] sm:$0xf]
        %v1516 = vld [vmem:[%s1512 + $0xc] sm:$0xf]
        %s1517 = scalar_lea.vmem %s7, 2
        %v1518 = vld [vmem:[%s1517] sm:$0x1]
        %v1520 = vlaneseq
        %v1521 = vshrl.u32 %v1520, 7
        %v1522 = vsub.s32 0, %v1521
        %v1523 = vrot.slane %v1518, %v1522
        %v1529 = vunpack.c.l.b16 %v1513
        %v1530 = vunpack.c.l.b16 %v1514
        %v1531 = vunpack.c.l.b16 %v1515
        %v1532 = vunpack.c.l.b16 %v1516
        %v1533 = vpack.c.b16 %v1530, %v1529
        %v1534 = vpack.c.b16 %v1532, %v1531
        %1537 = vmatprep.subr.bf16.mxu0 0
        %1538 = vmatpush1.bf16.msra.mxu0 %v1533
        %1539 = vmatprep.subr.bf16.mxu0 0
        %1540 = vmatpush1.bf16.msra.mxu0 %v1534
        %1541 = vmatprep.subr.bf16.mxu0 0
        %1542 = vmatpush1.bf16.msra.mxu0 0
        %1543 = vmatprep.subr.bf16.mxu0 0
        %1544 = vmatpush1.bf16.msra.mxu0 0
        %1545 = vmatprep.subr.bf16.mxu0 0
        %1546 = vmatpush1.bf16.msra.mxu0 0
        %1547 = vmatprep.subr.bf16.mxu0 0
        %1548 = vmatpush1.bf16.msra.mxu0 0
        %1549 = vmatprep.subr.bf16.mxu0 0
        %1550 = vmatpush1.bf16.msra.mxu0 0
        %1551 = vmatprep.subr.bf16.mxu0 0
        %1552 = vmatpush1.bf16.msra.mxu0 0
        %1553 = vmatprep.subr.bf16.mxu0 0
        %1554 = vmatpush1.bf16.msra.mxu0 0
        %1555 = vmatprep.subr.bf16.mxu0 0
        %1556 = vmatpush1.bf16.msra.mxu0 0
        %1557 = vmatprep.subr.bf16.mxu0 0
        %1558 = vmatpush1.bf16.msra.mxu0 0
        %1559 = vmatprep.subr.bf16.mxu0 0
        %1560 = vmatpush1.bf16.msra.mxu0 0
        %1561 = vmatprep.subr.bf16.mxu0 0
        %1562 = vmatpush1.bf16.msra.mxu0 0
        %1563 = vmatprep.subr.bf16.mxu0 0
        %1564 = vmatpush1.bf16.msra.mxu0 0
        %1565 = vmatprep.subr.bf16.mxu0 0
        %1566 = vmatpush1.bf16.msra.mxu0 0
        %1567 = vmatprep.subr.bf16.mxu0 0
        %1568 = vmatpush1.bf16.msra.mxu0 0
        %1569 = vmatprep.mubr.bf16.mxu0 0
        %1570 = vmatmul.mubr.bf16.gmra.mrb[0].mxu0 %v767
        %v1571 = vpop.f32.mrb[0].mxu0
        %v1572 = vadd.f32 %v1523, %v1571
        %v1573 = vpop.f32.mrb[0].mxu0
        %v1574 = vpop.f32.mrb[0].mxu0
        %v1575 = vpop.f32.mrb[0].mxu0
        %1576 = vdwg.mxu0
        %s1577 = scalar_lea.vmem %s8, 32
        %v1578 = vld [vmem:[%s1577] sm:$0xf]
        %v1579 = vld [vmem:[%s1577 + $0x4] sm:$0xf]
        %v1580 = vld [vmem:[%s1577 + $0x8] sm:$0xf]
        %v1581 = vld [vmem:[%s1577 + $0xc] sm:$0xf]
        %s1582 = scalar_lea.vmem %s9, 2
        %v1583 = vld [vmem:[%s1582] sm:$0x1]
        %v1585 = vlaneseq
        %v1586 = vshrl.u32 %v1585, 7
        %v1587 = vsub.s32 0, %v1586
        %v1588 = vrot.slane %v1583, %v1587
        %v1594 = vunpack.c.l.b16 %v1578
        %v1595 = vunpack.c.l.b16 %v1579
        %v1596 = vunpack.c.l.b16 %v1580
        %v1597 = vunpack.c.l.b16 %v1581
        %v1598 = vpack.c.b16 %v1595, %v1594
        %v1599 = vpack.c.b16 %v1597, %v1596
        %1602 = vmatprep.subr.bf16.mxu0 0
        %1603 = vmatpush1.bf16.msra.mxu0 %v1598
        %1604 = vmatprep.subr.bf16.mxu0 0
        %1605 = vmatpush1.bf16.msra.mxu0 %v1599
        %1606 = vmatprep.subr.bf16.mxu0 0
        %1607 = vmatpush1.bf16.msra.mxu0 0
        %1608 = vmatprep.subr.bf16.mxu0 0
        %1609 = vmatpush1.bf16.msra.mxu0 0
        %1610 = vmatprep.subr.bf16.mxu0 0
        %1611 = vmatpush1.bf16.msra.mxu0 0
        %1612 = vmatprep.subr.bf16.mxu0 0
        %1613 = vmatpush1.bf16.msra.mxu0 0
        %1614 = vmatprep.subr.bf16.mxu0 0
        %1615 = vmatpush1.bf16.msra.mxu0 0
        %1616 = vmatprep.subr.bf16.mxu0 0
        %1617 = vmatpush1.bf16.msra.mxu0 0
        %1618 = vmatprep.subr.bf16.mxu0 0
        %1619 = vmatpush1.bf16.msra.mxu0 0
        %1620 = vmatprep.subr.bf16.mxu0 0
        %1621 = vmatpush1.bf16.msra.mxu0 0
        %1622 = vmatprep.subr.bf16.mxu0 0
        %1623 = vmatpush1.bf16.msra.mxu0 0
        %1624 = vmatprep.subr.bf16.mxu0 0
        %1625 = vmatpush1.bf16.msra.mxu0 0
        %1626 = vmatprep.subr.bf16.mxu0 0
        %1627 = vmatpush1.bf16.msra.mxu0 0
        %1628 = vmatprep.subr.bf16.mxu0 0
        %1629 = vmatpush1.bf16.msra.mxu0 0
        %1630 = vmatprep.subr.bf16.mxu0 0
        %1631 = vmatpush1.bf16.msra.mxu0 0
        %1632 = vmatprep.subr.bf16.mxu0 0
        %1633 = vmatpush1.bf16.msra.mxu0 0
        %1634 = vmatprep.mubr.bf16.mxu0 0
        %1635 = vmatmul.mubr.bf16.gmra.mrb[0].mxu0 %v767
        %v1636 = vpop.f32.mrb[0].mxu0
        %v1637 = vadd.f32 %v1588, %v1636
        %v1638 = vpop.f32.mrb[0].mxu0
        %v1639 = vpop.f32.mrb[0].mxu0
        %v1640 = vpop.f32.mrb[0].mxu0
        %1641 = vdwg.mxu0
        %v1642 = vpack.c.bf16 %v1507, %v1507
        %v1643 = vpack.c.bf16 %v1572, %v1572
        %v1644 = vpack.c.bf16 %v1637, %v1637
        %v1646 = vsel %vm938, %v1642, 0
        %v1649 = vsel %vm938, %v1643, 0
        %1651 = vmatprep.subr.bf16.mxu0 0
        %1652 = vmatpush1.bf16.xpose.msra.mxu0 %v1649
        %1653 = vmatprep.subr.bf16.mxu0 0
        %1654 = vmatpush1.bf16.xpose.msra.mxu0 0
        %1655 = vmatprep.subr.bf16.mxu0 0
        %1656 = vmatpush1.bf16.xpose.msra.mxu0 0
        %1657 = vmatprep.subr.bf16.mxu0 0
        %1658 = vmatpush1.bf16.xpose.msra.mxu0 0
        %1659 = vmatprep.subr.bf16.mxu0 0
        %1660 = vmatpush1.bf16.xpose.msra.mxu0 0
        %1661 = vmatprep.subr.bf16.mxu0 0
        %1662 = vmatpush1.bf16.xpose.msra.mxu0 0
        %1663 = vmatprep.subr.bf16.mxu0 0
        %1664 = vmatpush1.bf16.xpose.msra.mxu0 0
        %1665 = vmatprep.subr.bf16.mxu0 0
        %1666 = vmatpush1.bf16.xpose.msra.mxu0 0
        %1667 = vmatprep.subr.bf16.mxu0 0
        %1668 = vmatpush1.bf16.xpose.msra.mxu0 0
        %1669 = vmatprep.subr.bf16.mxu0 0
        %1670 = vmatpush1.bf16.xpose.msra.mxu0 0
        %1671 = vmatprep.subr.bf16.mxu0 0
        %1672 = vmatpush1.bf16.xpose.msra.mxu0 0
        %1673 = vmatprep.subr.bf16.mxu0 0
        %1674 = vmatpush1.bf16.xpose.msra.mxu0 0
        %1675 = vmatprep.subr.bf16.mxu0 0
        %1676 = vmatpush1.bf16.xpose.msra.mxu0 0
        %1677 = vmatprep.subr.bf16.mxu0 0
        %1678 = vmatpush1.bf16.xpose.msra.mxu0 0
        %1679 = vmatprep.subr.bf16.mxu0 0
        %1680 = vmatpush1.bf16.xpose.msra.mxu0 0
        %1681 = vmatprep.subr.bf16.mxu0 0
        %1682 = vmatpush1.bf16.xpose.msra.mxu0 0
        %1683 = vmatprep.mubr.bf16.mxu0 0
        %1684 = vmatmul.mubr.bf16.gmra.mrb[0].mxu0 %v1646
        %v1685 = vpop.f32.mrb[0].mxu0
        %v1686 = vadd.f32 0.0, %v1685
        %v1687 = vpop.f32.mrb[0].mxu0
        %v1688 = vpop.f32.mrb[0].mxu0
        %v1689 = vpop.f32.mrb[0].mxu0
        %1690 = vdwg.mxu0
        %v1691 = vmul.f32 %v1686, 0.35355338
        %v1692 = vsel %vm703, -1e+09, %v1691
        %v1693 = vsel %vm938, %v1692, -inf
        %1694 = vmax.xlane.f32.xlu0 %v1693
        %v1695 = vpop.xlane.xlu0 %1694
        %v1696 = vsub.f32 %v1692, %v1695
        %v1697 = vmul.f32 %v1696, 1.442695
        %v1698 = vpow.pop %v1697
        %v1699 = vsel %vm938, %v1698, 0.0
        %1700 = vadd.xlane.f32.xlu0 %v1699
        %v1701 = vpop.xlane.xlu0 %1700
        %v1702 = vrcp.pop %v1701
        %v1703 = vmul.f32 %v1698, %v1702
        %v1704 = vpack.c.bf16 %v1703, %v1703
        %v1706 = vsel %vm938, %v1704, 0
        %v1709 = vsel %vm1002, %v1644, 0
        %1711 = vmatprep.subr.bf16.mxu0 0
        %1712 = vmatpush1.bf16.msra.mxu0 %v1709
        %1713 = vmatprep.subr.bf16.mxu0 0
        %1714 = vmatpush1.bf16.msra.mxu0 0
        %1715 = vmatprep.subr.bf16.mxu0 0
        %1716 = vmatpush1.bf16.msra.mxu0 0
        %1717 = vmatprep.subr.bf16.mxu0 0
        %1718 = vmatpush1.bf16.msra.mxu0 0
        %1719 = vmatprep.subr.bf16.mxu0 0
        %1720 = vmatpush1.bf16.msra.mxu0 0
        %1721 = vmatprep.subr.bf16.mxu0 0
        %1722 = vmatpush1.bf16.msra.mxu0 0
        %1723 = vmatprep.subr.bf16.mxu0 0
        %1724 = vmatpush1.bf16.msra.mxu0 0
        %1725 = vmatprep.subr.bf16.mxu0 0
        %1726 = vmatpush1.bf16.msra.mxu0 0
        %1727 = vmatprep.subr.bf16.mxu0 0
        %1728 = vmatpush1.bf16.msra.mxu0 0
        %1729 = vmatprep.subr.bf16.mxu0 0
        %1730 = vmatpush1.bf16.msra.mxu0 0
        %1731 = vmatprep.subr.bf16.mxu0 0
        %1732 = vmatpush1.bf16.msra.mxu0 0
        %1733 = vmatprep.subr.bf16.mxu0 0
        %1734 = vmatpush1.bf16.msra.mxu0 0
        %1735 = vmatprep.subr.bf16.mxu0 0
        %1736 = vmatpush1.bf16.msra.mxu0 0
        %1737 = vmatprep.subr.bf16.mxu0 0
        %1738 = vmatpush1.bf16.msra.mxu0 0
        %1739 = vmatprep.subr.bf16.mxu0 0
        %1740 = vmatpush1.bf16.msra.mxu0 0
        %1741 = vmatprep.subr.bf16.mxu0 0
        %1742 = vmatpush1.bf16.msra.mxu0 0
        %1743 = vmatprep.mubr.bf16.mxu0 0
        %1744 = vmatmul.mubr.bf16.gmra.mrb[0].mxu0 %v1706
        %v1745 = vpop.f32.mrb[0].mxu0
        %v1746 = vadd.f32 0.0, %v1745
        %v1747 = vpop.f32.mrb[0].mxu0
        %v1748 = vpop.f32.mrb[0].mxu0
        %v1749 = vpop.f32.mrb[0].mxu0
        %1750 = vdwg.mxu0
        %v1751 = vpack.c.bf16 %v1746, %v1746
        %s1752 = scalar_lea.vmem %s10, 8
        %v1753 = vld [vmem:[%s1752] sm:$0xf]
        %v1755 = vsel %vm938, %v1751, 0
        %v1758 = vsel %vm1002, %v1753, 0
        %1760 = vmatprep.subr.bf16.mxu0 0
        %1761 = vmatpush1.bf16.msra.mxu0 %v1758
        %1762 = vmatprep.subr.bf16.mxu0 0
        %1763 = vmatpush1.bf16.msra.mxu0 0
        %1764 = vmatprep.subr.bf16.mxu0 0
        %1765 = vmatpush1.bf16.msra.mxu0 0
        %1766 = vmatprep.subr.bf16.mxu0 0
        %1767 = vmatpush1.bf16.msra.mxu0 0
        %1768 = vmatprep.subr.bf16.mxu0 0
        %1769 = vmatpush1.bf16.msra.mxu0 0
        %1770 = vmatprep.subr.bf16.mxu0 0
        %1771 = vmatpush1.bf16.msra.mxu0 0
        %1772 = vmatprep.subr.bf16.mxu0 0
        %1773 = vmatpush1.bf16.msra.mxu0 0
        %1774 = vmatprep.subr.bf16.mxu0 0
        %1775 = vmatpush1.bf16.msra.mxu0 0
        %1776 = vmatprep.subr.bf16.mxu0 0
        %1777 = vmatpush1.bf16.msra.mxu0 0
        %1778 = vmatprep.subr.bf16.mxu0 0
        %1779 = vmatpush1.bf16.msra.mxu0 0
        %1780 = vmatprep.subr.bf16.mxu0 0
        %1781 = vmatpush1.bf16.msra.mxu0 0
        %1782 = vmatprep.subr.bf16.mxu0 0
        %1783 = vmatpush1.bf16.msra.mxu0 0
        %1784 = vmatprep.subr.bf16.mxu0 0
        %1785 = vmatpush1.bf16.msra.mxu0 0
        %1786 = vmatprep.subr.bf16.mxu0 0
        %1787 = vmatpush1.bf16.msra.mxu0 0
        %1788 = vmatprep.subr.bf16.mxu0 0
        %1789 = vmatpush1.bf16.msra.mxu0 0
        %1790 = vmatprep.subr.bf16.mxu0 0
        %1791 = vmatpush1.bf16.msra.mxu0 0
        %1792 = vmatprep.mubr.bf16.mxu0 0
        %1793 = vmatmul.mubr.bf16.gmra.mrb[0].mxu0 %v1755
        %v1794 = vpop.f32.mrb[0].mxu0
        %v1795 = vadd.f32 0.0, %v1794
        %v1796 = vpop.f32.mrb[0].mxu0
        %v1797 = vpop.f32.mrb[0].mxu0
        %v1798 = vpop.f32.mrb[0].mxu0
        %1799 = vdwg.mxu0
        %v1800 = vadd.f32 %v1442, %v1795
        %s1801 = scalar_lea.vmem %s4, 48
        %v1802 = vld [vmem:[%s1801] sm:$0xf]
        %v1803 = vld [vmem:[%s1801 + $0x4] sm:$0xf]
        %v1804 = vld [vmem:[%s1801 + $0x8] sm:$0xf]
        %v1805 = vld [vmem:[%s1801 + $0xc] sm:$0xf]
        %s1806 = scalar_lea.vmem %s5, 3
        %v1807 = vld [vmem:[%s1806] sm:$0x1]
        %v1809 = vlaneseq
        %v1810 = vshrl.u32 %v1809, 7
        %v1811 = vsub.s32 0, %v1810
        %v1812 = vrot.slane %v1807, %v1811
        %v1818 = vunpack.c.l.b16 %v1802
        %v1819 = vunpack.c.l.b16 %v1803
        %v1820 = vunpack.c.l.b16 %v1804
        %v1821 = vunpack.c.l.b16 %v1805
        %v1822 = vpack.c.b16 %v1819, %v1818
        %v1823 = vpack.c.b16 %v1821, %v1820
        %1826 = vmatprep.subr.bf16.mxu0 0
        %1827 = vmatpush1.bf16.msra.mxu0 %v1822
        %1828 = vmatprep.subr.bf16.mxu0 0
        %1829 = vmatpush1.bf16.msra.mxu0 %v1823
        %1830 = vmatprep.subr.bf16.mxu0 0
        %1831 = vmatpush1.bf16.msra.mxu0 0
        %1832 = vmatprep.subr.bf16.mxu0 0
        %1833 = vmatpush1.bf16.msra.mxu0 0
        %1834 = vmatprep.subr.bf16.mxu0 0
        %1835 = vmatpush1.bf16.msra.mxu0 0
        %1836 = vmatprep.subr.bf16.mxu0 0
        %1837 = vmatpush1.bf16.msra.mxu0 0
        %1838 = vmatprep.subr.bf16.mxu0 0
        %1839 = vmatpush1.bf16.msra.mxu0 0
        %1840 = vmatprep.subr.bf16.mxu0 0
        %1841 = vmatpush1.bf16.msra.mxu0 0
        %1842 = vmatprep.subr.bf16.mxu0 0
        %1843 = vmatpush1.bf16.msra.mxu0 0
        %1844 = vmatprep.subr.bf16.mxu0 0
        %1845 = vmatpush1.bf16.msra.mxu0 0
        %1846 = vmatprep.subr.bf16.mxu0 0
        %1847 = vmatpush1.bf16.msra.mxu0 0
        %1848 = vmatprep.subr.bf16.mxu0 0
        %1849 = vmatpush1.bf16.msra.mxu0 0
        %1850 = vmatprep.subr.bf16.mxu0 0
        %1851 = vmatpush1.bf16.msra.mxu0 0
        %1852 = vmatprep.subr.bf16.mxu0 0
        %1853 = vmatpush1.bf16.msra.mxu0 0
        %1854 = vmatprep.subr.bf16.mxu0 0
        %1855 = vmatpush1.bf16.msra.mxu0 0
        %1856 = vmatprep.subr.bf16.mxu0 0
        %1857 = vmatpush1.bf16.msra.mxu0 0
        %1858 = vmatprep.mubr.bf16.mxu0 0
        %1859 = vmatmul.mubr.bf16.gmra.mrb[0].mxu0 %v767
        %v1860 = vpop.f32.mrb[0].mxu0
        %v1861 = vadd.f32 %v1812, %v1860
        %v1862 = vpop.f32.mrb[0].mxu0
        %v1863 = vpop.f32.mrb[0].mxu0
        %v1864 = vpop.f32.mrb[0].mxu0
        %1865 = vdwg.mxu0
        %s1866 = scalar_lea.vmem %s6, 48
        %v1867 = vld [vmem:[%s1866] sm:$0xf]
        %v1868 = vld [vmem:[%s1866 + $0x4] sm:$0xf]
        %v1869 = vld [vmem:[%s1866 + $0x8] sm:$0xf]
        %v1870 = vld [vmem:[%s1866 + $0xc] sm:$0xf]
        %s1871 = scalar_lea.vmem %s7, 3
        %v1872 = vld [vmem:[%s1871] sm:$0x1]
        %v1874 = vlaneseq
        %v1875 = vshrl.u32 %v1874, 7
        %v1876 = vsub.s32 0, %v1875
        %v1877 = vrot.slane %v1872, %v1876
        %v1883 = vunpack.c.l.b16 %v1867
        %v1884 = vunpack.c.l.b16 %v1868
        %v1885 = vunpack.c.l.b16 %v1869
        %v1886 = vunpack.c.l.b16 %v1870
        %v1887 = vpack.c.b16 %v1884, %v1883
        %v1888 = vpack.c.b16 %v1886, %v1885
        %1891 = vmatprep.subr.bf16.mxu0 0
        %1892 = vmatpush1.bf16.msra.mxu0 %v1887
        %1893 = vmatprep.subr.bf16.mxu0 0
        %1894 = vmatpush1.bf16.msra.mxu0 %v1888
        %1895 = vmatprep.subr.bf16.mxu0 0
        %1896 = vmatpush1.bf16.msra.mxu0 0
        %1897 = vmatprep.subr.bf16.mxu0 0
        %1898 = vmatpush1.bf16.msra.mxu0 0
        %1899 = vmatprep.subr.bf16.mxu0 0
        %1900 = vmatpush1.bf16.msra.mxu0 0
        %1901 = vmatprep.subr.bf16.mxu0 0
        %1902 = vmatpush1.bf16.msra.mxu0 0
        %1903 = vmatprep.subr.bf16.mxu0 0
        %1904 = vmatpush1.bf16.msra.mxu0 0
        %1905 = vmatprep.subr.bf16.mxu0 0
        %1906 = vmatpush1.bf16.msra.mxu0 0
        %1907 = vmatprep.subr.bf16.mxu0 0
        %1908 = vmatpush1.bf16.msra.mxu0 0
        %1909 = vmatprep.subr.bf16.mxu0 0
        %1910 = vmatpush1.bf16.msra.mxu0 0
        %1911 = vmatprep.subr.bf16.mxu0 0
        %1912 = vmatpush1.bf16.msra.mxu0 0
        %1913 = vmatprep.subr.bf16.mxu0 0
        %1914 = vmatpush1.bf16.msra.mxu0 0
        %1915 = vmatprep.subr.bf16.mxu0 0
        %1916 = vmatpush1.bf16.msra.mxu0 0
        %1917 = vmatprep.subr.bf16.mxu0 0
        %1918 = vmatpush1.bf16.msra.mxu0 0
        %1919 = vmatprep.subr.bf16.mxu0 0
        %1920 = vmatpush1.bf16.msra.mxu0 0
        %1921 = vmatprep.subr.bf16.mxu0 0
        %1922 = vmatpush1.bf16.msra.mxu0 0
        %1923 = vmatprep.mubr.bf16.mxu0 0
        %1924 = vmatmul.mubr.bf16.gmra.mrb[0].mxu0 %v767
        %v1925 = vpop.f32.mrb[0].mxu0
        %v1926 = vadd.f32 %v1877, %v1925
        %v1927 = vpop.f32.mrb[0].mxu0
        %v1928 = vpop.f32.mrb[0].mxu0
        %v1929 = vpop.f32.mrb[0].mxu0
        %1930 = vdwg.mxu0
        %s1931 = scalar_lea.vmem %s8, 48
        %v1932 = vld [vmem:[%s1931] sm:$0xf]
        %v1933 = vld [vmem:[%s1931 + $0x4] sm:$0xf]
        %v1934 = vld [vmem:[%s1931 + $0x8] sm:$0xf]
        %v1935 = vld [vmem:[%s1931 + $0xc] sm:$0xf]
        %s1936 = scalar_lea.vmem %s9, 3
        %v1937 = vld [vmem:[%s1936] sm:$0x1]
        %v1939 = vlaneseq
        %v1940 = vshrl.u32 %v1939, 7
        %v1941 = vsub.s32 0, %v1940
        %v1942 = vrot.slane %v1937, %v1941
        %v1948 = vunpack.c.l.b16 %v1932
        %v1949 = vunpack.c.l.b16 %v1933
        %v1950 = vunpack.c.l.b16 %v1934
        %v1951 = vunpack.c.l.b16 %v1935
        %v1952 = vpack.c.b16 %v1949, %v1948
        %v1953 = vpack.c.b16 %v1951, %v1950
        %1956 = vmatprep.subr.bf16.mxu0 0
        %1957 = vmatpush1.bf16.msra.mxu0 %v1952
        %1958 = vmatprep.subr.bf16.mxu0 0
        %1959 = vmatpush1.bf16.msra.mxu0 %v1953
        %1960 = vmatprep.subr.bf16.mxu0 0
        %1961 = vmatpush1.bf16.msra.mxu0 0
        %1962 = vmatprep.subr.bf16.mxu0 0
        %1963 = vmatpush1.bf16.msra.mxu0 0
        %1964 = vmatprep.subr.bf16.mxu0 0
        %1965 = vmatpush1.bf16.msra.mxu0 0
        %1966 = vmatprep.subr.bf16.mxu0 0
        %1967 = vmatpush1.bf16.msra.mxu0 0
        %1968 = vmatprep.subr.bf16.mxu0 0
        %1969 = vmatpush1.bf16.msra.mxu0 0
        %1970 = vmatprep.subr.bf16.mxu0 0
        %1971 = vmatpush1.bf16.msra.mxu0 0
        %1972 = vmatprep.subr.bf16.mxu0 0
        %1973 = vmatpush1.bf16.msra.mxu0 0
        %1974 = vmatprep.subr.bf16.mxu0 0
        %1975 = vmatpush1.bf16.msra.mxu0 0
        %1976 = vmatprep.subr.bf16.mxu0 0
        %1977 = vmatpush1.bf16.msra.mxu0 0
        %1978 = vmatprep.subr.bf16.mxu0 0
        %1979 = vmatpush1.bf16.msra.mxu0 0
        %1980 = vmatprep.subr.bf16.mxu0 0
        %1981 = vmatpush1.bf16.msra.mxu0 0
        %1982 = vmatprep.subr.bf16.mxu0 0
        %1983 = vmatpush1.bf16.msra.mxu0 0
        %1984 = vmatprep.subr.bf16.mxu0 0
        %1985 = vmatpush1.bf16.msra.mxu0 0
        %1986 = vmatprep.subr.bf16.mxu0 0
        %1987 = vmatpush1.bf16.msra.mxu0 0
        %1988 = vmatprep.mubr.bf16.mxu0 0
        %1989 = vmatmul.mubr.bf16.gmra.mrb[0].mxu0 %v767
        %v1990 = vpop.f32.mrb[0].mxu0
        %v1991 = vadd.f32 %v1942, %v1990
        %v1992 = vpop.f32.mrb[0].mxu0
        %v1993 = vpop.f32.mrb[0].mxu0
        %v1994 = vpop.f32.mrb[0].mxu0
        %1995 = vdwg.mxu0
        %v1996 = vpack.c.bf16 %v1861, %v1861
        %v1997 = vpack.c.bf16 %v1926, %v1926
        %v1998 = vpack.c.bf16 %v1991, %v1991
        %v2000 = vsel %vm938, %v1996, 0
        %v2003 = vsel %vm938, %v1997, 0
        %2005 = vmatprep.subr.bf16.mxu0 0
        %2006 = vmatpush1.bf16.xpose.msra.mxu0 %v2003
        %2007 = vmatprep.subr.bf16.mxu0 0
        %2008 = vmatpush1.bf16.xpose.msra.mxu0 0
        %2009 = vmatprep.subr.bf16.mxu0 0
        %2010 = vmatpush1.bf16.xpose.msra.mxu0 0
        %2011 = vmatprep.subr.bf16.mxu0 0
        %2012 = vmatpush1.bf16.xpose.msra.mxu0 0
        %2013 = vmatprep.subr.bf16.mxu0 0
        %2014 = vmatpush1.bf16.xpose.msra.mxu0 0
        %2015 = vmatprep.subr.bf16.mxu0 0
        %2016 = vmatpush1.bf16.xpose.msra.mxu0 0
        %2017 = vmatprep.subr.bf16.mxu0 0
        %2018 = vmatpush1.bf16.xpose.msra.mxu0 0
        %2019 = vmatprep.subr.bf16.mxu0 0
        %2020 = vmatpush1.bf16.xpose.msra.mxu0 0
        %2021 = vmatprep.subr.bf16.mxu0 0
        %2022 = vmatpush1.bf16.xpose.msra.mxu0 0
        %2023 = vmatprep.subr.bf16.mxu0 0
        %2024 = vmatpush1.bf16.xpose.msra.mxu0 0
        %2025 = vmatprep.subr.bf16.mxu0 0
        %2026 = vmatpush1.bf16.xpose.msra.mxu0 0
        %2027 = vmatprep.subr.bf16.mxu0 0
        %2028 = vmatpush1.bf16.xpose.msra.mxu0 0
        %2029 = vmatprep.subr.bf16.mxu0 0
        %2030 = vmatpush1.bf16.xpose.msra.mxu0 0
        %2031 = vmatprep.subr.bf16.mxu0 0
        %2032 = vmatpush1.bf16.xpose.msra.mxu0 0
        %2033 = vmatprep.subr.bf16.mxu0 0
        %2034 = vmatpush1.bf16.xpose.msra.mxu0 0
        %2035 = vmatprep.subr.bf16.mxu0 0
        %2036 = vmatpush1.bf16.xpose.msra.mxu0 0
        %2037 = vmatprep.mubr.bf16.mxu0 0
        %2038 = vmatmul.mubr.bf16.gmra.mrb[0].mxu0 %v2000
        %v2039 = vpop.f32.mrb[0].mxu0
        %v2040 = vadd.f32 0.0, %v2039
        %v2041 = vpop.f32.mrb[0].mxu0
        %v2042 = vpop.f32.mrb[0].mxu0
        %v2043 = vpop.f32.mrb[0].mxu0
        %2044 = vdwg.mxu0
        %v2045 = vmul.f32 %v2040, 0.35355338
        %v2046 = vsel %vm703, -1e+09, %v2045
        %v2047 = vsel %vm938, %v2046, -inf
        %2048 = vmax.xlane.f32.xlu0 %v2047
        %v2049 = vpop.xlane.xlu0 %2048
        %v2050 = vsub.f32 %v2046, %v2049
        %v2051 = vmul.f32 %v2050, 1.442695
        %v2052 = vpow.pop %v2051
        %v2053 = vsel %vm938, %v2052, 0.0
        %2054 = vadd.xlane.f32.xlu0 %v2053
        %v2055 = vpop.xlane.xlu0 %2054
        %v2056 = vrcp.pop %v2055
        %v2057 = vmul.f32 %v2052, %v2056
        %v2058 = vpack.c.bf16 %v2057, %v2057
        %v2060 = vsel %vm938, %v2058, 0
        %v2063 = vsel %vm1002, %v1998, 0
        %2065 = vmatprep.subr.bf16.mxu0 0
        %2066 = vmatpush1.bf16.msra.mxu0 %v2063
        %2067 = vmatprep.subr.bf16.mxu0 0
        %2068 = vmatpush1.bf16.msra.mxu0 0
        %2069 = vmatprep.subr.bf16.mxu0 0
        %2070 = vmatpush1.bf16.msra.mxu0 0
        %2071 = vmatprep.subr.bf16.mxu0 0
        %2072 = vmatpush1.bf16.msra.mxu0 0
        %2073 = vmatprep.subr.bf16.mxu0 0
        %2074 = vmatpush1.bf16.msra.mxu0 0
        %2075 = vmatprep.subr.bf16.mxu0 0
        %2076 = vmatpush1.bf16.msra.mxu0 0
        %2077 = vmatprep.subr.bf16.mxu0 0
        %2078 = vmatpush1.bf16.msra.mxu0 0
        %2079 = vmatprep.subr.bf16.mxu0 0
        %2080 = vmatpush1.bf16.msra.mxu0 0
        %2081 = vmatprep.subr.bf16.mxu0 0
        %2082 = vmatpush1.bf16.msra.mxu0 0
        %2083 = vmatprep.subr.bf16.mxu0 0
        %2084 = vmatpush1.bf16.msra.mxu0 0
        %2085 = vmatprep.subr.bf16.mxu0 0
        %2086 = vmatpush1.bf16.msra.mxu0 0
        %2087 = vmatprep.subr.bf16.mxu0 0
        %2088 = vmatpush1.bf16.msra.mxu0 0
        %2089 = vmatprep.subr.bf16.mxu0 0
        %2090 = vmatpush1.bf16.msra.mxu0 0
        %2091 = vmatprep.subr.bf16.mxu0 0
        %2092 = vmatpush1.bf16.msra.mxu0 0
        %2093 = vmatprep.subr.bf16.mxu0 0
        %2094 = vmatpush1.bf16.msra.mxu0 0
        %2095 = vmatprep.subr.bf16.mxu0 0
        %2096 = vmatpush1.bf16.msra.mxu0 0
        %2097 = vmatprep.mubr.bf16.mxu0 0
        %2098 = vmatmul.mubr.bf16.gmra.mrb[0].mxu0 %v2060
        %v2099 = vpop.f32.mrb[0].mxu0
        %v2100 = vadd.f32 0.0, %v2099
        %v2101 = vpop.f32.mrb[0].mxu0
        %v2102 = vpop.f32.mrb[0].mxu0
        %v2103 = vpop.f32.mrb[0].mxu0
        %2104 = vdwg.mxu0
        %v2105 = vpack.c.bf16 %v2100, %v2100
        %s2106 = scalar_lea.vmem %s10, 12
        %v2107 = vld [vmem:[%s2106] sm:$0xf]
        %v2109 = vsel %vm938, %v2105, 0
        %v2112 = vsel %vm1002, %v2107, 0
        %2114 = vmatprep.subr.bf16.mxu0 0
        %2115 = vmatpush1.bf16.msra.mxu0 %v2112
        %2116 = vmatprep.subr.bf16.mxu0 0
        %2117 = vmatpush1.bf16.msra.mxu0 0
        %2118 = vmatprep.subr.bf16.mxu0 0
        %2119 = vmatpush1.bf16.msra.mxu0 0
        %2120 = vmatprep.subr.bf16.mxu0 0
        %2121 = vmatpush1.bf16.msra.mxu0 0
        %2122 = vmatprep.subr.bf16.mxu0 0
        %2123 = vmatpush1.bf16.msra.mxu0 0
        %2124 = vmatprep.subr.bf16.mxu0 0
        %2125 = vmatpush1.bf16.msra.mxu0 0
        %2126 = vmatprep.subr.bf16.mxu0 0
        %2127 = vmatpush1.bf16.msra.mxu0 0
        %2128 = vmatprep.subr.bf16.mxu0 0
        %2129 = vmatpush1.bf16.msra.mxu0 0
        %2130 = vmatprep.subr.bf16.mxu0 0
        %2131 = vmatpush1.bf16.msra.mxu0 0
        %2132 = vmatprep.subr.bf16.mxu0 0
        %2133 = vmatpush1.bf16.msra.mxu0 0
        %2134 = vmatprep.subr.bf16.mxu0 0
        %2135 = vmatpush1.bf16.msra.mxu0 0
        %2136 = vmatprep.subr.bf16.mxu0 0
        %2137 = vmatpush1.bf16.msra.mxu0 0
        %2138 = vmatprep.subr.bf16.mxu0 0
        %2139 = vmatpush1.bf16.msra.mxu0 0
        %2140 = vmatprep.subr.bf16.mxu0 0
        %2141 = vmatpush1.bf16.msra.mxu0 0
        %2142 = vmatprep.subr.bf16.mxu0 0
        %2143 = vmatpush1.bf16.msra.mxu0 0
        %2144 = vmatprep.subr.bf16.mxu0 0
        %2145 = vmatpush1.bf16.msra.mxu0 0
        %2146 = vmatprep.mubr.bf16.mxu0 0
        %2147 = vmatmul.mubr.bf16.gmra.mrb[0].mxu0 %v2109
        %v2148 = vpop.f32.mrb[0].mxu0
        %v2149 = vadd.f32 0.0, %v2148
        %v2150 = vpop.f32.mrb[0].mxu0
        %v2151 = vpop.f32.mrb[0].mxu0
        %v2152 = vpop.f32.mrb[0].mxu0
        %2153 = vdwg.mxu0
        %v2154 = vadd.f32 %v1800, %v2149
        %v2155 = vadd.f32 %v696, %v2154
        %v2156 = vld [vmem:[%s11] sm:$0x1]
        %v2158 = vlaneseq
        %v2159 = vshrl.u32 %v2158, 7
        %v2160 = vsub.s32 0, %v2159
        %v2161 = vrot.slane %v2156, %v2160
        %v2163 = vadd.f32 %v2155, %v2161
        %v2164 = vld [vmem:[%s12] sm:$0x1]
        %v2165 = vld [vmem:[%s13] sm:$0x1]
        %v2166 = vsel %vm706, %v2163, 0.0
        %2167 = vadd.xlane.f32.xlu0 %v2166
        %v2168 = vpop.xlane.xlu0 %2167
        %v2169 = vmul.f32 %v2168, %v710
        %v2170 = vsub.f32 %v2163, %v2169
        %v2171 = vmul.f32 %v2170, %v2170
        %v2172 = vsel %vm706, %v2171, 0.0
        %2173 = vadd.xlane.f32.xlu0 %v2172
        %v2174 = vpop.xlane.xlu0 %2173
        %v2175 = vmul.f32 %v2174, 0.032258064
        %v2176 = vrsqrt.pop %v2175
        %v2177 = vmul.f32 %v2175, %v2176
        %vm2178 = vcmp.eq.f32.partialorder %v2175, inf
        %v2179 = vsel %vm2178, %v2175, %v2177
        %vm2180 = vcmp.eq.f32.partialorder %v2175, 0.0
        %v2181 = vand.u32 %v2175, 2147483648
        %v2182 = vsel %vm2180, %v2181, %v2179
        %v2184 = vlaneseq
        %v2185 = vshrl.u32 %v2184, 7
        %v2186 = vsub.s32 0, %v2185
        %v2187 = vrot.slane %v2164, %v2186
        %v2189 = vmul.f32 %v2187, %v2170
        %v2190 = vadd.f32 %v2182, 1e-06
        %v2191 = vrcp.pop %v2190
        %v2192 = vmul.f32 %v2189, %v2191
        %v2194 = vlaneseq
        %v2195 = vshrl.u32 %v2194, 7
        %v2196 = vsub.s32 0, %v2195
        %v2197 = vrot.slane %v2165, %v2196
        %v2199 = vadd.f32 %v2192, %v2197
        %v2200 = vpack.c.bf16 %v2199, %v2199
        %v2201 = vld [vmem:[%s14] sm:$0xf]
        %v2202 = vld [vmem:[%s14 + $0x4] sm:$0xf]
        %v2203 = vld [vmem:[%s14 + $0x8] sm:$0xf]
        %v2204 = vld [vmem:[%s14 + $0xc] sm:$0xf]
        %v2205 = vld [vmem:[%s15] sm:$0x1]
        %v2207 = vlaneseq
        %v2208 = vshrl.u32 %v2207, 7
        %v2209 = vsub.s32 0, %v2208
        %v2210 = vrot.slane %v2205, %v2209
        %v2216 = vunpack.c.l.b16 %v2201
        %v2217 = vunpack.c.l.b16 %v2202
        %v2218 = vunpack.c.l.b16 %v2203
        %v2219 = vunpack.c.l.b16 %v2204
        %v2220 = vpack.c.b16 %v2217, %v2216
        %v2221 = vpack.c.b16 %v2219, %v2218
        %v2225 = vsel %vm706, %v2200, 0
        %2227 = vmatprep.subr.bf16.mxu0 0
        %2228 = vmatpush1.bf16.msra.mxu0 %v2220
        %2229 = vmatprep.subr.bf16.mxu0 0
        %2230 = vmatpush1.bf16.msra.mxu0 %v2221
        %2231 = vmatprep.subr.bf16.mxu0 0
        %2232 = vmatpush1.bf16.msra.mxu0 0
        %2233 = vmatprep.subr.bf16.mxu0 0
        %2234 = vmatpush1.bf16.msra.mxu0 0
        %2235 = vmatprep.subr.bf16.mxu0 0
        %2236 = vmatpush1.bf16.msra.mxu0 0
        %2237 = vmatprep.subr.bf16.mxu0 0
        %2238 = vmatpush1.bf16.msra.mxu0 0
        %2239 = vmatprep.subr.bf16.mxu0 0
        %2240 = vmatpush1.bf16.msra.mxu0 0
        %2241 = vmatprep.subr.bf16.mxu0 0
        %2242 = vmatpush1.bf16.msra.mxu0 0
        %2243 = vmatprep.subr.bf16.mxu0 0
        %2244 = vmatpush1.bf16.msra.mxu0 0
        %2245 = vmatprep.subr.bf16.mxu0 0
        %2246 = vmatpush1.bf16.msra.mxu0 0
        %2247 = vmatprep.subr.bf16.mxu0 0
        %2248 = vmatpush1.bf16.msra.mxu0 0
        %2249 = vmatprep.subr.bf16.mxu0 0
        %2250 = vmatpush1.bf16.msra.mxu0 0
        %2251 = vmatprep.subr.bf16.mxu0 0
        %2252 = vmatpush1.bf16.msra.mxu0 0
        %2253 = vmatprep.subr.bf16.mxu0 0
        %2254 = vmatpush1.bf16.msra.mxu0 0
        %2255 = vmatprep.subr.bf16.mxu0 0
        %2256 = vmatpush1.bf16.msra.mxu0 0
        %2257 = vmatprep.subr.bf16.mxu0 0
        %2258 = vmatpush1.bf16.msra.mxu0 0
        %2259 = vmatprep.mubr.bf16.mxu0 0
        %2260 = vmatmul.mubr.bf16.gmra.mrb[0].mxu0 %v2225
        %v2261 = vpop.f32.mrb[0].mxu0
        %v2262 = vadd.f32 %v2210, %v2261
        %v2263 = vpop.f32.mrb[0].mxu0
        %v2264 = vpop.f32.mrb[0].mxu0
        %v2265 = vpop.f32.mrb[0].mxu0
        %2266 = vdwg.mxu0
        %v2267 = vmax.f32 %v2262, 0.0
        %v2268 = vpack.c.bf16 %v2267, %v2267
        %v2269 = vld [vmem:[%s16] sm:$0xf]
        %v2270 = vld [vmem:[%s16 + $0x4] sm:$0xf]
        %v2271 = vld [vmem:[%s16 + $0x8] sm:$0xf]
        %v2272 = vld [vmem:[%s16 + $0xc] sm:$0xf]
        %v2273 = vld [vmem:[%s16 + $0x10] sm:$0xf]
        %v2274 = vld [vmem:[%s16 + $0x14] sm:$0xf]
        %v2275 = vld [vmem:[%s16 + $0x18] sm:$0xf]
        %v2276 = vld [vmem:[%s16 + $0x1c] sm:$0xf]
        %v2285 = vunpack.c.l.b16 %v2269
        %v2286 = vunpack.c.l.b16 %v2270
        %v2287 = vunpack.c.l.b16 %v2271
        %v2288 = vunpack.c.l.b16 %v2272
        %v2289 = vunpack.c.l.b16 %v2273
        %v2290 = vunpack.c.l.b16 %v2274
        %v2291 = vunpack.c.l.b16 %v2275
        %v2292 = vunpack.c.l.b16 %v2276
        %v2293 = vpack.c.b16 %v2286, %v2285
        %v2294 = vpack.c.b16 %v2288, %v2287
        %v2295 = vpack.c.b16 %v2290, %v2289
        %v2296 = vpack.c.b16 %v2292, %v2291
        %vm2301 = vcmask 523264
        %v2303 = vsel %vm2301, %v2268, 0
        %2305 = vmatprep.subr.bf16.mxu0 0
        %2306 = vmatpush1.bf16.msra.mxu0 %v2293
        %2307 = vmatprep.subr.bf16.mxu0 0
        %2308 = vmatpush1.bf16.msra.mxu0 %v2294
        %2309 = vmatprep.subr.bf16.mxu0 0
        %2310 = vmatpush1.bf16.msra.mxu0 %v2295
        %2311 = vmatprep.subr.bf16.mxu0 0
        %2312 = vmatpush1.bf16.msra.mxu0 %v2296
        %2313 = vmatprep.subr.bf16.mxu0 0
        %2314 = vmatpush1.bf16.msra.mxu0 0
        %2315 = vmatprep.subr.bf16.mxu0 0
        %2316 = vmatpush1.bf16.msra.mxu0 0
        %2317 = vmatprep.subr.bf16.mxu0 0
        %2318 = vmatpush1.bf16.msra.mxu0 0
        %2319 = vmatprep.subr.bf16.mxu0 0
        %2320 = vmatpush1.bf16.msra.mxu0 0
        %2321 = vmatprep.subr.bf16.mxu0 0
        %2322 = vmatpush1.bf16.msra.mxu0 0
        %2323 = vmatprep.subr.bf16.mxu0 0
        %2324 = vmatpush1.bf16.msra.mxu0 0
        %2325 = vmatprep.subr.bf16.mxu0 0
        %2326 = vmatpush1.bf16.msra.mxu0 0
        %2327 = vmatprep.subr.bf16.mxu0 0
        %2328 = vmatpush1.bf16.msra.mxu0 0
        %2329 = vmatprep.subr.bf16.mxu0 0
        %2330 = vmatpush1.bf16.msra.mxu0 0
        %2331 = vmatprep.subr.bf16.mxu0 0
        %2332 = vmatpush1.bf16.msra.mxu0 0
        %2333 = vmatprep.subr.bf16.mxu0 0
        %2334 = vmatpush1.bf16.msra.mxu0 0
        %2335 = vmatprep.subr.bf16.mxu0 0
        %2336 = vmatpush1.bf16.msra.mxu0 0
        %2337 = vmatprep.mubr.bf16.mxu0 0
        %2338 = vmatmul.mubr.bf16.gmra.mrb[0].mxu0 %v2303
        %v2339 = vpop.f32.mrb[0].mxu0
        %v2340 = vadd.f32 0.0, %v2339
        %v2341 = vpop.f32.mrb[0].mxu0
        %v2342 = vpop.f32.mrb[0].mxu0
        %v2343 = vpop.f32.mrb[0].mxu0
        %2344 = vdwg.mxu0
        %v2345 = vadd.f32 %v2163, %v2340
        %v2346 = vld [vmem:[%s17] sm:$0x1]
        %v2348 = vlaneseq
        %v2349 = vshrl.u32 %v2348, 7
        %v2350 = vsub.s32 0, %v2349
        %v2351 = vrot.slane %v2346, %v2350
        %v2353 = vadd.f32 %v2345, %v2351
        %s2354 = scalar_lea.vmem %s2, 1
        %v2355 = vld [vmem:[%s2354] sm:$0x1]
        %s2356 = scalar_lea.vmem %s3, 1
        %v2357 = vld [vmem:[%s2356] sm:$0x1]
        %v2358 = vsel %vm706, %v2353, 0.0
        %2359 = vadd.xlane.f32.xlu0 %v2358
        %v2360 = vpop.xlane.xlu0 %2359
        %v2361 = vmul.f32 %v2360, %v710
        %v2362 = vsub.f32 %v2353, %v2361
        %v2363 = vmul.f32 %v2362, %v2362
        %v2364 = vsel %vm706, %v2363, 0.0
        %2365 = vadd.xlane.f32.xlu0 %v2364
        %v2366 = vpop.xlane.xlu0 %2365
        %v2367 = vmul.f32 %v2366, 0.032258064
        %v2368 = vrsqrt.pop %v2367
        %v2369 = vmul.f32 %v2367, %v2368
        %vm2370 = vcmp.eq.f32.partialorder %v2367, inf
        %v2371 = vsel %vm2370, %v2367, %v2369
        %vm2372 = vcmp.eq.f32.partialorder %v2367, 0.0
        %v2373 = vand.u32 %v2367, 2147483648
        %v2374 = vsel %vm2372, %v2373, %v2371
        %v2376 = vlaneseq
        %v2377 = vshrl.u32 %v2376, 7
        %v2378 = vsub.s32 0, %v2377
        %v2379 = vrot.slane %v2355, %v2378
        %v2381 = vmul.f32 %v2379, %v2362
        %v2382 = vadd.f32 %v2374, 1e-06
        %v2383 = vrcp.pop %v2382
        %v2384 = vmul.f32 %v2381, %v2383
        %v2386 = vlaneseq
        %v2387 = vshrl.u32 %v2386, 7
        %v2388 = vsub.s32 0, %v2387
        %v2389 = vrot.slane %v2357, %v2388
        %v2391 = vadd.f32 %v2384, %v2389
        %v2392 = vpack.c.bf16 %v2391, %v2391
        %s2393 = scalar_lea.vmem %s4, 64
        %v2394 = vld [vmem:[%s2393] sm:$0xf]
        %v2395 = vld [vmem:[%s2393 + $0x4] sm:$0xf]
        %v2396 = vld [vmem:[%s2393 + $0x8] sm:$0xf]
        %v2397 = vld [vmem:[%s2393 + $0xc] sm:$0xf]
        %s2398 = scalar_lea.vmem %s5, 4
        %v2399 = vld [vmem:[%s2398] sm:$0x1]
        %v2401 = vlaneseq
        %v2402 = vshrl.u32 %v2401, 7
        %v2403 = vsub.s32 0, %v2402
        %v2404 = vrot.slane %v2399, %v2403
        %v2410 = vunpack.c.l.b16 %v2394
        %v2411 = vunpack.c.l.b16 %v2395
        %v2412 = vunpack.c.l.b16 %v2396
        %v2413 = vunpack.c.l.b16 %v2397
        %v2414 = vpack.c.b16 %v2411, %v2410
        %v2415 = vpack.c.b16 %v2413, %v2412
        %v2419 = vsel %vm706, %v2392, 0
        %2421 = vmatprep.subr.bf16.mxu0 0
        %2422 = vmatpush1.bf16.msra.mxu0 %v2414
        %2423 = vmatprep.subr.bf16.mxu0 0
        %2424 = vmatpush1.bf16.msra.mxu0 %v2415
        %2425 = vmatprep.subr.bf16.mxu0 0
        %2426 = vmatpush1.bf16.msra.mxu0 0
        %2427 = vmatprep.subr.bf16.mxu0 0
        %2428 = vmatpush1.bf16.msra.mxu0 0
        %2429 = vmatprep.subr.bf16.mxu0 0
        %2430 = vmatpush1.bf16.msra.mxu0 0
        %2431 = vmatprep.subr.bf16.mxu0 0
        %2432 = vmatpush1.bf16.msra.mxu0 0
        %2433 = vmatprep.subr.bf16.mxu0 0
        %2434 = vmatpush1.bf16.msra.mxu0 0
        %2435 = vmatprep.subr.bf16.mxu0 0
        %2436 = vmatpush1.bf16.msra.mxu0 0
        %2437 = vmatprep.subr.bf16.mxu0 0
        %2438 = vmatpush1.bf16.msra.mxu0 0
        %2439 = vmatprep.subr.bf16.mxu0 0
        %2440 = vmatpush1.bf16.msra.mxu0 0
        %2441 = vmatprep.subr.bf16.mxu0 0
        %2442 = vmatpush1.bf16.msra.mxu0 0
        %2443 = vmatprep.subr.bf16.mxu0 0
        %2444 = vmatpush1.bf16.msra.mxu0 0
        %2445 = vmatprep.subr.bf16.mxu0 0
        %2446 = vmatpush1.bf16.msra.mxu0 0
        %2447 = vmatprep.subr.bf16.mxu0 0
        %2448 = vmatpush1.bf16.msra.mxu0 0
        %2449 = vmatprep.subr.bf16.mxu0 0
        %2450 = vmatpush1.bf16.msra.mxu0 0
        %2451 = vmatprep.subr.bf16.mxu0 0
        %2452 = vmatpush1.bf16.msra.mxu0 0
        %2453 = vmatprep.mubr.bf16.mxu0 0
        %2454 = vmatmul.mubr.bf16.gmra.mrb[0].mxu0 %v2419
        %v2455 = vpop.f32.mrb[0].mxu0
        %v2456 = vadd.f32 %v2404, %v2455
        %v2457 = vpop.f32.mrb[0].mxu0
        %v2458 = vpop.f32.mrb[0].mxu0
        %v2459 = vpop.f32.mrb[0].mxu0
        %2460 = vdwg.mxu0
        %s2461 = scalar_lea.vmem %s6, 64
        %v2462 = vld [vmem:[%s2461] sm:$0xf]
        %v2463 = vld [vmem:[%s2461 + $0x4] sm:$0xf]
        %v2464 = vld [vmem:[%s2461 + $0x8] sm:$0xf]
        %v2465 = vld [vmem:[%s2461 + $0xc] sm:$0xf]
        %s2466 = scalar_lea.vmem %s7, 4
        %v2467 = vld [vmem:[%s2466] sm:$0x1]
        %v2469 = vlaneseq
        %v2470 = vshrl.u32 %v2469, 7
        %v2471 = vsub.s32 0, %v2470
        %v2472 = vrot.slane %v2467, %v2471
        %v2478 = vunpack.c.l.b16 %v2462
        %v2479 = vunpack.c.l.b16 %v2463
        %v2480 = vunpack.c.l.b16 %v2464
        %v2481 = vunpack.c.l.b16 %v2465
        %v2482 = vpack.c.b16 %v2479, %v2478
        %v2483 = vpack.c.b16 %v2481, %v2480
        %2486 = vmatprep.subr.bf16.mxu0 0
        %2487 = vmatpush1.bf16.msra.mxu0 %v2482
        %2488 = vmatprep.subr.bf16.mxu0 0
        %2489 = vmatpush1.bf16.msra.mxu0 %v2483
        %2490 = vmatprep.subr.bf16.mxu0 0
        %2491 = vmatpush1.bf16.msra.mxu0 0
        %2492 = vmatprep.subr.bf16.mxu0 0
        %2493 = vmatpush1.bf16.msra.mxu0 0
        %2494 = vmatprep.subr.bf16.mxu0 0
        %2495 = vmatpush1.bf16.msra.mxu0 0
        %2496 = vmatprep.subr.bf16.mxu0 0
        %2497 = vmatpush1.bf16.msra.mxu0 0
        %2498 = vmatprep.subr.bf16.mxu0 0
        %2499 = vmatpush1.bf16.msra.mxu0 0
        %2500 = vmatprep.subr.bf16.mxu0 0
        %2501 = vmatpush1.bf16.msra.mxu0 0
        %2502 = vmatprep.subr.bf16.mxu0 0
        %2503 = vmatpush1.bf16.msra.mxu0 0
        %2504 = vmatprep.subr.bf16.mxu0 0
        %2505 = vmatpush1.bf16.msra.mxu0 0
        %2506 = vmatprep.subr.bf16.mxu0 0
        %2507 = vmatpush1.bf16.msra.mxu0 0
        %2508 = vmatprep.subr.bf16.mxu0 0
        %2509 = vmatpush1.bf16.msra.mxu0 0
        %2510 = vmatprep.subr.bf16.mxu0 0
        %2511 = vmatpush1.bf16.msra.mxu0 0
        %2512 = vmatprep.subr.bf16.mxu0 0
        %2513 = vmatpush1.bf16.msra.mxu0 0
        %2514 = vmatprep.subr.bf16.mxu0 0
        %2515 = vmatpush1.bf16.msra.mxu0 0
        %2516 = vmatprep.subr.bf16.mxu0 0
        %2517 = vmatpush1.bf16.msra.mxu0 0
        %2518 = vmatprep.mubr.bf16.mxu0 0
        %2519 = vmatmul.mubr.bf16.gmra.mrb[0].mxu0 %v2419
        %v2520 = vpop.f32.mrb[0].mxu0
        %v2521 = vadd.f32 %v2472, %v2520
        %v2522 = vpop.f32.mrb[0].mxu0
        %v2523 = vpop.f32.mrb[0].mxu0
        %v2524 = vpop.f32.mrb[0].mxu0
        %2525 = vdwg.mxu0
        %s2526 = scalar_lea.vmem %s8, 64
        %v2527 = vld [vmem:[%s2526] sm:$0xf]
        %v2528 = vld [vmem:[%s2526 + $0x4] sm:$0xf]
        %v2529 = vld [vmem:[%s2526 + $0x8] sm:$0xf]
        %v2530 = vld [vmem:[%s2526 + $0xc] sm:$0xf]
        %s2531 = scalar_lea.vmem %s9, 4
        %v2532 = vld [vmem:[%s2531] sm:$0x1]
        %v2534 = vlaneseq
        %v2535 = vshrl.u32 %v2534, 7
        %v2536 = vsub.s32 0, %v2535
        %v2537 = vrot.slane %v2532, %v2536
        %v2543 = vunpack.c.l.b16 %v2527
        %v2544 = vunpack.c.l.b16 %v2528
        %v2545 = vunpack.c.l.b16 %v2529
        %v2546 = vunpack.c.l.b16 %v2530
        %v2547 = vpack.c.b16 %v2544, %v2543
        %v2548 = vpack.c.b16 %v2546, %v2545
        %2551 = vmatprep.subr.bf16.mxu0 0
        %2552 = vmatpush1.bf16.msra.mxu0 %v2547
        %2553 = vmatprep.subr.bf16.mxu0 0
        %2554 = vmatpush1.bf16.msra.mxu0 %v2548
        %2555 = vmatprep.subr.bf16.mxu0 0
        %2556 = vmatpush1.bf16.msra.mxu0 0
        %2557 = vmatprep.subr.bf16.mxu0 0
        %2558 = vmatpush1.bf16.msra.mxu0 0
        %2559 = vmatprep.subr.bf16.mxu0 0
        %2560 = vmatpush1.bf16.msra.mxu0 0
        %2561 = vmatprep.subr.bf16.mxu0 0
        %2562 = vmatpush1.bf16.msra.mxu0 0
        %2563 = vmatprep.subr.bf16.mxu0 0
        %2564 = vmatpush1.bf16.msra.mxu0 0
        %2565 = vmatprep.subr.bf16.mxu0 0
        %2566 = vmatpush1.bf16.msra.mxu0 0
        %2567 = vmatprep.subr.bf16.mxu0 0
        %2568 = vmatpush1.bf16.msra.mxu0 0
        %2569 = vmatprep.subr.bf16.mxu0 0
        %2570 = vmatpush1.bf16.msra.mxu0 0
        %2571 = vmatprep.subr.bf16.mxu0 0
        %2572 = vmatpush1.bf16.msra.mxu0 0
        %2573 = vmatprep.subr.bf16.mxu0 0
        %2574 = vmatpush1.bf16.msra.mxu0 0
        %2575 = vmatprep.subr.bf16.mxu0 0
        %2576 = vmatpush1.bf16.msra.mxu0 0
        %2577 = vmatprep.subr.bf16.mxu0 0
        %2578 = vmatpush1.bf16.msra.mxu0 0
        %2579 = vmatprep.subr.bf16.mxu0 0
        %2580 = vmatpush1.bf16.msra.mxu0 0
        %2581 = vmatprep.subr.bf16.mxu0 0
        %2582 = vmatpush1.bf16.msra.mxu0 0
        %2583 = vmatprep.mubr.bf16.mxu0 0
        %2584 = vmatmul.mubr.bf16.gmra.mrb[0].mxu0 %v2419
        %v2585 = vpop.f32.mrb[0].mxu0
        %v2586 = vadd.f32 %v2537, %v2585
        %v2587 = vpop.f32.mrb[0].mxu0
        %v2588 = vpop.f32.mrb[0].mxu0
        %v2589 = vpop.f32.mrb[0].mxu0
        %2590 = vdwg.mxu0
        %v2591 = vpack.c.bf16 %v2456, %v2456
        %v2592 = vpack.c.bf16 %v2521, %v2521
        %v2593 = vpack.c.bf16 %v2586, %v2586
        %v2595 = vsel %vm938, %v2591, 0
        %v2598 = vsel %vm938, %v2592, 0
        %2600 = vmatprep.subr.bf16.mxu0 0
        %2601 = vmatpush1.bf16.xpose.msra.mxu0 %v2598
        %2602 = vmatprep.subr.bf16.mxu0 0
        %2603 = vmatpush1.bf16.xpose.msra.mxu0 0
        %2604 = vmatprep.subr.bf16.mxu0 0
        %2605 = vmatpush1.bf16.xpose.msra.mxu0 0
        %2606 = vmatprep.subr.bf16.mxu0 0
        %2607 = vmatpush1.bf16.xpose.msra.mxu0 0
        %2608 = vmatprep.subr.bf16.mxu0 0
        %2609 = vmatpush1.bf16.xpose.msra.mxu0 0
        %2610 = vmatprep.subr.bf16.mxu0 0
        %2611 = vmatpush1.bf16.xpose.msra.mxu0 0
        %2612 = vmatprep.subr.bf16.mxu0 0
        %2613 = vmatpush1.bf16.xpose.msra.mxu0 0
        %2614 = vmatprep.subr.bf16.mxu0 0
        %2615 = vmatpush1.bf16.xpose.msra.mxu0 0
        %2616 = vmatprep.subr.bf16.mxu0 0
        %2617 = vmatpush1.bf16.xpose.msra.mxu0 0
        %2618 = vmatprep.subr.bf16.mxu0 0
        %2619 = vmatpush1.bf16.xpose.msra.mxu0 0
        %2620 = vmatprep.subr.bf16.mxu0 0
        %2621 = vmatpush1.bf16.xpose.msra.mxu0 0
        %2622 = vmatprep.subr.bf16.mxu0 0
        %2623 = vmatpush1.bf16.xpose.msra.mxu0 0
        %2624 = vmatprep.subr.bf16.mxu0 0
        %2625 = vmatpush1.bf16.xpose.msra.mxu0 0
        %2626 = vmatprep.subr.bf16.mxu0 0
        %2627 = vmatpush1.bf16.xpose.msra.mxu0 0
        %2628 = vmatprep.subr.bf16.mxu0 0
        %2629 = vmatpush1.bf16.xpose.msra.mxu0 0
        %2630 = vmatprep.subr.bf16.mxu0 0
        %2631 = vmatpush1.bf16.xpose.msra.mxu0 0
        %2632 = vmatprep.mubr.bf16.mxu0 0
        %2633 = vmatmul.mubr.bf16.gmra.mrb[0].mxu0 %v2595
        %v2634 = vpop.f32.mrb[0].mxu0
        %v2635 = vadd.f32 0.0, %v2634
        %v2636 = vpop.f32.mrb[0].mxu0
        %v2637 = vpop.f32.mrb[0].mxu0
        %v2638 = vpop.f32.mrb[0].mxu0
        %2639 = vdwg.mxu0
        %v2640 = vmul.f32 %v2635, 0.35355338
        %v2641 = vsel %vm703, -1e+09, %v2640
        %v2642 = vsel %vm938, %v2641, -inf
        %2643 = vmax.xlane.f32.xlu0 %v2642
        %v2644 = vpop.xlane.xlu0 %2643
        %v2645 = vsub.f32 %v2641, %v2644
        %v2646 = vmul.f32 %v2645, 1.442695
        %v2647 = vpow.pop %v2646
        %v2648 = vsel %vm938, %v2647, 0.0
        %2649 = vadd.xlane.f32.xlu0 %v2648
        %v2650 = vpop.xlane.xlu0 %2649
        %v2651 = vrcp.pop %v2650
        %v2652 = vmul.f32 %v2647, %v2651
        %v2653 = vpack.c.bf16 %v2652, %v2652
        %v2655 = vsel %vm938, %v2653, 0
        %v2658 = vsel %vm1002, %v2593, 0
        %2660 = vmatprep.subr.bf16.mxu0 0
        %2661 = vmatpush1.bf16.msra.mxu0 %v2658
        %2662 = vmatprep.subr.bf16.mxu0 0
        %2663 = vmatpush1.bf16.msra.mxu0 0
        %2664 = vmatprep.subr.bf16.mxu0 0
        %2665 = vmatpush1.bf16.msra.mxu0 0
        %2666 = vmatprep.subr.bf16.mxu0 0
        %2667 = vmatpush1.bf16.msra.mxu0 0
        %2668 = vmatprep.subr.bf16.mxu0 0
        %2669 = vmatpush1.bf16.msra.mxu0 0
        %2670 = vmatprep.subr.bf16.mxu0 0
        %2671 = vmatpush1.bf16.msra.mxu0 0
        %2672 = vmatprep.subr.bf16.mxu0 0
        %2673 = vmatpush1.bf16.msra.mxu0 0
        %2674 = vmatprep.subr.bf16.mxu0 0
        %2675 = vmatpush1.bf16.msra.mxu0 0
        %2676 = vmatprep.subr.bf16.mxu0 0
        %2677 = vmatpush1.bf16.msra.mxu0 0
        %2678 = vmatprep.subr.bf16.mxu0 0
        %2679 = vmatpush1.bf16.msra.mxu0 0
        %2680 = vmatprep.subr.bf16.mxu0 0
        %2681 = vmatpush1.bf16.msra.mxu0 0
        %2682 = vmatprep.subr.bf16.mxu0 0
        %2683 = vmatpush1.bf16.msra.mxu0 0
        %2684 = vmatprep.subr.bf16.mxu0 0
        %2685 = vmatpush1.bf16.msra.mxu0 0
        %2686 = vmatprep.subr.bf16.mxu0 0
        %2687 = vmatpush1.bf16.msra.mxu0 0
        %2688 = vmatprep.subr.bf16.mxu0 0
        %2689 = vmatpush1.bf16.msra.mxu0 0
        %2690 = vmatprep.subr.bf16.mxu0 0
        %2691 = vmatpush1.bf16.msra.mxu0 0
        %2692 = vmatprep.mubr.bf16.mxu0 0
        %2693 = vmatmul.mubr.bf16.gmra.mrb[0].mxu0 %v2655
        %v2694 = vpop.f32.mrb[0].mxu0
        %v2695 = vadd.f32 0.0, %v2694
        %v2696 = vpop.f32.mrb[0].mxu0
        %v2697 = vpop.f32.mrb[0].mxu0
        %v2698 = vpop.f32.mrb[0].mxu0
        %2699 = vdwg.mxu0
        %v2700 = vpack.c.bf16 %v2695, %v2695
        %s2701 = scalar_lea.vmem %s10, 16
        %v2702 = vld [vmem:[%s2701] sm:$0xf]
        %s2703 = scalar_lea.vmem %s4, 80
        %v2704 = vld [vmem:[%s2703] sm:$0xf]
        %v2705 = vld [vmem:[%s2703 + $0x4] sm:$0xf]
        %v2706 = vld [vmem:[%s2703 + $0x8] sm:$0xf]
        %v2707 = vld [vmem:[%s2703 + $0xc] sm:$0xf]
        %s2708 = scalar_lea.vmem %s5, 5
        %v2709 = vld [vmem:[%s2708] sm:$0x1]
        %v2711 = vlaneseq
        %v2712 = vshrl.u32 %v2711, 7
        %v2713 = vsub.s32 0, %v2712
        %v2714 = vrot.slane %v2709, %v2713
        %v2720 = vunpack.c.l.b16 %v2704
        %v2721 = vunpack.c.l.b16 %v2705
        %v2722 = vunpack.c.l.b16 %v2706
        %v2723 = vunpack.c.l.b16 %v2707
        %v2724 = vpack.c.b16 %v2721, %v2720
        %v2725 = vpack.c.b16 %v2723, %v2722
        %2728 = vmatprep.subr.bf16.mxu0 0
        %2729 = vmatpush1.bf16.msra.mxu0 %v2724
        %2730 = vmatprep.subr.bf16.mxu0 0
        %2731 = vmatpush1.bf16.msra.mxu0 %v2725
        %2732 = vmatprep.subr.bf16.mxu0 0
        %2733 = vmatpush1.bf16.msra.mxu0 0
        %2734 = vmatprep.subr.bf16.mxu0 0
        %2735 = vmatpush1.bf16.msra.mxu0 0
        %2736 = vmatprep.subr.bf16.mxu0 0
        %2737 = vmatpush1.bf16.msra.mxu0 0
        %2738 = vmatprep.subr.bf16.mxu0 0
        %2739 = vmatpush1.bf16.msra.mxu0 0
        %2740 = vmatprep.subr.bf16.mxu0 0
        %2741 = vmatpush1.bf16.msra.mxu0 0
        %2742 = vmatprep.subr.bf16.mxu0 0
        %2743 = vmatpush1.bf16.msra.mxu0 0
        %2744 = vmatprep.subr.bf16.mxu0 0
        %2745 = vmatpush1.bf16.msra.mxu0 0
        %2746 = vmatprep.subr.bf16.mxu0 0
        %2747 = vmatpush1.bf16.msra.mxu0 0
        %2748 = vmatprep.subr.bf16.mxu0 0
        %2749 = vmatpush1.bf16.msra.mxu0 0
        %2750 = vmatprep.subr.bf16.mxu0 0
        %2751 = vmatpush1.bf16.msra.mxu0 0
        %2752 = vmatprep.subr.bf16.mxu0 0
        %2753 = vmatpush1.bf16.msra.mxu0 0
        %2754 = vmatprep.subr.bf16.mxu0 0
        %2755 = vmatpush1.bf16.msra.mxu0 0
        %2756 = vmatprep.subr.bf16.mxu0 0
        %2757 = vmatpush1.bf16.msra.mxu0 0
        %2758 = vmatprep.subr.bf16.mxu0 0
        %2759 = vmatpush1.bf16.msra.mxu0 0
        %2760 = vmatprep.mubr.bf16.mxu0 0
        %2761 = vmatmul.mubr.bf16.gmra.mrb[0].mxu0 %v2419
        %v2762 = vpop.f32.mrb[0].mxu0
        %v2763 = vadd.f32 %v2714, %v2762
        %v2764 = vpop.f32.mrb[0].mxu0
        %v2765 = vpop.f32.mrb[0].mxu0
        %v2766 = vpop.f32.mrb[0].mxu0
        %2767 = vdwg.mxu0
        %s2768 = scalar_lea.vmem %s6, 80
        %v2769 = vld [vmem:[%s2768] sm:$0xf]
        %v2770 = vld [vmem:[%s2768 + $0x4] sm:$0xf]
        %v2771 = vld [vmem:[%s2768 + $0x8] sm:$0xf]
        %v2772 = vld [vmem:[%s2768 + $0xc] sm:$0xf]
        %s2773 = scalar_lea.vmem %s7, 5
        %v2774 = vld [vmem:[%s2773] sm:$0x1]
        %v2776 = vlaneseq
        %v2777 = vshrl.u32 %v2776, 7
        %v2778 = vsub.s32 0, %v2777
        %v2779 = vrot.slane %v2774, %v2778
        %v2785 = vunpack.c.l.b16 %v2769
        %v2786 = vunpack.c.l.b16 %v2770
        %v2787 = vunpack.c.l.b16 %v2771
        %v2788 = vunpack.c.l.b16 %v2772
        %v2789 = vpack.c.b16 %v2786, %v2785
        %v2790 = vpack.c.b16 %v2788, %v2787
        %2793 = vmatprep.subr.bf16.mxu0 0
        %2794 = vmatpush1.bf16.msra.mxu0 %v2789
        %2795 = vmatprep.subr.bf16.mxu0 0
        %2796 = vmatpush1.bf16.msra.mxu0 %v2790
        %2797 = vmatprep.subr.bf16.mxu0 0
        %2798 = vmatpush1.bf16.msra.mxu0 0
        %2799 = vmatprep.subr.bf16.mxu0 0
        %2800 = vmatpush1.bf16.msra.mxu0 0
        %2801 = vmatprep.subr.bf16.mxu0 0
        %2802 = vmatpush1.bf16.msra.mxu0 0
        %2803 = vmatprep.subr.bf16.mxu0 0
        %2804 = vmatpush1.bf16.msra.mxu0 0
        %2805 = vmatprep.subr.bf16.mxu0 0
        %2806 = vmatpush1.bf16.msra.mxu0 0
        %2807 = vmatprep.subr.bf16.mxu0 0
        %2808 = vmatpush1.bf16.msra.mxu0 0
        %2809 = vmatprep.subr.bf16.mxu0 0
        %2810 = vmatpush1.bf16.msra.mxu0 0
        %2811 = vmatprep.subr.bf16.mxu0 0
        %2812 = vmatpush1.bf16.msra.mxu0 0
        %2813 = vmatprep.subr.bf16.mxu0 0
        %2814 = vmatpush1.bf16.msra.mxu0 0
        %2815 = vmatprep.subr.bf16.mxu0 0
        %2816 = vmatpush1.bf16.msra.mxu0 0
        %2817 = vmatprep.subr.bf16.mxu0 0
        %2818 = vmatpush1.bf16.msra.mxu0 0
        %2819 = vmatprep.subr.bf16.mxu0 0
        %2820 = vmatpush1.bf16.msra.mxu0 0
        %2821 = vmatprep.subr.bf16.mxu0 0
        %2822 = vmatpush1.bf16.msra.mxu0 0
        %2823 = vmatprep.subr.bf16.mxu0 0
        %2824 = vmatpush1.bf16.msra.mxu0 0
        %2825 = vmatprep.mubr.bf16.mxu0 0
        %2826 = vmatmul.mubr.bf16.gmra.mrb[0].mxu0 %v2419
        %v2827 = vpop.f32.mrb[0].mxu0
        %v2828 = vadd.f32 %v2779, %v2827
        %v2829 = vpop.f32.mrb[0].mxu0
        %v2830 = vpop.f32.mrb[0].mxu0
        %v2831 = vpop.f32.mrb[0].mxu0
        %2832 = vdwg.mxu0
        %s2833 = scalar_lea.vmem %s8, 80
        %v2834 = vld [vmem:[%s2833] sm:$0xf]
        %v2835 = vld [vmem:[%s2833 + $0x4] sm:$0xf]
        %v2836 = vld [vmem:[%s2833 + $0x8] sm:$0xf]
        %v2837 = vld [vmem:[%s2833 + $0xc] sm:$0xf]
        %s2838 = scalar_lea.vmem %s9, 5
        %v2839 = vld [vmem:[%s2838] sm:$0x1]
        %v2841 = vlaneseq
        %v2842 = vshrl.u32 %v2841, 7
        %v2843 = vsub.s32 0, %v2842
        %v2844 = vrot.slane %v2839, %v2843
        %v2850 = vunpack.c.l.b16 %v2834
        %v2851 = vunpack.c.l.b16 %v2835
        %v2852 = vunpack.c.l.b16 %v2836
        %v2853 = vunpack.c.l.b16 %v2837
        %v2854 = vpack.c.b16 %v2851, %v2850
        %v2855 = vpack.c.b16 %v2853, %v2852
        %2858 = vmatprep.subr.bf16.mxu0 0
        %2859 = vmatpush1.bf16.msra.mxu0 %v2854
        %2860 = vmatprep.subr.bf16.mxu0 0
        %2861 = vmatpush1.bf16.msra.mxu0 %v2855
        %2862 = vmatprep.subr.bf16.mxu0 0
        %2863 = vmatpush1.bf16.msra.mxu0 0
        %2864 = vmatprep.subr.bf16.mxu0 0
        %2865 = vmatpush1.bf16.msra.mxu0 0
        %2866 = vmatprep.subr.bf16.mxu0 0
        %2867 = vmatpush1.bf16.msra.mxu0 0
        %2868 = vmatprep.subr.bf16.mxu0 0
        %2869 = vmatpush1.bf16.msra.mxu0 0
        %2870 = vmatprep.subr.bf16.mxu0 0
        %2871 = vmatpush1.bf16.msra.mxu0 0
        %2872 = vmatprep.subr.bf16.mxu0 0
        %2873 = vmatpush1.bf16.msra.mxu0 0
        %2874 = vmatprep.subr.bf16.mxu0 0
        %2875 = vmatpush1.bf16.msra.mxu0 0
        %2876 = vmatprep.subr.bf16.mxu0 0
        %2877 = vmatpush1.bf16.msra.mxu0 0
        %2878 = vmatprep.subr.bf16.mxu0 0
        %2879 = vmatpush1.bf16.msra.mxu0 0
        %2880 = vmatprep.subr.bf16.mxu0 0
        %2881 = vmatpush1.bf16.msra.mxu0 0
        %2882 = vmatprep.subr.bf16.mxu0 0
        %2883 = vmatpush1.bf16.msra.mxu0 0
        %2884 = vmatprep.subr.bf16.mxu0 0
        %2885 = vmatpush1.bf16.msra.mxu0 0
        %2886 = vmatprep.subr.bf16.mxu0 0
        %2887 = vmatpush1.bf16.msra.mxu0 0
        %2888 = vmatprep.subr.bf16.mxu0 0
        %2889 = vmatpush1.bf16.msra.mxu0 0
        %2890 = vmatprep.mubr.bf16.mxu0 0
        %2891 = vmatmul.mubr.bf16.gmra.mrb[0].mxu0 %v2419
        %v2892 = vpop.f32.mrb[0].mxu0
        %v2893 = vadd.f32 %v2844, %v2892
        %v2894 = vpop.f32.mrb[0].mxu0
        %v2895 = vpop.f32.mrb[0].mxu0
        %v2896 = vpop.f32.mrb[0].mxu0
        %2897 = vdwg.mxu0
        %v2898 = vpack.c.bf16 %v2763, %v2763
        %v2899 = vpack.c.bf16 %v2828, %v2828
        %v2900 = vpack.c.bf16 %v2893, %v2893
        %v2902 = vsel %vm938, %v2898, 0
        %v2905 = vsel %vm938, %v2899, 0
        %2907 = vmatprep.subr.bf16.mxu0 0
        %2908 = vmatpush1.bf16.xpose.msra.mxu0 %v2905
        %2909 = vmatprep.subr.bf16.mxu0 0
        %2910 = vmatpush1.bf16.xpose.msra.mxu0 0
        %2911 = vmatprep.subr.bf16.mxu0 0
        %2912 = vmatpush1.bf16.xpose.msra.mxu0 0
        %2913 = vmatprep.subr.bf16.mxu0 0
        %2914 = vmatpush1.bf16.xpose.msra.mxu0 0
        %2915 = vmatprep.subr.bf16.mxu0 0
        %2916 = vmatpush1.bf16.xpose.msra.mxu0 0
        %2917 = vmatprep.subr.bf16.mxu0 0
        %2918 = vmatpush1.bf16.xpose.msra.mxu0 0
        %2919 = vmatprep.subr.bf16.mxu0 0
        %2920 = vmatpush1.bf16.xpose.msra.mxu0 0
        %2921 = vmatprep.subr.bf16.mxu0 0
        %2922 = vmatpush1.bf16.xpose.msra.mxu0 0
        %2923 = vmatprep.subr.bf16.mxu0 0
        %2924 = vmatpush1.bf16.xpose.msra.mxu0 0
        %2925 = vmatprep.subr.bf16.mxu0 0
        %2926 = vmatpush1.bf16.xpose.msra.mxu0 0
        %2927 = vmatprep.subr.bf16.mxu0 0
        %2928 = vmatpush1.bf16.xpose.msra.mxu0 0
        %2929 = vmatprep.subr.bf16.mxu0 0
        %2930 = vmatpush1.bf16.xpose.msra.mxu0 0
        %2931 = vmatprep.subr.bf16.mxu0 0
        %2932 = vmatpush1.bf16.xpose.msra.mxu0 0
        %2933 = vmatprep.subr.bf16.mxu0 0
        %2934 = vmatpush1.bf16.xpose.msra.mxu0 0
        %2935 = vmatprep.subr.bf16.mxu0 0
        %2936 = vmatpush1.bf16.xpose.msra.mxu0 0
        %2937 = vmatprep.subr.bf16.mxu0 0
        %2938 = vmatpush1.bf16.xpose.msra.mxu0 0
        %2939 = vmatprep.mubr.bf16.mxu0 0
        %2940 = vmatmul.mubr.bf16.gmra.mrb[0].mxu0 %v2902
        %v2941 = vpop.f32.mrb[0].mxu0
        %v2942 = vadd.f32 0.0, %v2941
        %v2943 = vpop.f32.mrb[0].mxu0
        %v2944 = vpop.f32.mrb[0].mxu0
        %v2945 = vpop.f32.mrb[0].mxu0
        %2946 = vdwg.mxu0
        %v2947 = vmul.f32 %v2942, 0.35355338
        %v2948 = vsel %vm703, -1e+09, %v2947
        %v2949 = vsel %vm938, %v2948, -inf
        %2950 = vmax.xlane.f32.xlu0 %v2949
        %v2951 = vpop.xlane.xlu0 %2950
        %v2952 = vsub.f32 %v2948, %v2951
        %v2953 = vmul.f32 %v2952, 1.442695
        %v2954 = vpow.pop %v2953
        %v2955 = vsel %vm938, %v2954, 0.0
        %2956 = vadd.xlane.f32.xlu0 %v2955
        %v2957 = vpop.xlane.xlu0 %2956
        %v2958 = vrcp.pop %v2957
        %v2959 = vmul.f32 %v2954, %v2958
        %v2960 = vpack.c.bf16 %v2959, %v2959
        %v2962 = vsel %vm938, %v2960, 0
        %v2965 = vsel %vm1002, %v2900, 0
        %2967 = vmatprep.subr.bf16.mxu0 0
        %2968 = vmatpush1.bf16.msra.mxu0 %v2965
        %2969 = vmatprep.subr.bf16.mxu0 0
        %2970 = vmatpush1.bf16.msra.mxu0 0
        %2971 = vmatprep.subr.bf16.mxu0 0
        %2972 = vmatpush1.bf16.msra.mxu0 0
        %2973 = vmatprep.subr.bf16.mxu0 0
        %2974 = vmatpush1.bf16.msra.mxu0 0
        %2975 = vmatprep.subr.bf16.mxu0 0
        %2976 = vmatpush1.bf16.msra.mxu0 0
        %2977 = vmatprep.subr.bf16.mxu0 0
        %2978 = vmatpush1.bf16.msra.mxu0 0
        %2979 = vmatprep.subr.bf16.mxu0 0
        %2980 = vmatpush1.bf16.msra.mxu0 0
        %2981 = vmatprep.subr.bf16.mxu0 0
        %2982 = vmatpush1.bf16.msra.mxu0 0
        %2983 = vmatprep.subr.bf16.mxu0 0
        %2984 = vmatpush1.bf16.msra.mxu0 0
        %2985 = vmatprep.subr.bf16.mxu0 0
        %2986 = vmatpush1.bf16.msra.mxu0 0
        %2987 = vmatprep.subr.bf16.mxu0 0
        %2988 = vmatpush1.bf16.msra.mxu0 0
        %2989 = vmatprep.subr.bf16.mxu0 0
        %2990 = vmatpush1.bf16.msra.mxu0 0
        %2991 = vmatprep.subr.bf16.mxu0 0
        %2992 = vmatpush1.bf16.msra.mxu0 0
        %2993 = vmatprep.subr.bf16.mxu0 0
        %2994 = vmatpush1.bf16.msra.mxu0 0
        %2995 = vmatprep.subr.bf16.mxu0 0
        %2996 = vmatpush1.bf16.msra.mxu0 0
        %2997 = vmatprep.subr.bf16.mxu0 0
        %2998 = vmatpush1.bf16.msra.mxu0 0
        %2999 = vmatprep.mubr.bf16.mxu0 0
        %3000 = vmatmul.mubr.bf16.gmra.mrb[0].mxu0 %v2962
        %v3001 = vpop.f32.mrb[0].mxu0
        %v3002 = vadd.f32 0.0, %v3001
        %v3003 = vpop.f32.mrb[0].mxu0
        %v3004 = vpop.f32.mrb[0].mxu0
        %v3005 = vpop.f32.mrb[0].mxu0
        %3006 = vdwg.mxu0
        %v3007 = vpack.c.bf16 %v3002, %v3002
        %s3008 = scalar_lea.vmem %s10, 20
        %v3009 = vld [vmem:[%s3008] sm:$0xf]
        %v3011 = vsel %vm938, %v3007, 0
        %v3014 = vsel %vm1002, %v3009, 0
        %3016 = vmatprep.subr.bf16.mxu0 0
        %3017 = vmatpush1.bf16.msra.mxu0 %v3014
        %3018 = vmatprep.subr.bf16.mxu0 0
        %3019 = vmatpush1.bf16.msra.mxu0 0
        %3020 = vmatprep.subr.bf16.mxu0 0
        %3021 = vmatpush1.bf16.msra.mxu0 0
        %3022 = vmatprep.subr.bf16.mxu0 0
        %3023 = vmatpush1.bf16.msra.mxu0 0
        %3024 = vmatprep.subr.bf16.mxu0 0
        %3025 = vmatpush1.bf16.msra.mxu0 0
        %3026 = vmatprep.subr.bf16.mxu0 0
        %3027 = vmatpush1.bf16.msra.mxu0 0
        %3028 = vmatprep.subr.bf16.mxu0 0
        %3029 = vmatpush1.bf16.msra.mxu0 0
        %3030 = vmatprep.subr.bf16.mxu0 0
        %3031 = vmatpush1.bf16.msra.mxu0 0
        %3032 = vmatprep.subr.bf16.mxu0 0
        %3033 = vmatpush1.bf16.msra.mxu0 0
        %3034 = vmatprep.subr.bf16.mxu0 0
        %3035 = vmatpush1.bf16.msra.mxu0 0
        %3036 = vmatprep.subr.bf16.mxu0 0
        %3037 = vmatpush1.bf16.msra.mxu0 0
        %3038 = vmatprep.subr.bf16.mxu0 0
        %3039 = vmatpush1.bf16.msra.mxu0 0
        %3040 = vmatprep.subr.bf16.mxu0 0
        %3041 = vmatpush1.bf16.msra.mxu0 0
        %3042 = vmatprep.subr.bf16.mxu0 0
        %3043 = vmatpush1.bf16.msra.mxu0 0
        %3044 = vmatprep.subr.bf16.mxu0 0
        %3045 = vmatpush1.bf16.msra.mxu0 0
        %3046 = vmatprep.subr.bf16.mxu0 0
        %3047 = vmatpush1.bf16.msra.mxu0 0
        %3048 = vmatprep.mubr.bf16.mxu0 0
        %3049 = vmatmul.mubr.bf16.gmra.mrb[0].mxu0 %v3011
        %v3050 = vpop.f32.mrb[0].mxu0
        %v3051 = vadd.f32 0.0, %v3050
        %v3052 = vpop.f32.mrb[0].mxu0
        %v3053 = vpop.f32.mrb[0].mxu0
        %v3054 = vpop.f32.mrb[0].mxu0
        %3055 = vdwg.mxu0
        %v3057 = vsel %vm938, %v2700, 0
        %v3060 = vsel %vm1002, %v2702, 0
        %3062 = vmatprep.subr.bf16.mxu0 0
        %3063 = vmatpush1.bf16.msra.mxu0 %v3060
        %3064 = vmatprep.subr.bf16.mxu0 0
        %3065 = vmatpush1.bf16.msra.mxu0 0
        %3066 = vmatprep.subr.bf16.mxu0 0
        %3067 = vmatpush1.bf16.msra.mxu0 0
        %3068 = vmatprep.subr.bf16.mxu0 0
        %3069 = vmatpush1.bf16.msra.mxu0 0
        %3070 = vmatprep.subr.bf16.mxu0 0
        %3071 = vmatpush1.bf16.msra.mxu0 0
        %3072 = vmatprep.subr.bf16.mxu0 0
        %3073 = vmatpush1.bf16.msra.mxu0 0
        %3074 = vmatprep.subr.bf16.mxu0 0
        %3075 = vmatpush1.bf16.msra.mxu0 0
        %3076 = vmatprep.subr.bf16.mxu0 0
        %3077 = vmatpush1.bf16.msra.mxu0 0
        %3078 = vmatprep.subr.bf16.mxu0 0
        %3079 = vmatpush1.bf16.msra.mxu0 0
        %3080 = vmatprep.subr.bf16.mxu0 0
        %3081 = vmatpush1.bf16.msra.mxu0 0
        %3082 = vmatprep.subr.bf16.mxu0 0
        %3083 = vmatpush1.bf16.msra.mxu0 0
        %3084 = vmatprep.subr.bf16.mxu0 0
        %3085 = vmatpush1.bf16.msra.mxu0 0
        %3086 = vmatprep.subr.bf16.mxu0 0
        %3087 = vmatpush1.bf16.msra.mxu0 0
        %3088 = vmatprep.subr.bf16.mxu0 0
        %3089 = vmatpush1.bf16.msra.mxu0 0
        %3090 = vmatprep.subr.bf16.mxu0 0
        %3091 = vmatpush1.bf16.msra.mxu0 0
        %3092 = vmatprep.subr.bf16.mxu0 0
        %3093 = vmatpush1.bf16.msra.mxu0 0
        %3094 = vmatprep.mubr.bf16.mxu0 0
        %3095 = vmatmul.mubr.bf16.gmra.mrb[0].mxu0 %v3057
        %v3096 = vpop.f32.mrb[0].mxu0
        %v3097 = vadd.f32 %v3051, %v3096
        %v3098 = vpop.f32.mrb[0].mxu0
        %v3099 = vpop.f32.mrb[0].mxu0
        %v3100 = vpop.f32.mrb[0].mxu0
        %3101 = vdwg.mxu0
        %s3102 = scalar_lea.vmem %s4, 96
        %v3103 = vld [vmem:[%s3102] sm:$0xf]
        %v3104 = vld [vmem:[%s3102 + $0x4] sm:$0xf]
        %v3105 = vld [vmem:[%s3102 + $0x8] sm:$0xf]
        %v3106 = vld [vmem:[%s3102 + $0xc] sm:$0xf]
        %s3107 = scalar_lea.vmem %s5, 6
        %v3108 = vld [vmem:[%s3107] sm:$0x1]
        %v3110 = vlaneseq
        %v3111 = vshrl.u32 %v3110, 7
        %v3112 = vsub.s32 0, %v3111
        %v3113 = vrot.slane %v3108, %v3112
        %v3119 = vunpack.c.l.b16 %v3103
        %v3120 = vunpack.c.l.b16 %v3104
        %v3121 = vunpack.c.l.b16 %v3105
        %v3122 = vunpack.c.l.b16 %v3106
        %v3123 = vpack.c.b16 %v3120, %v3119
        %v3124 = vpack.c.b16 %v3122, %v3121
        %3127 = vmatprep.subr.bf16.mxu0 0
        %3128 = vmatpush1.bf16.msra.mxu0 %v3123
        %3129 = vmatprep.subr.bf16.mxu0 0
        %3130 = vmatpush1.bf16.msra.mxu0 %v3124
        %3131 = vmatprep.subr.bf16.mxu0 0
        %3132 = vmatpush1.bf16.msra.mxu0 0
        %3133 = vmatprep.subr.bf16.mxu0 0
        %3134 = vmatpush1.bf16.msra.mxu0 0
        %3135 = vmatprep.subr.bf16.mxu0 0
        %3136 = vmatpush1.bf16.msra.mxu0 0
        %3137 = vmatprep.subr.bf16.mxu0 0
        %3138 = vmatpush1.bf16.msra.mxu0 0
        %3139 = vmatprep.subr.bf16.mxu0 0
        %3140 = vmatpush1.bf16.msra.mxu0 0
        %3141 = vmatprep.subr.bf16.mxu0 0
        %3142 = vmatpush1.bf16.msra.mxu0 0
        %3143 = vmatprep.subr.bf16.mxu0 0
        %3144 = vmatpush1.bf16.msra.mxu0 0
        %3145 = vmatprep.subr.bf16.mxu0 0
        %3146 = vmatpush1.bf16.msra.mxu0 0
        %3147 = vmatprep.subr.bf16.mxu0 0
        %3148 = vmatpush1.bf16.msra.mxu0 0
        %3149 = vmatprep.subr.bf16.mxu0 0
        %3150 = vmatpush1.bf16.msra.mxu0 0
        %3151 = vmatprep.subr.bf16.mxu0 0
        %3152 = vmatpush1.bf16.msra.mxu0 0
        %3153 = vmatprep.subr.bf16.mxu0 0
        %3154 = vmatpush1.bf16.msra.mxu0 0
        %3155 = vmatprep.subr.bf16.mxu0 0
        %3156 = vmatpush1.bf16.msra.mxu0 0
        %3157 = vmatprep.subr.bf16.mxu0 0
        %3158 = vmatpush1.bf16.msra.mxu0 0
        %3159 = vmatprep.mubr.bf16.mxu0 0
        %3160 = vmatmul.mubr.bf16.gmra.mrb[0].mxu0 %v2419
        %v3161 = vpop.f32.mrb[0].mxu0
        %v3162 = vadd.f32 %v3113, %v3161
        %v3163 = vpop.f32.mrb[0].mxu0
        %v3164 = vpop.f32.mrb[0].mxu0
        %v3165 = vpop.f32.mrb[0].mxu0
        %3166 = vdwg.mxu0
        %s3167 = scalar_lea.vmem %s6, 96
        %v3168 = vld [vmem:[%s3167] sm:$0xf]
        %v3169 = vld [vmem:[%s3167 + $0x4] sm:$0xf]
        %v3170 = vld [vmem:[%s3167 + $0x8] sm:$0xf]
        %v3171 = vld [vmem:[%s3167 + $0xc] sm:$0xf]
        %s3172 = scalar_lea.vmem %s7, 6
        %v3173 = vld [vmem:[%s3172] sm:$0x1]
        %v3175 = vlaneseq
        %v3176 = vshrl.u32 %v3175, 7
        %v3177 = vsub.s32 0, %v3176
        %v3178 = vrot.slane %v3173, %v3177
        %v3184 = vunpack.c.l.b16 %v3168
        %v3185 = vunpack.c.l.b16 %v3169
        %v3186 = vunpack.c.l.b16 %v3170
        %v3187 = vunpack.c.l.b16 %v3171
        %v3188 = vpack.c.b16 %v3185, %v3184
        %v3189 = vpack.c.b16 %v3187, %v3186
        %3192 = vmatprep.subr.bf16.mxu0 0
        %3193 = vmatpush1.bf16.msra.mxu0 %v3188
        %3194 = vmatprep.subr.bf16.mxu0 0
        %3195 = vmatpush1.bf16.msra.mxu0 %v3189
        %3196 = vmatprep.subr.bf16.mxu0 0
        %3197 = vmatpush1.bf16.msra.mxu0 0
        %3198 = vmatprep.subr.bf16.mxu0 0
        %3199 = vmatpush1.bf16.msra.mxu0 0
        %3200 = vmatprep.subr.bf16.mxu0 0
        %3201 = vmatpush1.bf16.msra.mxu0 0
        %3202 = vmatprep.subr.bf16.mxu0 0
        %3203 = vmatpush1.bf16.msra.mxu0 0
        %3204 = vmatprep.subr.bf16.mxu0 0
        %3205 = vmatpush1.bf16.msra.mxu0 0
        %3206 = vmatprep.subr.bf16.mxu0 0
        %3207 = vmatpush1.bf16.msra.mxu0 0
        %3208 = vmatprep.subr.bf16.mxu0 0
        %3209 = vmatpush1.bf16.msra.mxu0 0
        %3210 = vmatprep.subr.bf16.mxu0 0
        %3211 = vmatpush1.bf16.msra.mxu0 0
        %3212 = vmatprep.subr.bf16.mxu0 0
        %3213 = vmatpush1.bf16.msra.mxu0 0
        %3214 = vmatprep.subr.bf16.mxu0 0
        %3215 = vmatpush1.bf16.msra.mxu0 0
        %3216 = vmatprep.subr.bf16.mxu0 0
        %3217 = vmatpush1.bf16.msra.mxu0 0
        %3218 = vmatprep.subr.bf16.mxu0 0
        %3219 = vmatpush1.bf16.msra.mxu0 0
        %3220 = vmatprep.subr.bf16.mxu0 0
        %3221 = vmatpush1.bf16.msra.mxu0 0
        %3222 = vmatprep.subr.bf16.mxu0 0
        %3223 = vmatpush1.bf16.msra.mxu0 0
        %3224 = vmatprep.mubr.bf16.mxu0 0
        %3225 = vmatmul.mubr.bf16.gmra.mrb[0].mxu0 %v2419
        %v3226 = vpop.f32.mrb[0].mxu0
        %v3227 = vadd.f32 %v3178, %v3226
        %v3228 = vpop.f32.mrb[0].mxu0
        %v3229 = vpop.f32.mrb[0].mxu0
        %v3230 = vpop.f32.mrb[0].mxu0
        %3231 = vdwg.mxu0
        %s3232 = scalar_lea.vmem %s8, 96
        %v3233 = vld [vmem:[%s3232] sm:$0xf]
        %v3234 = vld [vmem:[%s3232 + $0x4] sm:$0xf]
        %v3235 = vld [vmem:[%s3232 + $0x8] sm:$0xf]
        %v3236 = vld [vmem:[%s3232 + $0xc] sm:$0xf]
        %s3237 = scalar_lea.vmem %s9, 6
        %v3238 = vld [vmem:[%s3237] sm:$0x1]
        %v3240 = vlaneseq
        %v3241 = vshrl.u32 %v3240, 7
        %v3242 = vsub.s32 0, %v3241
        %v3243 = vrot.slane %v3238, %v3242
        %v3249 = vunpack.c.l.b16 %v3233
        %v3250 = vunpack.c.l.b16 %v3234
        %v3251 = vunpack.c.l.b16 %v3235
        %v3252 = vunpack.c.l.b16 %v3236
        %v3253 = vpack.c.b16 %v3250, %v3249
        %v3254 = vpack.c.b16 %v3252, %v3251
        %3257 = vmatprep.subr.bf16.mxu0 0
        %3258 = vmatpush1.bf16.msra.mxu0 %v3253
        %3259 = vmatprep.subr.bf16.mxu0 0
        %3260 = vmatpush1.bf16.msra.mxu0 %v3254
        %3261 = vmatprep.subr.bf16.mxu0 0
        %3262 = vmatpush1.bf16.msra.mxu0 0
        %3263 = vmatprep.subr.bf16.mxu0 0
        %3264 = vmatpush1.bf16.msra.mxu0 0
        %3265 = vmatprep.subr.bf16.mxu0 0
        %3266 = vmatpush1.bf16.msra.mxu0 0
        %3267 = vmatprep.subr.bf16.mxu0 0
        %3268 = vmatpush1.bf16.msra.mxu0 0
        %3269 = vmatprep.subr.bf16.mxu0 0
        %3270 = vmatpush1.bf16.msra.mxu0 0
        %3271 = vmatprep.subr.bf16.mxu0 0
        %3272 = vmatpush1.bf16.msra.mxu0 0
        %3273 = vmatprep.subr.bf16.mxu0 0
        %3274 = vmatpush1.bf16.msra.mxu0 0
        %3275 = vmatprep.subr.bf16.mxu0 0
        %3276 = vmatpush1.bf16.msra.mxu0 0
        %3277 = vmatprep.subr.bf16.mxu0 0
        %3278 = vmatpush1.bf16.msra.mxu0 0
        %3279 = vmatprep.subr.bf16.mxu0 0
        %3280 = vmatpush1.bf16.msra.mxu0 0
        %3281 = vmatprep.subr.bf16.mxu0 0
        %3282 = vmatpush1.bf16.msra.mxu0 0
        %3283 = vmatprep.subr.bf16.mxu0 0
        %3284 = vmatpush1.bf16.msra.mxu0 0
        %3285 = vmatprep.subr.bf16.mxu0 0
        %3286 = vmatpush1.bf16.msra.mxu0 0
        %3287 = vmatprep.subr.bf16.mxu0 0
        %3288 = vmatpush1.bf16.msra.mxu0 0
        %3289 = vmatprep.mubr.bf16.mxu0 0
        %3290 = vmatmul.mubr.bf16.gmra.mrb[0].mxu0 %v2419
        %v3291 = vpop.f32.mrb[0].mxu0
        %v3292 = vadd.f32 %v3243, %v3291
        %v3293 = vpop.f32.mrb[0].mxu0
        %v3294 = vpop.f32.mrb[0].mxu0
        %v3295 = vpop.f32.mrb[0].mxu0
        %3296 = vdwg.mxu0
        %v3297 = vpack.c.bf16 %v3162, %v3162
        %v3298 = vpack.c.bf16 %v3227, %v3227
        %v3299 = vpack.c.bf16 %v3292, %v3292
        %v3301 = vsel %vm938, %v3297, 0
        %v3304 = vsel %vm938, %v3298, 0
        %3306 = vmatprep.subr.bf16.mxu0 0
        %3307 = vmatpush1.bf16.xpose.msra.mxu0 %v3304
        %3308 = vmatprep.subr.bf16.mxu0 0
        %3309 = vmatpush1.bf16.xpose.msra.mxu0 0
        %3310 = vmatprep.subr.bf16.mxu0 0
        %3311 = vmatpush1.bf16.xpose.msra.mxu0 0
        %3312 = vmatprep.subr.bf16.mxu0 0
        %3313 = vmatpush1.bf16.xpose.msra.mxu0 0
        %3314 = vmatprep.subr.bf16.mxu0 0
        %3315 = vmatpush1.bf16.xpose.msra.mxu0 0
        %3316 = vmatprep.subr.bf16.mxu0 0
        %3317 = vmatpush1.bf16.xpose.msra.mxu0 0
        %3318 = vmatprep.subr.bf16.mxu0 0
        %3319 = vmatpush1.bf16.xpose.msra.mxu0 0
        %3320 = vmatprep.subr.bf16.mxu0 0
        %3321 = vmatpush1.bf16.xpose.msra.mxu0 0
        %3322 = vmatprep.subr.bf16.mxu0 0
        %3323 = vmatpush1.bf16.xpose.msra.mxu0 0
        %3324 = vmatprep.subr.bf16.mxu0 0
        %3325 = vmatpush1.bf16.xpose.msra.mxu0 0
        %3326 = vmatprep.subr.bf16.mxu0 0
        %3327 = vmatpush1.bf16.xpose.msra.mxu0 0
        %3328 = vmatprep.subr.bf16.mxu0 0
        %3329 = vmatpush1.bf16.xpose.msra.mxu0 0
        %3330 = vmatprep.subr.bf16.mxu0 0
        %3331 = vmatpush1.bf16.xpose.msra.mxu0 0
        %3332 = vmatprep.subr.bf16.mxu0 0
        %3333 = vmatpush1.bf16.xpose.msra.mxu0 0
        %3334 = vmatprep.subr.bf16.mxu0 0
        %3335 = vmatpush1.bf16.xpose.msra.mxu0 0
        %3336 = vmatprep.subr.bf16.mxu0 0
        %3337 = vmatpush1.bf16.xpose.msra.mxu0 0
        %3338 = vmatprep.mubr.bf16.mxu0 0
        %3339 = vmatmul.mubr.bf16.gmra.mrb[0].mxu0 %v3301
        %v3340 = vpop.f32.mrb[0].mxu0
        %v3341 = vadd.f32 0.0, %v3340
        %v3342 = vpop.f32.mrb[0].mxu0
        %v3343 = vpop.f32.mrb[0].mxu0
        %v3344 = vpop.f32.mrb[0].mxu0
        %3345 = vdwg.mxu0
        %v3346 = vmul.f32 %v3341, 0.35355338
        %v3347 = vsel %vm703, -1e+09, %v3346
        %v3348 = vsel %vm938, %v3347, -inf
        %3349 = vmax.xlane.f32.xlu0 %v3348
        %v3350 = vpop.xlane.xlu0 %3349
        %v3351 = vsub.f32 %v3347, %v3350
        %v3352 = vmul.f32 %v3351, 1.442695
        %v3353 = vpow.pop %v3352
        %v3354 = vsel %vm938, %v3353, 0.0
        %3355 = vadd.xlane.f32.xlu0 %v3354
        %v3356 = vpop.xlane.xlu0 %3355
        %v3357 = vrcp.pop %v3356
        %v3358 = vmul.f32 %v3353, %v3357
        %v3359 = vpack.c.bf16 %v3358, %v3358
        %v3361 = vsel %vm938, %v3359, 0
        %v3364 = vsel %vm1002, %v3299, 0
        %3366 = vmatprep.subr.bf16.mxu0 0
        %3367 = vmatpush1.bf16.msra.mxu0 %v3364
        %3368 = vmatprep.subr.bf16.mxu0 0
        %3369 = vmatpush1.bf16.msra.mxu0 0
        %3370 = vmatprep.subr.bf16.mxu0 0
        %3371 = vmatpush1.bf16.msra.mxu0 0
        %3372 = vmatprep.subr.bf16.mxu0 0
        %3373 = vmatpush1.bf16.msra.mxu0 0
        %3374 = vmatprep.subr.bf16.mxu0 0
        %3375 = vmatpush1.bf16.msra.mxu0 0
        %3376 = vmatprep.subr.bf16.mxu0 0
        %3377 = vmatpush1.bf16.msra.mxu0 0
        %3378 = vmatprep.subr.bf16.mxu0 0
        %3379 = vmatpush1.bf16.msra.mxu0 0
        %3380 = vmatprep.subr.bf16.mxu0 0
        %3381 = vmatpush1.bf16.msra.mxu0 0
        %3382 = vmatprep.subr.bf16.mxu0 0
        %3383 = vmatpush1.bf16.msra.mxu0 0
        %3384 = vmatprep.subr.bf16.mxu0 0
        %3385 = vmatpush1.bf16.msra.mxu0 0
        %3386 = vmatprep.subr.bf16.mxu0 0
        %3387 = vmatpush1.bf16.msra.mxu0 0
        %3388 = vmatprep.subr.bf16.mxu0 0
        %3389 = vmatpush1.bf16.msra.mxu0 0
        %3390 = vmatprep.subr.bf16.mxu0 0
        %3391 = vmatpush1.bf16.msra.mxu0 0
        %3392 = vmatprep.subr.bf16.mxu0 0
        %3393 = vmatpush1.bf16.msra.mxu0 0
        %3394 = vmatprep.subr.bf16.mxu0 0
        %3395 = vmatpush1.bf16.msra.mxu0 0
        %3396 = vmatprep.subr.bf16.mxu0 0
        %3397 = vmatpush1.bf16.msra.mxu0 0
        %3398 = vmatprep.mubr.bf16.mxu0 0
        %3399 = vmatmul.mubr.bf16.gmra.mrb[0].mxu0 %v3361
        %v3400 = vpop.f32.mrb[0].mxu0
        %v3401 = vadd.f32 0.0, %v3400
        %v3402 = vpop.f32.mrb[0].mxu0
        %v3403 = vpop.f32.mrb[0].mxu0
        %v3404 = vpop.f32.mrb[0].mxu0
        %3405 = vdwg.mxu0
        %v3406 = vpack.c.bf16 %v3401, %v3401
        %s3407 = scalar_lea.vmem %s10, 24
        %v3408 = vld [vmem:[%s3407] sm:$0xf]
        %v3410 = vsel %vm938, %v3406, 0
        %v3413 = vsel %vm1002, %v3408, 0
        %3415 = vmatprep.subr.bf16.mxu0 0
        %3416 = vmatpush1.bf16.msra.mxu0 %v3413
        %3417 = vmatprep.subr.bf16.mxu0 0
        %3418 = vmatpush1.bf16.msra.mxu0 0
        %3419 = vmatprep.subr.bf16.mxu0 0
        %3420 = vmatpush1.bf16.msra.mxu0 0
        %3421 = vmatprep.subr.bf16.mxu0 0
        %3422 = vmatpush1.bf16.msra.mxu0 0
        %3423 = vmatprep.subr.bf16.mxu0 0
        %3424 = vmatpush1.bf16.msra.mxu0 0
        %3425 = vmatprep.subr.bf16.mxu0 0
        %3426 = vmatpush1.bf16.msra.mxu0 0
        %3427 = vmatprep.subr.bf16.mxu0 0
        %3428 = vmatpush1.bf16.msra.mxu0 0
        %3429 = vmatprep.subr.bf16.mxu0 0
        %3430 = vmatpush1.bf16.msra.mxu0 0
        %3431 = vmatprep.subr.bf16.mxu0 0
        %3432 = vmatpush1.bf16.msra.mxu0 0
        %3433 = vmatprep.subr.bf16.mxu0 0
        %3434 = vmatpush1.bf16.msra.mxu0 0
        %3435 = vmatprep.subr.bf16.mxu0 0
        %3436 = vmatpush1.bf16.msra.mxu0 0
        %3437 = vmatprep.subr.bf16.mxu0 0
        %3438 = vmatpush1.bf16.msra.mxu0 0
        %3439 = vmatprep.subr.bf16.mxu0 0
        %3440 = vmatpush1.bf16.msra.mxu0 0
        %3441 = vmatprep.subr.bf16.mxu0 0
        %3442 = vmatpush1.bf16.msra.mxu0 0
        %3443 = vmatprep.subr.bf16.mxu0 0
        %3444 = vmatpush1.bf16.msra.mxu0 0
        %3445 = vmatprep.subr.bf16.mxu0 0
        %3446 = vmatpush1.bf16.msra.mxu0 0
        %3447 = vmatprep.mubr.bf16.mxu0 0
        %3448 = vmatmul.mubr.bf16.gmra.mrb[0].mxu0 %v3410
        %v3449 = vpop.f32.mrb[0].mxu0
        %v3450 = vadd.f32 0.0, %v3449
        %v3451 = vpop.f32.mrb[0].mxu0
        %v3452 = vpop.f32.mrb[0].mxu0
        %v3453 = vpop.f32.mrb[0].mxu0
        %3454 = vdwg.mxu0
        %v3455 = vadd.f32 %v3097, %v3450
        %s3456 = scalar_lea.vmem %s4, 112
        %v3457 = vld [vmem:[%s3456] sm:$0xf]
        %v3458 = vld [vmem:[%s3456 + $0x4] sm:$0xf]
        %v3459 = vld [vmem:[%s3456 + $0x8] sm:$0xf]
        %v3460 = vld [vmem:[%s3456 + $0xc] sm:$0xf]
        %s3461 = scalar_lea.vmem %s5, 7
        %v3462 = vld [vmem:[%s3461] sm:$0x1]
        %v3464 = vlaneseq
        %v3465 = vshrl.u32 %v3464, 7
        %v3466 = vsub.s32 0, %v3465
        %v3467 = vrot.slane %v3462, %v3466
        %v3473 = vunpack.c.l.b16 %v3457
        %v3474 = vunpack.c.l.b16 %v3458
        %v3475 = vunpack.c.l.b16 %v3459
        %v3476 = vunpack.c.l.b16 %v3460
        %v3477 = vpack.c.b16 %v3474, %v3473
        %v3478 = vpack.c.b16 %v3476, %v3475
        %3481 = vmatprep.subr.bf16.mxu0 0
        %3482 = vmatpush1.bf16.msra.mxu0 %v3477
        %3483 = vmatprep.subr.bf16.mxu0 0
        %3484 = vmatpush1.bf16.msra.mxu0 %v3478
        %3485 = vmatprep.subr.bf16.mxu0 0
        %3486 = vmatpush1.bf16.msra.mxu0 0
        %3487 = vmatprep.subr.bf16.mxu0 0
        %3488 = vmatpush1.bf16.msra.mxu0 0
        %3489 = vmatprep.subr.bf16.mxu0 0
        %3490 = vmatpush1.bf16.msra.mxu0 0
        %3491 = vmatprep.subr.bf16.mxu0 0
        %3492 = vmatpush1.bf16.msra.mxu0 0
        %3493 = vmatprep.subr.bf16.mxu0 0
        %3494 = vmatpush1.bf16.msra.mxu0 0
        %3495 = vmatprep.subr.bf16.mxu0 0
        %3496 = vmatpush1.bf16.msra.mxu0 0
        %3497 = vmatprep.subr.bf16.mxu0 0
        %3498 = vmatpush1.bf16.msra.mxu0 0
        %3499 = vmatprep.subr.bf16.mxu0 0
        %3500 = vmatpush1.bf16.msra.mxu0 0
        %3501 = vmatprep.subr.bf16.mxu0 0
        %3502 = vmatpush1.bf16.msra.mxu0 0
        %3503 = vmatprep.subr.bf16.mxu0 0
        %3504 = vmatpush1.bf16.msra.mxu0 0
        %3505 = vmatprep.subr.bf16.mxu0 0
        %3506 = vmatpush1.bf16.msra.mxu0 0
        %3507 = vmatprep.subr.bf16.mxu0 0
        %3508 = vmatpush1.bf16.msra.mxu0 0
        %3509 = vmatprep.subr.bf16.mxu0 0
        %3510 = vmatpush1.bf16.msra.mxu0 0
        %3511 = vmatprep.subr.bf16.mxu0 0
        %3512 = vmatpush1.bf16.msra.mxu0 0
        %3513 = vmatprep.mubr.bf16.mxu0 0
        %3514 = vmatmul.mubr.bf16.gmra.mrb[0].mxu0 %v2419
        %v3515 = vpop.f32.mrb[0].mxu0
        %v3516 = vadd.f32 %v3467, %v3515
        %v3517 = vpop.f32.mrb[0].mxu0
        %v3518 = vpop.f32.mrb[0].mxu0
        %v3519 = vpop.f32.mrb[0].mxu0
        %3520 = vdwg.mxu0
        %s3521 = scalar_lea.vmem %s6, 112
        %v3522 = vld [vmem:[%s3521] sm:$0xf]
        %v3523 = vld [vmem:[%s3521 + $0x4] sm:$0xf]
        %v3524 = vld [vmem:[%s3521 + $0x8] sm:$0xf]
        %v3525 = vld [vmem:[%s3521 + $0xc] sm:$0xf]
        %s3526 = scalar_lea.vmem %s7, 7
        %v3527 = vld [vmem:[%s3526] sm:$0x1]
        %v3529 = vlaneseq
        %v3530 = vshrl.u32 %v3529, 7
        %v3531 = vsub.s32 0, %v3530
        %v3532 = vrot.slane %v3527, %v3531
        %v3538 = vunpack.c.l.b16 %v3522
        %v3539 = vunpack.c.l.b16 %v3523
        %v3540 = vunpack.c.l.b16 %v3524
        %v3541 = vunpack.c.l.b16 %v3525
        %v3542 = vpack.c.b16 %v3539, %v3538
        %v3543 = vpack.c.b16 %v3541, %v3540
        %3546 = vmatprep.subr.bf16.mxu0 0
        %3547 = vmatpush1.bf16.msra.mxu0 %v3542
        %3548 = vmatprep.subr.bf16.mxu0 0
        %3549 = vmatpush1.bf16.msra.mxu0 %v3543
        %3550 = vmatprep.subr.bf16.mxu0 0
        %3551 = vmatpush1.bf16.msra.mxu0 0
        %3552 = vmatprep.subr.bf16.mxu0 0
        %3553 = vmatpush1.bf16.msra.mxu0 0
        %3554 = vmatprep.subr.bf16.mxu0 0
        %3555 = vmatpush1.bf16.msra.mxu0 0
        %3556 = vmatprep.subr.bf16.mxu0 0
        %3557 = vmatpush1.bf16.msra.mxu0 0
        %3558 = vmatprep.subr.bf16.mxu0 0
        %3559 = vmatpush1.bf16.msra.mxu0 0
        %3560 = vmatprep.subr.bf16.mxu0 0
        %3561 = vmatpush1.bf16.msra.mxu0 0
        %3562 = vmatprep.subr.bf16.mxu0 0
        %3563 = vmatpush1.bf16.msra.mxu0 0
        %3564 = vmatprep.subr.bf16.mxu0 0
        %3565 = vmatpush1.bf16.msra.mxu0 0
        %3566 = vmatprep.subr.bf16.mxu0 0
        %3567 = vmatpush1.bf16.msra.mxu0 0
        %3568 = vmatprep.subr.bf16.mxu0 0
        %3569 = vmatpush1.bf16.msra.mxu0 0
        %3570 = vmatprep.subr.bf16.mxu0 0
        %3571 = vmatpush1.bf16.msra.mxu0 0
        %3572 = vmatprep.subr.bf16.mxu0 0
        %3573 = vmatpush1.bf16.msra.mxu0 0
        %3574 = vmatprep.subr.bf16.mxu0 0
        %3575 = vmatpush1.bf16.msra.mxu0 0
        %3576 = vmatprep.subr.bf16.mxu0 0
        %3577 = vmatpush1.bf16.msra.mxu0 0
        %3578 = vmatprep.mubr.bf16.mxu0 0
        %3579 = vmatmul.mubr.bf16.gmra.mrb[0].mxu0 %v2419
        %v3580 = vpop.f32.mrb[0].mxu0
        %v3581 = vadd.f32 %v3532, %v3580
        %v3582 = vpop.f32.mrb[0].mxu0
        %v3583 = vpop.f32.mrb[0].mxu0
        %v3584 = vpop.f32.mrb[0].mxu0
        %3585 = vdwg.mxu0
        %s3586 = scalar_lea.vmem %s8, 112
        %v3587 = vld [vmem:[%s3586] sm:$0xf]
        %v3588 = vld [vmem:[%s3586 + $0x4] sm:$0xf]
        %v3589 = vld [vmem:[%s3586 + $0x8] sm:$0xf]
        %v3590 = vld [vmem:[%s3586 + $0xc] sm:$0xf]
        %s3591 = scalar_lea.vmem %s9, 7
        %v3592 = vld [vmem:[%s3591] sm:$0x1]
        %v3594 = vlaneseq
        %v3595 = vshrl.u32 %v3594, 7
        %v3596 = vsub.s32 0, %v3595
        %v3597 = vrot.slane %v3592, %v3596
        %v3603 = vunpack.c.l.b16 %v3587
        %v3604 = vunpack.c.l.b16 %v3588
        %v3605 = vunpack.c.l.b16 %v3589
        %v3606 = vunpack.c.l.b16 %v3590
        %v3607 = vpack.c.b16 %v3604, %v3603
        %v3608 = vpack.c.b16 %v3606, %v3605
        %3611 = vmatprep.subr.bf16.mxu0 0
        %3612 = vmatpush1.bf16.msra.mxu0 %v3607
        %3613 = vmatprep.subr.bf16.mxu0 0
        %3614 = vmatpush1.bf16.msra.mxu0 %v3608
        %3615 = vmatprep.subr.bf16.mxu0 0
        %3616 = vmatpush1.bf16.msra.mxu0 0
        %3617 = vmatprep.subr.bf16.mxu0 0
        %3618 = vmatpush1.bf16.msra.mxu0 0
        %3619 = vmatprep.subr.bf16.mxu0 0
        %3620 = vmatpush1.bf16.msra.mxu0 0
        %3621 = vmatprep.subr.bf16.mxu0 0
        %3622 = vmatpush1.bf16.msra.mxu0 0
        %3623 = vmatprep.subr.bf16.mxu0 0
        %3624 = vmatpush1.bf16.msra.mxu0 0
        %3625 = vmatprep.subr.bf16.mxu0 0
        %3626 = vmatpush1.bf16.msra.mxu0 0
        %3627 = vmatprep.subr.bf16.mxu0 0
        %3628 = vmatpush1.bf16.msra.mxu0 0
        %3629 = vmatprep.subr.bf16.mxu0 0
        %3630 = vmatpush1.bf16.msra.mxu0 0
        %3631 = vmatprep.subr.bf16.mxu0 0
        %3632 = vmatpush1.bf16.msra.mxu0 0
        %3633 = vmatprep.subr.bf16.mxu0 0
        %3634 = vmatpush1.bf16.msra.mxu0 0
        %3635 = vmatprep.subr.bf16.mxu0 0
        %3636 = vmatpush1.bf16.msra.mxu0 0
        %3637 = vmatprep.subr.bf16.mxu0 0
        %3638 = vmatpush1.bf16.msra.mxu0 0
        %3639 = vmatprep.subr.bf16.mxu0 0
        %3640 = vmatpush1.bf16.msra.mxu0 0
        %3641 = vmatprep.subr.bf16.mxu0 0
        %3642 = vmatpush1.bf16.msra.mxu0 0
        %3643 = vmatprep.mubr.bf16.mxu0 0
        %3644 = vmatmul.mubr.bf16.gmra.mrb[0].mxu0 %v2419
        %v3645 = vpop.f32.mrb[0].mxu0
        %v3646 = vadd.f32 %v3597, %v3645
        %v3647 = vpop.f32.mrb[0].mxu0
        %v3648 = vpop.f32.mrb[0].mxu0
        %v3649 = vpop.f32.mrb[0].mxu0
        %3650 = vdwg.mxu0
        %v3651 = vpack.c.bf16 %v3516, %v3516
        %v3652 = vpack.c.bf16 %v3581, %v3581
        %v3653 = vpack.c.bf16 %v3646, %v3646
        %v3655 = vsel %vm938, %v3651, 0
        %v3658 = vsel %vm938, %v3652, 0
        %3660 = vmatprep.subr.bf16.mxu0 0
        %3661 = vmatpush1.bf16.xpose.msra.mxu0 %v3658
        %3662 = vmatprep.subr.bf16.mxu0 0
        %3663 = vmatpush1.bf16.xpose.msra.mxu0 0
        %3664 = vmatprep.subr.bf16.mxu0 0
        %3665 = vmatpush1.bf16.xpose.msra.mxu0 0
        %3666 = vmatprep.subr.bf16.mxu0 0
        %3667 = vmatpush1.bf16.xpose.msra.mxu0 0
        %3668 = vmatprep.subr.bf16.mxu0 0
        %3669 = vmatpush1.bf16.xpose.msra.mxu0 0
        %3670 = vmatprep.subr.bf16.mxu0 0
        %3671 = vmatpush1.bf16.xpose.msra.mxu0 0
        %3672 = vmatprep.subr.bf16.mxu0 0
        %3673 = vmatpush1.bf16.xpose.msra.mxu0 0
        %3674 = vmatprep.subr.bf16.mxu0 0
        %3675 = vmatpush1.bf16.xpose.msra.mxu0 0
        %3676 = vmatprep.subr.bf16.mxu0 0
        %3677 = vmatpush1.bf16.xpose.msra.mxu0 0
        %3678 = vmatprep.subr.bf16.mxu0 0
        %3679 = vmatpush1.bf16.xpose.msra.mxu0 0
        %3680 = vmatprep.subr.bf16.mxu0 0
        %3681 = vmatpush1.bf16.xpose.msra.mxu0 0
        %3682 = vmatprep.subr.bf16.mxu0 0
        %3683 = vmatpush1.bf16.xpose.msra.mxu0 0
        %3684 = vmatprep.subr.bf16.mxu0 0
        %3685 = vmatpush1.bf16.xpose.msra.mxu0 0
        %3686 = vmatprep.subr.bf16.mxu0 0
        %3687 = vmatpush1.bf16.xpose.msra.mxu0 0
        %3688 = vmatprep.subr.bf16.mxu0 0
        %3689 = vmatpush1.bf16.xpose.msra.mxu0 0
        %3690 = vmatprep.subr.bf16.mxu0 0
        %3691 = vmatpush1.bf16.xpose.msra.mxu0 0
        %3692 = vmatprep.mubr.bf16.mxu0 0
        %3693 = vmatmul.mubr.bf16.gmra.mrb[0].mxu0 %v3655
        %v3694 = vpop.f32.mrb[0].mxu0
        %v3695 = vadd.f32 0.0, %v3694
        %v3696 = vpop.f32.mrb[0].mxu0
        %v3697 = vpop.f32.mrb[0].mxu0
        %v3698 = vpop.f32.mrb[0].mxu0
        %3699 = vdwg.mxu0
        %v3700 = vmul.f32 %v3695, 0.35355338
        %v3701 = vsel %vm703, -1e+09, %v3700
        %v3702 = vsel %vm938, %v3701, -inf
        %3703 = vmax.xlane.f32.xlu0 %v3702
        %v3704 = vpop.xlane.xlu0 %3703
        %v3705 = vsub.f32 %v3701, %v3704
        %v3706 = vmul.f32 %v3705, 1.442695
        %v3707 = vpow.pop %v3706
        %v3708 = vsel %vm938, %v3707, 0.0
        %3709 = vadd.xlane.f32.xlu0 %v3708
        %v3710 = vpop.xlane.xlu0 %3709
        %v3711 = vrcp.pop %v3710
        %v3712 = vmul.f32 %v3707, %v3711
        %v3713 = vpack.c.bf16 %v3712, %v3712
        %v3715 = vsel %vm938, %v3713, 0
        %v3718 = vsel %vm1002, %v3653, 0
        %3720 = vmatprep.subr.bf16.mxu0 0
        %3721 = vmatpush1.bf16.msra.mxu0 %v3718
        %3722 = vmatprep.subr.bf16.mxu0 0
        %3723 = vmatpush1.bf16.msra.mxu0 0
        %3724 = vmatprep.subr.bf16.mxu0 0
        %3725 = vmatpush1.bf16.msra.mxu0 0
        %3726 = vmatprep.subr.bf16.mxu0 0
        %3727 = vmatpush1.bf16.msra.mxu0 0
        %3728 = vmatprep.subr.bf16.mxu0 0
        %3729 = vmatpush1.bf16.msra.mxu0 0
        %3730 = vmatprep.subr.bf16.mxu0 0
        %3731 = vmatpush1.bf16.msra.mxu0 0
        %3732 = vmatprep.subr.bf16.mxu0 0
        %3733 = vmatpush1.bf16.msra.mxu0 0
        %3734 = vmatprep.subr.bf16.mxu0 0
        %3735 = vmatpush1.bf16.msra.mxu0 0
        %3736 = vmatprep.subr.bf16.mxu0 0
        %3737 = vmatpush1.bf16.msra.mxu0 0
        %3738 = vmatprep.subr.bf16.mxu0 0
        %3739 = vmatpush1.bf16.msra.mxu0 0
        %3740 = vmatprep.subr.bf16.mxu0 0
        %3741 = vmatpush1.bf16.msra.mxu0 0
        %3742 = vmatprep.subr.bf16.mxu0 0
        %3743 = vmatpush1.bf16.msra.mxu0 0
        %3744 = vmatprep.subr.bf16.mxu0 0
        %3745 = vmatpush1.bf16.msra.mxu0 0
        %3746 = vmatprep.subr.bf16.mxu0 0
        %3747 = vmatpush1.bf16.msra.mxu0 0
        %3748 = vmatprep.subr.bf16.mxu0 0
        %3749 = vmatpush1.bf16.msra.mxu0 0
        %3750 = vmatprep.subr.bf16.mxu0 0
        %3751 = vmatpush1.bf16.msra.mxu0 0
        %3752 = vmatprep.mubr.bf16.mxu0 0
        %3753 = vmatmul.mubr.bf16.gmra.mrb[0].mxu0 %v3715
        %v3754 = vpop.f32.mrb[0].mxu0
        %v3755 = vadd.f32 0.0, %v3754
        %v3756 = vpop.f32.mrb[0].mxu0
        %v3757 = vpop.f32.mrb[0].mxu0
        %v3758 = vpop.f32.mrb[0].mxu0
        %3759 = vdwg.mxu0
        %v3760 = vpack.c.bf16 %v3755, %v3755
        %s3761 = scalar_lea.vmem %s10, 28
        %v3762 = vld [vmem:[%s3761] sm:$0xf]
        %v3764 = vsel %vm938, %v3760, 0
        %v3767 = vsel %vm1002, %v3762, 0
        %3769 = vmatprep.subr.bf16.mxu0 0
        %3770 = vmatpush1.bf16.msra.mxu0 %v3767
        %3771 = vmatprep.subr.bf16.mxu0 0
        %3772 = vmatpush1.bf16.msra.mxu0 0
        %3773 = vmatprep.subr.bf16.mxu0 0
        %3774 = vmatpush1.bf16.msra.mxu0 0
        %3775 = vmatprep.subr.bf16.mxu0 0
        %3776 = vmatpush1.bf16.msra.mxu0 0
        %3777 = vmatprep.subr.bf16.mxu0 0
        %3778 = vmatpush1.bf16.msra.mxu0 0
        %3779 = vmatprep.subr.bf16.mxu0 0
        %3780 = vmatpush1.bf16.msra.mxu0 0
        %3781 = vmatprep.subr.bf16.mxu0 0
        %3782 = vmatpush1.bf16.msra.mxu0 0
        %3783 = vmatprep.subr.bf16.mxu0 0
        %3784 = vmatpush1.bf16.msra.mxu0 0
        %3785 = vmatprep.subr.bf16.mxu0 0
        %3786 = vmatpush1.bf16.msra.mxu0 0
        %3787 = vmatprep.subr.bf16.mxu0 0
        %3788 = vmatpush1.bf16.msra.mxu0 0
        %3789 = vmatprep.subr.bf16.mxu0 0
        %3790 = vmatpush1.bf16.msra.mxu0 0
        %3791 = vmatprep.subr.bf16.mxu0 0
        %3792 = vmatpush1.bf16.msra.mxu0 0
        %3793 = vmatprep.subr.bf16.mxu0 0
        %3794 = vmatpush1.bf16.msra.mxu0 0
        %3795 = vmatprep.subr.bf16.mxu0 0
        %3796 = vmatpush1.bf16.msra.mxu0 0
        %3797 = vmatprep.subr.bf16.mxu0 0
        %3798 = vmatpush1.bf16.msra.mxu0 0
        %3799 = vmatprep.subr.bf16.mxu0 0
        %3800 = vmatpush1.bf16.msra.mxu0 0
        %3801 = vmatprep.mubr.bf16.mxu0 0
        %3802 = vmatmul.mubr.bf16.gmra.mrb[0].mxu0 %v3764
        %v3803 = vpop.f32.mrb[0].mxu0
        %v3804 = vadd.f32 0.0, %v3803
        %v3805 = vpop.f32.mrb[0].mxu0
        %v3806 = vpop.f32.mrb[0].mxu0
        %v3807 = vpop.f32.mrb[0].mxu0
        %3808 = vdwg.mxu0
        %v3809 = vadd.f32 %v3455, %v3804
        %v3810 = vadd.f32 %v2353, %v3809
        %s3811 = scalar_lea.vmem %s11, 1
        %v3812 = vld [vmem:[%s3811] sm:$0x1]
        %v3814 = vlaneseq
        %v3815 = vshrl.u32 %v3814, 7
        %v3816 = vsub.s32 0, %v3815
        %v3817 = vrot.slane %v3812, %v3816
        %v3819 = vadd.f32 %v3810, %v3817
        %s3820 = scalar_lea.vmem %s12, 1
        %v3821 = vld [vmem:[%s3820] sm:$0x1]
        %s3822 = scalar_lea.vmem %s13, 1
        %v3823 = vld [vmem:[%s3822] sm:$0x1]
        %v3824 = vsel %vm706, %v3819, 0.0
        %3825 = vadd.xlane.f32.xlu0 %v3824
        %v3826 = vpop.xlane.xlu0 %3825
        %v3827 = vmul.f32 %v3826, %v710
        %v3828 = vsub.f32 %v3819, %v3827
        %v3829 = vmul.f32 %v3828, %v3828
        %v3830 = vsel %vm706, %v3829, 0.0
        %3831 = vadd.xlane.f32.xlu0 %v3830
        %v3832 = vpop.xlane.xlu0 %3831
        %v3833 = vmul.f32 %v3832, 0.032258064
        %v3834 = vrsqrt.pop %v3833
        %v3835 = vmul.f32 %v3833, %v3834
        %vm3836 = vcmp.eq.f32.partialorder %v3833, inf
        %v3837 = vsel %vm3836, %v3833, %v3835
        %vm3838 = vcmp.eq.f32.partialorder %v3833, 0.0
        %v3839 = vand.u32 %v3833, 2147483648
        %v3840 = vsel %vm3838, %v3839, %v3837
        %v3842 = vlaneseq
        %v3843 = vshrl.u32 %v3842, 7
        %v3844 = vsub.s32 0, %v3843
        %v3845 = vrot.slane %v3821, %v3844
        %v3847 = vmul.f32 %v3845, %v3828
        %v3848 = vadd.f32 %v3840, 1e-06
        %v3849 = vrcp.pop %v3848
        %v3850 = vmul.f32 %v3847, %v3849
        %v3852 = vlaneseq
        %v3853 = vshrl.u32 %v3852, 7
        %v3854 = vsub.s32 0, %v3853
        %v3855 = vrot.slane %v3823, %v3854
        %v3857 = vadd.f32 %v3850, %v3855
        %v3858 = vpack.c.bf16 %v3857, %v3857
        %s3859 = scalar_lea.vmem %s14, 16
        %v3860 = vld [vmem:[%s3859] sm:$0xf]
        %v3861 = vld [vmem:[%s3859 + $0x4] sm:$0xf]
        %v3862 = vld [vmem:[%s3859 + $0x8] sm:$0xf]
        %v3863 = vld [vmem:[%s3859 + $0xc] sm:$0xf]
        %s3864 = scalar_lea.vmem %s15, 1
        %v3865 = vld [vmem:[%s3864] sm:$0x1]
        %v3867 = vlaneseq
        %v3868 = vshrl.u32 %v3867, 7
        %v3869 = vsub.s32 0, %v3868
        %v3870 = vrot.slane %v3865, %v3869
        %v3876 = vunpack.c.l.b16 %v3860
        %v3877 = vunpack.c.l.b16 %v3861
        %v3878 = vunpack.c.l.b16 %v3862
        %v3879 = vunpack.c.l.b16 %v3863
        %v3880 = vpack.c.b16 %v3877, %v3876
        %v3881 = vpack.c.b16 %v3879, %v3878
        %v3885 = vsel %vm706, %v3858, 0
        %3887 = vmatprep.subr.bf16.mxu0 0
        %3888 = vmatpush1.bf16.msra.mxu0 %v3880
        %3889 = vmatprep.subr.bf16.mxu0 0
        %3890 = vmatpush1.bf16.msra.mxu0 %v3881
        %3891 = vmatprep.subr.bf16.mxu0 0
        %3892 = vmatpush1.bf16.msra.mxu0 0
        %3893 = vmatprep.subr.bf16.mxu0 0
        %3894 = vmatpush1.bf16.msra.mxu0 0
        %3895 = vmatprep.subr.bf16.mxu0 0
        %3896 = vmatpush1.bf16.msra.mxu0 0
        %3897 = vmatprep.subr.bf16.mxu0 0
        %3898 = vmatpush1.bf16.msra.mxu0 0
        %3899 = vmatprep.subr.bf16.mxu0 0
        %3900 = vmatpush1.bf16.msra.mxu0 0
        %3901 = vmatprep.subr.bf16.mxu0 0
        %3902 = vmatpush1.bf16.msra.mxu0 0
        %3903 = vmatprep.subr.bf16.mxu0 0
        %3904 = vmatpush1.bf16.msra.mxu0 0
        %3905 = vmatprep.subr.bf16.mxu0 0
        %3906 = vmatpush1.bf16.msra.mxu0 0
        %3907 = vmatprep.subr.bf16.mxu0 0
        %3908 = vmatpush1.bf16.msra.mxu0 0
        %3909 = vmatprep.subr.bf16.mxu0 0
        %3910 = vmatpush1.bf16.msra.mxu0 0
        %3911 = vmatprep.subr.bf16.mxu0 0
        %3912 = vmatpush1.bf16.msra.mxu0 0
        %3913 = vmatprep.subr.bf16.mxu0 0
        %3914 = vmatpush1.bf16.msra.mxu0 0
        %3915 = vmatprep.subr.bf16.mxu0 0
        %3916 = vmatpush1.bf16.msra.mxu0 0
        %3917 = vmatprep.subr.bf16.mxu0 0
        %3918 = vmatpush1.bf16.msra.mxu0 0
        %3919 = vmatprep.mubr.bf16.mxu0 0
        %3920 = vmatmul.mubr.bf16.gmra.mrb[0].mxu0 %v3885
        %v3921 = vpop.f32.mrb[0].mxu0
        %v3922 = vadd.f32 %v3870, %v3921
        %v3923 = vpop.f32.mrb[0].mxu0
        %v3924 = vpop.f32.mrb[0].mxu0
        %v3925 = vpop.f32.mrb[0].mxu0
        %3926 = vdwg.mxu0
        %v3927 = vmax.f32 %v3922, 0.0
        %v3928 = vpack.c.bf16 %v3927, %v3927
        %s3929 = scalar_lea.vmem %s16, 32
        %v3930 = vld [vmem:[%s3929] sm:$0xf]
        %v3931 = vld [vmem:[%s3929 + $0x4] sm:$0xf]
        %v3932 = vld [vmem:[%s3929 + $0x8] sm:$0xf]
        %v3933 = vld [vmem:[%s3929 + $0xc] sm:$0xf]
        %v3934 = vld [vmem:[%s3929 + $0x10] sm:$0xf]
        %v3935 = vld [vmem:[%s3929 + $0x14] sm:$0xf]
        %v3936 = vld [vmem:[%s3929 + $0x18] sm:$0xf]
        %v3937 = vld [vmem:[%s3929 + $0x1c] sm:$0xf]
        %v3946 = vunpack.c.l.b16 %v3930
        %v3947 = vunpack.c.l.b16 %v3931
        %v3948 = vunpack.c.l.b16 %v3932
        %v3949 = vunpack.c.l.b16 %v3933
        %v3950 = vunpack.c.l.b16 %v3934
        %v3951 = vunpack.c.l.b16 %v3935
        %v3952 = vunpack.c.l.b16 %v3936
        %v3953 = vunpack.c.l.b16 %v3937
        %v3954 = vpack.c.b16 %v3947, %v3946
        %v3955 = vpack.c.b16 %v3949, %v3948
        %v3956 = vpack.c.b16 %v3951, %v3950
        %v3957 = vpack.c.b16 %v3953, %v3952
        %v3963 = vsel %vm2301, %v3928, 0
        %3965 = vmatprep.subr.bf16.mxu0 0
        %3966 = vmatpush1.bf16.msra.mxu0 %v3954
        %3967 = vmatprep.subr.bf16.mxu0 0
        %3968 = vmatpush1.bf16.msra.mxu0 %v3955
        %3969 = vmatprep.subr.bf16.mxu0 0
        %3970 = vmatpush1.bf16.msra.mxu0 %v3956
        %3971 = vmatprep.subr.bf16.mxu0 0
        %3972 = vmatpush1.bf16.msra.mxu0 %v3957
        %3973 = vmatprep.subr.bf16.mxu0 0
        %3974 = vmatpush1.bf16.msra.mxu0 0
        %3975 = vmatprep.subr.bf16.mxu0 0
        %3976 = vmatpush1.bf16.msra.mxu0 0
        %3977 = vmatprep.subr.bf16.mxu0 0
        %3978 = vmatpush1.bf16.msra.mxu0 0
        %3979 = vmatprep.subr.bf16.mxu0 0
        %3980 = vmatpush1.bf16.msra.mxu0 0
        %3981 = vmatprep.subr.bf16.mxu0 0
        %3982 = vmatpush1.bf16.msra.mxu0 0
        %3983 = vmatprep.subr.bf16.mxu0 0
        %3984 = vmatpush1.bf16.msra.mxu0 0
        %3985 = vmatprep.subr.bf16.mxu0 0
        %3986 = vmatpush1.bf16.msra.mxu0 0
        %3987 = vmatprep.subr.bf16.mxu0 0
        %3988 = vmatpush1.bf16.msra.mxu0 0
        %3989 = vmatprep.subr.bf16.mxu0 0
        %3990 = vmatpush1.bf16.msra.mxu0 0
        %3991 = vmatprep.subr.bf16.mxu0 0
        %3992 = vmatpush1.bf16.msra.mxu0 0
        %3993 = vmatprep.subr.bf16.mxu0 0
        %3994 = vmatpush1.bf16.msra.mxu0 0
        %3995 = vmatprep.subr.bf16.mxu0 0
        %3996 = vmatpush1.bf16.msra.mxu0 0
        %3997 = vmatprep.mubr.bf16.mxu0 0
        %3998 = vmatmul.mubr.bf16.gmra.mrb[0].mxu0 %v3963
        %v3999 = vpop.f32.mrb[0].mxu0
        %v4000 = vadd.f32 0.0, %v3999
        %v4001 = vpop.f32.mrb[0].mxu0
        %v4002 = vpop.f32.mrb[0].mxu0
        %v4003 = vpop.f32.mrb[0].mxu0
        %4004 = vdwg.mxu0
        %v4005 = vadd.f32 %v3819, %v4000
        %s4006 = scalar_lea.vmem %s17, 1
        %v4007 = vld [vmem:[%s4006] sm:$0x1]
        %v4009 = vlaneseq
        %v4010 = vshrl.u32 %v4009, 7
        %v4011 = vsub.s32 0, %v4010
        %v4012 = vrot.slane %v4007, %v4011
        %v4014 = vadd.f32 %v4005, %v4012
        %v4015 = vld [vmem:[%s18] sm:$0x1]
        %v4016 = vld [vmem:[%s19] sm:$0x1]
        %v4017 = vsel %vm706, %v4014, 0.0
        %4018 = vadd.xlane.f32.xlu0 %v4017
        %v4019 = vpop.xlane.xlu0 %4018
        %v4020 = vmul.f32 %v4019, %v710
        %v4021 = vsub.f32 %v4014, %v4020
        %v4022 = vmul.f32 %v4021, %v4021
        %v4023 = vsel %vm706, %v4022, 0.0
        %4024 = vadd.xlane.f32.xlu0 %v4023
        %v4025 = vpop.xlane.xlu0 %4024
        %v4026 = vmul.f32 %v4025, 0.032258064
        %v4027 = vrsqrt.pop %v4026
        %v4028 = vmul.f32 %v4026, %v4027
        %vm4029 = vcmp.eq.f32.partialorder %v4026, inf
        %v4030 = vsel %vm4029, %v4026, %v4028
        %vm4031 = vcmp.eq.f32.partialorder %v4026, 0.0
        %v4032 = vand.u32 %v4026, 2147483648
        %v4033 = vsel %vm4031, %v4032, %v4030
        %v4035 = vlaneseq
        %v4036 = vshrl.u32 %v4035, 7
        %v4037 = vsub.s32 0, %v4036
        %v4038 = vrot.slane %v4015, %v4037
        %v4040 = vmul.f32 %v4038, %v4021
        %v4041 = vadd.f32 %v4033, 1e-06
        %v4042 = vrcp.pop %v4041
        %v4043 = vmul.f32 %v4040, %v4042
        %v4045 = vlaneseq
        %v4046 = vshrl.u32 %v4045, 7
        %v4047 = vsub.s32 0, %v4046
        %v4048 = vrot.slane %v4016, %v4047
        %v4050 = vadd.f32 %v4043, %v4048
        %vm4051 = vcmask 7168
        %v4052 = vsel %vm4051, %v697, 0.0
        %v4053 = vrot.slane %v4052, 4
        %v4054 = vadd.f32 %v4052, %v4053
        %v4055 = vrot.slane %v4054, 2
        %v4056 = vadd.f32 %v4054, %v4055
        %v4057 = vrot.slane %v4056, 1
        %v4058 = vadd.f32 %v4056, %v4057
        %v4059 = vadd.f32 %v4058, 1e-09
        %v4060 = vsel %vm706, %v4050, 0.0
        %v4061 = vrot.slane %v4060, 4
        %v4062 = vadd.f32 %v4060, %v4061
        %v4063 = vrot.slane %v4062, 2
        %v4064 = vadd.f32 %v4062, %v4063
        %v4065 = vrot.slane %v4064, 1
        %v4066 = vadd.f32 %v4064, %v4065
        %v4067 = vrcp.pop %v4059
        %4069 = vset.pattern.permute.xlu0 0
        %4070 = vperm.xlu0 %4069, %v4067
        %v4071 = vpop.permute.xlu0 %4070
        %v4073 = vmul.f32 %v4066, %v4071
        %v4074 = vpack.c.bf16 %v4073, %v4073
        %v4075 = vld [vmem:[%s20] sm:$0xf]
        %v4076 = vld [vmem:[%s20 + $0x4] sm:$0xf]
        %v4077 = vld [vmem:[%s20 + $0x8] sm:$0xf]
        %v4078 = vld [vmem:[%s20 + $0xc] sm:$0xf]
        %v4079 = vld [vmem:[%s21] sm:$0x1]
        %v4084 = vunpack.c.l.b16 %v4075
        %v4085 = vunpack.c.l.b16 %v4076
        %v4086 = vunpack.c.l.b16 %v4077
        %v4087 = vunpack.c.l.b16 %v4078
        %v4088 = vpack.c.b16 %v4085, %v4084
        %v4089 = vpack.c.b16 %v4087, %v4086
        %v4093 = vsel %vm706, %v4074, 0
        %4095 = vmatprep.subr.bf16.mxu0 0
        %4096 = vmatpush1.bf16.msra.mxu0 %v4088
        %4097 = vmatprep.subr.bf16.mxu0 0
        %4098 = vmatpush1.bf16.msra.mxu0 %v4089
        %4099 = vmatprep.subr.bf16.mxu0 0
        %4100 = vmatpush1.bf16.msra.mxu0 0
        %4101 = vmatprep.subr.bf16.mxu0 0
        %4102 = vmatpush1.bf16.msra.mxu0 0
        %4103 = vmatprep.subr.bf16.mxu0 0
        %4104 = vmatpush1.bf16.msra.mxu0 0
        %4105 = vmatprep.subr.bf16.mxu0 0
        %4106 = vmatpush1.bf16.msra.mxu0 0
        %4107 = vmatprep.subr.bf16.mxu0 0
        %4108 = vmatpush1.bf16.msra.mxu0 0
        %4109 = vmatprep.subr.bf16.mxu0 0
        %4110 = vmatpush1.bf16.msra.mxu0 0
        %4111 = vmatprep.subr.bf16.mxu0 0
        %4112 = vmatpush1.bf16.msra.mxu0 0
        %4113 = vmatprep.subr.bf16.mxu0 0
        %4114 = vmatpush1.bf16.msra.mxu0 0
        %4115 = vmatprep.subr.bf16.mxu0 0
        %4116 = vmatpush1.bf16.msra.mxu0 0
        %4117 = vmatprep.subr.bf16.mxu0 0
        %4118 = vmatpush1.bf16.msra.mxu0 0
        %4119 = vmatprep.subr.bf16.mxu0 0
        %4120 = vmatpush1.bf16.msra.mxu0 0
        %4121 = vmatprep.subr.bf16.mxu0 0
        %4122 = vmatpush1.bf16.msra.mxu0 0
        %4123 = vmatprep.subr.bf16.mxu0 0
        %4124 = vmatpush1.bf16.msra.mxu0 0
        %4125 = vmatprep.subr.bf16.mxu0 0
        %4126 = vmatpush1.bf16.msra.mxu0 0
        %4127 = vmatprep.mubr.bf16.mxu0 0
        %4128 = vmatmul.mubr.bf16.gmra.mrb[0].mxu0 %v4093
        %v4129 = vpop.f32.mrb[0].mxu0
        %v4130 = vadd.f32 %v4079, %v4129
        %v4131 = vpop.f32.mrb[0].mxu0
        %v4132 = vpop.f32.mrb[0].mxu0
        %v4133 = vpop.f32.mrb[0].mxu0
        %4134 = vdwg.mxu0
        %4135 = vst [vmem:[%s686] sm:$0x1] %v4130
        %s4136 = sand.u32 %s516, 1
        %s4137 = scalar_lea.sflag [#allocation3], %s4136
        %s4138 = sand.u32 %s516, 1
        %s4139 = scalar_lea.vmem [#allocation2], %s4138
        // Predicated region
        $region109: #{tpu_custom_call.1} parent=107 // pred_check
          %p4140 = pneg %p526
        $region110: #{tpu_custom_call.1} parent=107 // pred_check_branch
          %4142 = sbr.rel (%p4140) target = $region112
        $region111: #{tpu_custom_call.1} parent=107 // pred_region
          %s4144 = ssub.s32 16, 16
          %4145 = vsyncadd %s4137, %s4144
          %s4146 = smul.addr %s36, 16
          %s4147 = scalar_lea.hbm %s22, %s4146
          %s4149 = sshll.u32 %s4139, 4
          %s4150 = int_to_ptr.vmem [resolvable:$true] %s4149
          %4152 = dma.vmem_to_hbm [thread:$0]  %s4150, 16, %s4147, %s4137
        $region112: #{tpu_custom_call.1} parent=107 // pred_fallthru
          _
      $region108: #{tpu_custom_call.1} parent=5 // pred_fallthru
        _
      %p4153 = scmp.le.s32.totalorder 2, %s31
      // Predicated region
      $region113: #{tpu_custom_call.1} parent=5 // pred_check
        %p4154 = pneg %p4153
      $region114: #{tpu_custom_call.1} parent=5 // pred_check_branch
        %4156 = sbr.rel (%p4154) target = $region116
      $region115: #{tpu_custom_call.1} parent=5 // pred_region
        %s4157 = ssub.s32 %s31, 2
        // Predicated region
        $region117: #{tpu_custom_call.1} parent=115 // pred_check
          %p4158 = pneg %p532
        $region118: #{tpu_custom_call.1} parent=115 // pred_check_branch
          %4160 = sbr.rel (%p4158) target = $region120
        $region119: #{tpu_custom_call.1} parent=115 // pred_region
          %s4161 = sand.u32 %s517, 1
          %s4162 = scalar_lea.sflag [#allocation3], %s4161
          %s4163 = sand.u32 %s517, 1
          %s4164 = scalar_lea.vmem [#allocation2], %s4163
          %4165 = dma.done %s4162, 16
        $region120: #{tpu_custom_call.1} parent=115 // pred_fallthru
          _
      $region116: #{tpu_custom_call.1} parent=5 // pred_fallthru
        _
    $region6: #{tpu_custom_call.1} parent=1 // loop_footer
      %s35 = sadd.s32 1, %s31
    $region7: #{tpu_custom_call.1} parent=1 // loop_footer_branch
      %30 = sbr.rel target = $region3
    $region8: #{tpu_custom_call.1} parent=1 // loop_exit
      _
    %4166 = vsyncpa [#allocation3], 1
    %s4167 = scalar_lea.sflag [#allocation3], 1
    %4168 = vsyncpa %s4167, 1

</llo_original>
